<compile_context>
chip_gen: v5e
topology: v5e:2x2
jax: 0.10.0
libtpu: 0.0.40
codegen_flags: <defaults>
</compile_context>

<pallas_src>
import functools

import jax
import jax.numpy as jnp
import numpy as np
from jax.experimental import pallas as pl
from jax.experimental.pallas import tpu as pltpu

K = 4      # kernel size
S = 2      # stride
P = 1      # padding
EPS = 1e-5


# ---------------------------------------------------------------------------
# Kernel A: phase-decomposed ConvTranspose2d on one (batch, row-tile) block,
# emitting the un-normalized bf16 result plus streamed per-channel sum / sum^2.
# ---------------------------------------------------------------------------
def _convt_stats_kernel(xt_ref, w_ref, y_ref, stats_ref, *,
                        th, w, cin, cout, use_concat):
    # xt_ref:    (1, 1, th+2, w+2, cin)       bf16  input row-tile + 2-row halo
    # w_ref:     (4, 4*cin, cout) if use_concat else (4, 4, cin, cout)   bf16
    # y_ref:     (1, 2, 2, th, w, cout)       bf16  raw conv output, phase-blocked
    # stats_ref: (1, 2, cout)                 f32   [sum; sum^2], resident over tiles
    t = pl.program_id(1)

    @pl.when(t == 0)
    def _():
        stats_ref[...] = jnp.zeros_like(stats_ref)

    thw = th * w
    s = jnp.zeros((1, cout), jnp.float32)
    s2 = jnp.zeros((1, cout), jnp.float32)
    for rh in range(2):
        for rw in range(2):
            ph = 2 * rh + rw
            if use_concat:
                # Small cin: one (thw, 4*cin) x (4*cin, cout) matmul fills MXU depth.
                taps = [xt_ref[0, 0, pl.ds(rh + i, th), pl.ds(rw + j, w), :]
                        .reshape(thw, cin)
                        for i in range(2) for j in range(2)]
                patch = jnp.concatenate(taps, axis=-1)
                y = jnp.dot(patch, w_ref[ph, :, :],
                            preferred_element_type=jnp.float32)
            else:
                # Large cin: 4 accumulating dots straight from the window slices.
                y = None
                for tap, (i, j) in enumerate(((0, 0), (0, 1), (1, 0), (1, 1))):
                    win = xt_ref[0, 0, pl.ds(rh + i, th), pl.ds(rw + j, w), :] \
                        .reshape(thw, cin)
                    d = jnp.dot(win, w_ref[ph, tap, :, :],
                                preferred_element_type=jnp.float32)
                    y = d if y is None else y + d
            s = s + jnp.sum(y, axis=0, keepdims=True)
            s2 = s2 + jnp.sum(y * y, axis=0, keepdims=True)
            y_ref[0, rh, rw, :, :, :] = y.reshape(th, w, cout).astype(y_ref.dtype)

    stats_ref[0, 0:1, :] += s
    stats_ref[0, 1:2, :] += s2


# ---------------------------------------------------------------------------
# Kernel B: InstanceNorm + ReLU on the raw tiles, skip concat fused via two
# channel-sliced stores into the phase-blocked output.
# ---------------------------------------------------------------------------
def _norm_concat_kernel(y_ref, stats_ref, skip_ref, o_ref, *,
                        cout, cskip, inv_n):
    # y_ref:     (1, 2, 2, th, w, cout)         bf16
    # stats_ref: (1, 2, cout)                   f32
    # skip_ref:  (1, 2, 2, th, w, cskip)        input dtype (pure pass-through)
    # o_ref:     (1, 2, 2, th, w, cout+cskip)   f32
    mean = (stats_ref[0, 0:1, :] * inv_n).reshape(1, 1, cout)
    ex2 = (stats_ref[0, 1:2, :] * inv_n).reshape(1, 1, cout)
    var = jnp.maximum(ex2 - mean * mean, 0.0)       # guard f32 cancellation
    scale = jax.lax.rsqrt(var + EPS)
    for rh in range(2):
        for rw in range(2):
            y = y_ref[0, rh, rw, :, :, :].astype(jnp.float32)
            y = jnp.maximum((y - mean) * scale, 0.0)
            o_ref[0, rh, rw, :, :, pl.ds(0, cout)] = y.astype(o_ref.dtype)
            o_ref[0, rh, rw, :, :, pl.ds(cout, cskip)] = \
                skip_ref[0, rh, rw, :, :, :].astype(o_ref.dtype)


# ---------------------------------------------------------------------------
# Wrapper helpers.
# ---------------------------------------------------------------------------
def _vmem_limit_bytes():
    """Generation-aware scoped-VMEM limit (v7x: 64 MiB/TC; v5e/v6e: 128 MiB)."""
    cap = None
    try:
        cap = pltpu.get_tpu_info().vmem_capacity_bytes
    except Exception:  # non-TPU / interpret / older runtime: be conservative
        cap = None
    if cap is None or cap <= 64 * 1024 * 1024:
        return 40 * 1024 * 1024
    return 100 * 1024 * 1024


def _pick_tile_h(h, w, cin, cout, cskip, skip_isz, out_isz, budget):
    """Largest row-tile (divisor of h) whose per-step VMEM estimate fits budget."""
    ctot = cout + cskip
    for th in range(h, 0, -1):
        if h % th:
            continue
        thw = th * w
        a = (2 * (th + 2) * (w + 2) * cin * 2          # x tile, 2 bufs, bf16
             + 16 * cin * cout * 2                      # weights, single buffer
             + 2 * 4 * thw * cout * 2                   # raw-y out, 2 bufs, bf16
             + thw * (4 * cin * 2 + 2 * cout * 4))      # compute temps (rough)
        b = (2 * 4 * thw * cout * 2                     # raw-y in
             + 2 * 4 * thw * cskip * skip_isz           # skip in (input dtype)
             + 2 * 4 * thw * ctot * out_isz             # concat out
             + 2 * thw * cout * 4)                      # temps
        if max(a, b) <= budget:
            return th
    return 1


@functools.partial(jax.jit, static_argnames=("tile_h",))
def unet_up(x_nchw, skip_nchw, weight, tile_h=None):
    """Forward of UNetUp.

    x_nchw:    (N, Cin, H, W)
    skip_nchw: (N, Cskip, 2H, 2W)
    weight:    (Cin, Cout, 4, 4)  -- PyTorch ConvTranspose2d weight layout
    tile_h:    optional row-tile height (must divide H); default auto from VMEM budget
    returns:   (N, Cout + Cskip, 2H, 2W) float32
    """
    n, cin, h, w = x_nchw.shape
    cout = weight.shape[1]
    cskip = skip_nchw.shape[1]
    oh, ow = S * h, S * w
    ctot = cout + cskip

    vmem_limit = _vmem_limit_bytes()
    if tile_h is None:
        th = _pick_tile_h(h, w, cin, cout, cskip,
                          jnp.dtype(skip_nchw.dtype).itemsize, 4,
                          (vmem_limit * 6) // 10)
    else:
        assert h % int(tile_h) == 0, "tile_h must divide H"
        th = int(tile_h)
    num_t = h // th

    # ---- glue (single pass each; no dilated patch tensor in HBM) -------------
    # Input: NCHW -> NHWC bf16, 1-pixel zero halo, row-tiles with a 2-row halo.
    x = jnp.transpose(x_nchw, (0, 2, 3, 1)).astype(jnp.bfloat16)
    xpad = jnp.pad(x, ((0, 0), (1, 1), (1, 1), (0, 0)))
    xtiles = jnp.stack([xpad[:, t * th:t * th + th + 2] for t in range(num_t)],
                       axis=1)                          # (n, T, th+2, w+2, cin)

    # Per-phase weights.  Output phase (rh, rw), tap (i, j) multiplies the padded
    # window at offset (rh+i, rw+j) by kernel entry (3-rh-2i, 3-rw-2j).
    wb = weight.astype(jnp.bfloat16)
    use_concat = cin < 128    # small cin -> concat taps to better fill MXU depth
    w_phases = []
    for rh in range(2):
        for rw in range(2):
            taps = [wb[:, :, 3 - rh - 2 * i, 3 - rw - 2 * j]
                    for i in range(2) for j in range(2)]          # each (cin, cout)
            w_phases.append(jnp.concatenate(taps, axis=0) if use_concat
                            else jnp.stack(taps, axis=0))
    wm = jnp.stack(w_phases, axis=0)      # (4, 4*cin, cout) or (4, 4, cin, cout)
    w_block = wm.shape
    w_imap = (lambda i, t: (0, 0, 0)) if use_concat else (lambda i, t: (0, 0, 0, 0))

    # Skip: NCHW -> phase-blocked (n, rh, rw, p, q, cskip), at its input dtype.
    skip_pb = jnp.transpose(skip_nchw.reshape(n, cskip, h, 2, w, 2),
                            (0, 3, 5, 2, 4, 1))

    # ---- pass 1: conv phases + streamed InstanceNorm statistics --------------
    kernel_a = functools.partial(_convt_stats_kernel, th=th, w=w, cin=cin,
                                 cout=cout, use_concat=use_concat)
    y_raw, stats = pl.pallas_call(
        kernel_a,
        out_shape=(jax.ShapeDtypeStruct((n, 2, 2, h, w, cout), jnp.bfloat16),
                   jax.ShapeDtypeStruct((n, 2, cout), jnp.float32)),
        grid_spec=pltpu.PrefetchScalarGridSpec(
            num_scalar_prefetch=0,
            grid=(n, num_t),
            in_specs=[
                pl.BlockSpec((1, 1, th + 2, w + 2, cin),
                             lambda i, t: (i, t, 0, 0, 0)),
                # Grid-invariant weights: single-buffered to halve their VMEM.
                pl.BlockSpec(w_block, w_imap, pipeline_mode=pl.Buffered(1)),
            ],
            out_specs=[
                pl.BlockSpec((1, 2, 2, th, w, cout),
                             lambda i, t: (i, 0, 0, t, 0, 0)),
                pl.BlockSpec((1, 2, cout), lambda i, t: (i, 0, 0)),
            ],
        ),
        compiler_params=pltpu.CompilerParams(
            dimension_semantics=("parallel", "arbitrary"),
            vmem_limit_bytes=vmem_limit,
        ),
    )(xtiles, wm)

    # ---- pass 2: InstanceNorm + ReLU + fused skip concat ---------------------
    kernel_b = functools.partial(_norm_concat_kernel, cout=cout, cskip=cskip,
                                 inv_n=1.0 / (4 * h * w))
    out_pb = pl.pallas_call(
        kernel_b,
        out_shape=jax.ShapeDtypeStruct((n, 2, 2, h, w, ctot), jnp.float32),
        grid_spec=pltpu.PrefetchScalarGridSpec(
            num_scalar_prefetch=0,
            grid=(n, num_t),
            in_specs=[
                pl.BlockSpec((1, 2, 2, th, w, cout),
                             lambda i, t: (i, 0, 0, t, 0, 0)),
                pl.BlockSpec((1, 2, cout), lambda i, t: (i, 0, 0)),
                pl.BlockSpec((1, 2, 2, th, w, cskip),
                             lambda i, t: (i, 0, 0, t, 0, 0)),
            ],
            out_specs=pl.BlockSpec((1, 2, 2, th, w, ctot),
                                   lambda i, t: (i, 0, 0, t, 0, 0)),
        ),
        compiler_params=pltpu.CompilerParams(
            # Two independent axes -> both v7x TensorCores busy even at N=1.
            dimension_semantics=("parallel", "parallel"),
            vmem_limit_bytes=vmem_limit,
        ),
    )(y_raw, stats, skip_pb)

    # Single epilogue pass: depth-to-space interleave fused into the unavoidable
    # layout conversion back to the PyTorch NCHW convention.
    out = jnp.transpose(out_pb, (0, 5, 3, 1, 4, 2)).reshape(n, ctot, oh, ow)
    return out


def _reference(x_nchw, skip_nchw, weight):
    """Independent pure-JAX f32 reference (scatter formulation of ConvTranspose2d)."""
    n, cin, h, w = x_nchw.shape
    cout = weight.shape[1]
    x = jnp.transpose(x_nchw, (0, 2, 3, 1)).astype(jnp.float32)
    yfull = jnp.zeros((n, S * h + K - S, S * w + K - S, cout), jnp.float32)
    for kh in range(K):
        for kw in range(K):
            contrib = jnp.einsum('nhwc,cf->nhwf', x, weight[:, :, kh, kw])
            yfull = yfull.at[:, kh:kh + S * h:S, kw:kw + S * w:S, :].add(contrib)
    y = yfull[:, P:P + S * h, P:P + S * w, :]
    mean = jnp.mean(y, axis=(1, 2), keepdims=True)
    var = jnp.mean((y - mean) ** 2, axis=(1, 2), keepdims=True)
    y = jnp.maximum((y - mean) * jax.lax.rsqrt(var + EPS), 0.0)
    out = jnp.concatenate(
        [y, jnp.transpose(skip_nchw, (0, 2, 3, 1)).astype(jnp.float32)], axis=-1)
    return jnp.transpose(out, (0, 3, 1, 2))


if __name__ == "__main__":
    # bf16 matmul operands / bf16 raw-activation intermediate (f32 accumulation
    # and statistics) -> compare against the f32 reference with bf16 tolerance.
    RTOL, ATOL = 2e-2, 2.5e-2

    # Case 1: small-cin (concat) path, batch=2, in=4, out=8, 8x8 -> 16x16.
    N, CIN, COUT, H, W = 2, 4, 8, 8, 8
    key = jax.random.PRNGKey(0)
    kx, ks, kw_ = jax.random.split(key, 3)
    x = jax.random.normal(kx, (N, CIN, H, W), jnp.float32)
    skip = jax.random.normal(ks, (N, COUT, S * H, S * W), jnp.float32)
    weight = jax.random.normal(kw_, (CIN, COUT, K, K), jnp.float32) * 0.1

    ref = jax.block_until_ready(_reference(x, skip, weight))

    out = jax.block_until_ready(unet_up(x, skip, weight))          # auto tile
    assert out.shape == (N, 2 * COUT, S * H, S * W), out.shape
    np.testing.assert_allclose(np.asarray(out), np.asarray(ref), rtol=RTOL, atol=ATOL)

    out_t = jax.block_until_ready(unet_up(x, skip, weight, tile_h=4))  # 2 row-tiles:
    np.testing.assert_allclose(np.asarray(out_t), np.asarray(ref),     # streamed stats
                               rtol=RTOL, atol=ATOL)

    # Case 2: large-cin (accumulating-dot) path, batch=1, in=128, out=8.
    N2, CIN2, COUT2, H2, W2 = 1, 128, 8, 8, 8
    k2x, k2s, k2w = jax.random.split(jax.random.PRNGKey(1), 3)
    x2 = jax.random.normal(k2x, (N2, CIN2, H2, W2), jnp.float32)
    skip2 = jax.random.normal(k2s, (N2, COUT2, S * H2, S * W2), jnp.float32)
    weight2 = jax.random.normal(k2w, (CIN2, COUT2, K, K), jnp.float32) * 0.1

    out2 = jax.block_until_ready(unet_up(x2, skip2, weight2))
    ref2 = jax.block_until_ready(_reference(x2, skip2, weight2))
    np.testing.assert_allclose(np.asarray(out2), np.asarray(ref2), rtol=RTOL, atol=ATOL)

    print("KERNEL_OK")
</pallas_src>

<mosaic_0001>
module attributes {stable_mosaic.version = 11 : i64} {
  func.func @_convt_stats_kernel(%arg0: i32, %arg1: i32, %arg2: memref<1x1x10x10x4xbf16, #tpu.memory_space<vmem>>, %arg3: memref<4x16x8xbf16, #tpu.memory_space<vmem>>, %arg4: memref<1x2x2x8x8x8xbf16, #tpu.memory_space<vmem>>, %arg5: memref<1x2x8xf32, #tpu.memory_space<vmem>>) attributes {dimension_semantics = [#tpu.dimension_semantics<parallel>, #tpu.dimension_semantics<arbitrary>], iteration_bounds = array<i64: 2, 1>, scalar_prefetch = 0 : i64, scratch_operands = 0 : i64, tpu.core_type = #tpu.core_type<tc>, window_params = [{transform_indices = @transform_0, window_bounds = array<i64: 1, 1, 10, 10, 4>}, {pipeline_mode = #tpu.pipeline_mode<synchronous>, transform_indices = @transform_1, window_bounds = array<i64: 4, 16, 8>}, {transform_indices = @transform_2, window_bounds = array<i64: 1, 2, 2, 8, 8, 8>}, {transform_indices = @transform_3, window_bounds = array<i64: 1, 2, 8>}]} {
    %c0_i32 = arith.constant 0 : i32
    %0 = arith.cmpi eq, %arg1, %c0_i32 : i32
    %1 = arith.extui %0 : i1 to i32
    %c0_i32_0 = arith.constant 0 : i32
    %2 = arith.cmpi ne, %1, %c0_i32_0 : i32
    scf.if %2 {
      %cst_138 = arith.constant 0.000000e+00 : f32
      %129 = vector.broadcast %cst_138 : f32 to vector<1x2x8xf32>
      %c0_139 = arith.constant 0 : index
      %c0_140 = arith.constant 0 : index
      %c0_141 = arith.constant 0 : index
      %130 = vector.load %arg5[%c0_139, %c0_140, %c0_141] : memref<1x2x8xf32, #tpu.memory_space<vmem>>, vector<1x2x8xf32>
      tpu.vector_store %arg5[%c0_139, %c0_140, %c0_141], %129 {strides = array<i32>} : memref<1x2x8xf32, #tpu.memory_space<vmem>>, vector<1x2x8xf32>,
    } else {
    }
    %cst = arith.constant 0.000000e+00 : f32
    %3 = vector.broadcast %cst : f32 to vector<1x8xf32>
    %cst_1 = arith.constant 0.000000e+00 : f32
    %4 = vector.broadcast %cst_1 : f32 to vector<1x8xf32>
    %c0 = arith.constant 0 : index
    %c0_2 = arith.constant 0 : index
    %c0_3 = arith.constant 0 : index
    %c0_4 = arith.constant 0 : index
    %c0_5 = arith.constant 0 : index
    %5 = vector.load %arg2[%c0, %c0_2, %c0_3, %c0_4, %c0_5] : memref<1x1x10x10x4xbf16, #tpu.memory_space<vmem>>, vector<1x1x8x8x4xbf16>
    %6 = vector.shape_cast %5 : vector<1x1x8x8x4xbf16> to vector<8x8x4xbf16>
    %7 = vector.shape_cast %6 : vector<8x8x4xbf16> to vector<64x4xbf16>
    %c0_6 = arith.constant 0 : index
    %c0_7 = arith.constant 0 : index
    %c0_8 = arith.constant 0 : index
    %c1 = arith.constant 1 : index
    %c0_9 = arith.constant 0 : index
    %8 = vector.load %arg2[%c0_6, %c0_7, %c0_8, %c1, %c0_9] : memref<1x1x10x10x4xbf16, #tpu.memory_space<vmem>>, vector<1x1x8x8x4xbf16>
    %9 = vector.shape_cast %8 : vector<1x1x8x8x4xbf16> to vector<8x8x4xbf16>
    %10 = vector.shape_cast %9 : vector<8x8x4xbf16> to vector<64x4xbf16>
    %c0_10 = arith.constant 0 : index
    %c0_11 = arith.constant 0 : index
    %c1_12 = arith.constant 1 : index
    %c0_13 = arith.constant 0 : index
    %c0_14 = arith.constant 0 : index
    %11 = vector.load %arg2[%c0_10, %c0_11, %c1_12, %c0_13, %c0_14] : memref<1x1x10x10x4xbf16, #tpu.memory_space<vmem>>, vector<1x1x8x8x4xbf16>
    %12 = vector.shape_cast %11 : vector<1x1x8x8x4xbf16> to vector<8x8x4xbf16>
    %13 = vector.shape_cast %12 : vector<8x8x4xbf16> to vector<64x4xbf16>
    %c0_15 = arith.constant 0 : index
    %c0_16 = arith.constant 0 : index
    %c1_17 = arith.constant 1 : index
    %c1_18 = arith.constant 1 : index
    %c0_19 = arith.constant 0 : index
    %14 = vector.load %arg2[%c0_15, %c0_16, %c1_17, %c1_18, %c0_19] : memref<1x1x10x10x4xbf16, #tpu.memory_space<vmem>>, vector<1x1x8x8x4xbf16>
    %15 = vector.shape_cast %14 : vector<1x1x8x8x4xbf16> to vector<8x8x4xbf16>
    %16 = vector.shape_cast %15 : vector<8x8x4xbf16> to vector<64x4xbf16>
    %17 = tpu.concatenate %7, %10, %13, %16 in 1 : vector<64x4xbf16>, vector<64x4xbf16>, vector<64x4xbf16>, vector<64x4xbf16> -> vector<64x16xbf16>
    %c0_20 = arith.constant 0 : index
    %c0_21 = arith.constant 0 : index
    %c0_22 = arith.constant 0 : index
    %18 = vector.load %arg3[%c0_20, %c0_21, %c0_22] : memref<4x16x8xbf16, #tpu.memory_space<vmem>>, vector<1x16x8xbf16>
    %19 = vector.shape_cast %18 : vector<1x16x8xbf16> to vector<16x8xbf16>
    %cst_23 = arith.constant dense<0.000000e+00> : vector<64x8xf32>
    %20 = tpu.matmul %17, %19, %cst_23 {dimension_numbers = #tpu.dot_dimension_numbers<[1], [0], [0], [1], [0, 0, 1, 1], [], []>} : vector<64x16xbf16>, vector<16x8xbf16>, vector<64x8xf32> -> vector<64x8xf32>
    %cst_24 = arith.constant dense<0.000000e+00> : vector<8xf32>
    %21 = vector.multi_reduction <add>, %20, %cst_24 [0] : vector<64x8xf32> to vector<8xf32>
    %22 = vector.shape_cast %21 : vector<8xf32> to vector<1x8xf32>
    %23 = arith.addf %3, %22 : vector<1x8xf32>
    %24 = arith.mulf %20, %20 : vector<64x8xf32>
    %cst_25 = arith.constant dense<0.000000e+00> : vector<8xf32>
    %25 = vector.multi_reduction <add>, %24, %cst_25 [0] : vector<64x8xf32> to vector<8xf32>
    %26 = vector.shape_cast %25 : vector<8xf32> to vector<1x8xf32>
    %27 = arith.addf %4, %26 : vector<1x8xf32>
    %28 = vector.shape_cast %20 : vector<64x8xf32> to vector<8x8x8xf32>
    %29 = arith.truncf %28 : vector<8x8x8xf32> to vector<8x8x8xbf16>
    %c0_26 = arith.constant 0 : index
    %c0_27 = arith.constant 0 : index
    %c0_28 = arith.constant 0 : index
    %c0_29 = arith.constant 0 : index
    %c0_30 = arith.constant 0 : index
    %c0_31 = arith.constant 0 : index
    %30 = vector.load %arg4[%c0_26, %c0_27, %c0_28, %c0_29, %c0_30, %c0_31] : memref<1x2x2x8x8x8xbf16, #tpu.memory_space<vmem>>, vector<1x1x1x8x8x8xbf16>
    %31 = vector.shape_cast %30 : vector<1x1x1x8x8x8xbf16> to vector<8x8x8xbf16>
    %32 = vector.shape_cast %29 : vector<8x8x8xbf16> to vector<1x1x1x8x8x8xbf16>
    tpu.vector_store %arg4[%c0_26, %c0_27, %c0_28, %c0_29, %c0_30, %c0_31], %32 {strides = array<i32>} : memref<1x2x2x8x8x8xbf16, #tpu.memory_space<vmem>>, vector<1x1x1x8x8x8xbf16>,
    %c0_32 = arith.constant 0 : index
    %c0_33 = arith.constant 0 : index
    %c0_34 = arith.constant 0 : index
    %c1_35 = arith.constant 1 : index
    %c0_36 = arith.constant 0 : index
    %33 = vector.load %arg2[%c0_32, %c0_33, %c0_34, %c1_35, %c0_36] : memref<1x1x10x10x4xbf16, #tpu.memory_space<vmem>>, vector<1x1x8x8x4xbf16>
    %34 = vector.shape_cast %33 : vector<1x1x8x8x4xbf16> to vector<8x8x4xbf16>
    %35 = vector.shape_cast %34 : vector<8x8x4xbf16> to vector<64x4xbf16>
    %c0_37 = arith.constant 0 : index
    %c0_38 = arith.constant 0 : index
    %c0_39 = arith.constant 0 : index
    %c2 = arith.constant 2 : index
    %c0_40 = arith.constant 0 : index
    %36 = vector.load %arg2[%c0_37, %c0_38, %c0_39, %c2, %c0_40] : memref<1x1x10x10x4xbf16, #tpu.memory_space<vmem>>, vector<1x1x8x8x4xbf16>
    %37 = vector.shape_cast %36 : vector<1x1x8x8x4xbf16> to vector<8x8x4xbf16>
    %38 = vector.shape_cast %37 : vector<8x8x4xbf16> to vector<64x4xbf16>
    %c0_41 = arith.constant 0 : index
    %c0_42 = arith.constant 0 : index
    %c1_43 = arith.constant 1 : index
    %c1_44 = arith.constant 1 : index
    %c0_45 = arith.constant 0 : index
    %39 = vector.load %arg2[%c0_41, %c0_42, %c1_43, %c1_44, %c0_45] : memref<1x1x10x10x4xbf16, #tpu.memory_space<vmem>>, vector<1x1x8x8x4xbf16>
    %40 = vector.shape_cast %39 : vector<1x1x8x8x4xbf16> to vector<8x8x4xbf16>
    %41 = vector.shape_cast %40 : vector<8x8x4xbf16> to vector<64x4xbf16>
    %c0_46 = arith.constant 0 : index
    %c0_47 = arith.constant 0 : index
    %c1_48 = arith.constant 1 : index
    %c2_49 = arith.constant 2 : index
    %c0_50 = arith.constant 0 : index
    %42 = vector.load %arg2[%c0_46, %c0_47, %c1_48, %c2_49, %c0_50] : memref<1x1x10x10x4xbf16, #tpu.memory_space<vmem>>, vector<1x1x8x8x4xbf16>
    %43 = vector.shape_cast %42 : vector<1x1x8x8x4xbf16> to vector<8x8x4xbf16>
    %44 = vector.shape_cast %43 : vector<8x8x4xbf16> to vector<64x4xbf16>
    %45 = tpu.concatenate %35, %38, %41, %44 in 1 : vector<64x4xbf16>, vector<64x4xbf16>, vector<64x4xbf16>, vector<64x4xbf16> -> vector<64x16xbf16>
    %c1_51 = arith.constant 1 : index
    %c0_52 = arith.constant 0 : index
    %c0_53 = arith.constant 0 : index
    %46 = vector.load %arg3[%c1_51, %c0_52, %c0_53] : memref<4x16x8xbf16, #tpu.memory_space<vmem>>, vector<1x16x8xbf16>
    %47 = vector.shape_cast %46 : vector<1x16x8xbf16> to vector<16x8xbf16>
    %cst_54 = arith.constant dense<0.000000e+00> : vector<64x8xf32>
    %48 = tpu.matmul %45, %47, %cst_54 {dimension_numbers = #tpu.dot_dimension_numbers<[1], [0], [0], [1], [0, 0, 1, 1], [], []>} : vector<64x16xbf16>, vector<16x8xbf16>, vector<64x8xf32> -> vector<64x8xf32>
    %cst_55 = arith.constant dense<0.000000e+00> : vector<8xf32>
    %49 = vector.multi_reduction <add>, %48, %cst_55 [0] : vector<64x8xf32> to vector<8xf32>
    %50 = vector.shape_cast %49 : vector<8xf32> to vector<1x8xf32>
    %51 = arith.addf %23, %50 : vector<1x8xf32>
    %52 = arith.mulf %48, %48 : vector<64x8xf32>
    %cst_56 = arith.constant dense<0.000000e+00> : vector<8xf32>
    %53 = vector.multi_reduction <add>, %52, %cst_56 [0] : vector<64x8xf32> to vector<8xf32>
    %54 = vector.shape_cast %53 : vector<8xf32> to vector<1x8xf32>
    %55 = arith.addf %27, %54 : vector<1x8xf32>
    %56 = vector.shape_cast %48 : vector<64x8xf32> to vector<8x8x8xf32>
    %57 = arith.truncf %56 : vector<8x8x8xf32> to vector<8x8x8xbf16>
    %c0_57 = arith.constant 0 : index
    %c0_58 = arith.constant 0 : index
    %c1_59 = arith.constant 1 : index
    %c0_60 = arith.constant 0 : index
    %c0_61 = arith.constant 0 : index
    %c0_62 = arith.constant 0 : index
    %58 = vector.load %arg4[%c0_57, %c0_58, %c1_59, %c0_60, %c0_61, %c0_62] : memref<1x2x2x8x8x8xbf16, #tpu.memory_space<vmem>>, vector<1x1x1x8x8x8xbf16>
    %59 = vector.shape_cast %58 : vector<1x1x1x8x8x8xbf16> to vector<8x8x8xbf16>
    %60 = vector.shape_cast %57 : vector<8x8x8xbf16> to vector<1x1x1x8x8x8xbf16>
    tpu.vector_store %arg4[%c0_57, %c0_58, %c1_59, %c0_60, %c0_61, %c0_62], %60 {strides = array<i32>} : memref<1x2x2x8x8x8xbf16, #tpu.memory_space<vmem>>, vector<1x1x1x8x8x8xbf16>,
    %c0_63 = arith.constant 0 : index
    %c0_64 = arith.constant 0 : index
    %c1_65 = arith.constant 1 : index
    %c0_66 = arith.constant 0 : index
    %c0_67 = arith.constant 0 : index
    %61 = vector.load %arg2[%c0_63, %c0_64, %c1_65, %c0_66, %c0_67] : memref<1x1x10x10x4xbf16, #tpu.memory_space<vmem>>, vector<1x1x8x8x4xbf16>
    %62 = vector.shape_cast %61 : vector<1x1x8x8x4xbf16> to vector<8x8x4xbf16>
    %63 = vector.shape_cast %62 : vector<8x8x4xbf16> to vector<64x4xbf16>
    %c0_68 = arith.constant 0 : index
    %c0_69 = arith.constant 0 : index
    %c1_70 = arith.constant 1 : index
    %c1_71 = arith.constant 1 : index
    %c0_72 = arith.constant 0 : index
    %64 = vector.load %arg2[%c0_68, %c0_69, %c1_70, %c1_71, %c0_72] : memref<1x1x10x10x4xbf16, #tpu.memory_space<vmem>>, vector<1x1x8x8x4xbf16>
    %65 = vector.shape_cast %64 : vector<1x1x8x8x4xbf16> to vector<8x8x4xbf16>
    %66 = vector.shape_cast %65 : vector<8x8x4xbf16> to vector<64x4xbf16>
    %c0_73 = arith.constant 0 : index
    %c0_74 = arith.constant 0 : index
    %c2_75 = arith.constant 2 : index
    %c0_76 = arith.constant 0 : index
    %c0_77 = arith.constant 0 : index
    %67 = vector.load %arg2[%c0_73, %c0_74, %c2_75, %c0_76, %c0_77] : memref<1x1x10x10x4xbf16, #tpu.memory_space<vmem>>, vector<1x1x8x8x4xbf16>
    %68 = vector.shape_cast %67 : vector<1x1x8x8x4xbf16> to vector<8x8x4xbf16>
    %69 = vector.shape_cast %68 : vector<8x8x4xbf16> to vector<64x4xbf16>
    %c0_78 = arith.constant 0 : index
    %c0_79 = arith.constant 0 : index
    %c2_80 = arith.constant 2 : index
    %c1_81 = arith.constant 1 : index
    %c0_82 = arith.constant 0 : index
    %70 = vector.load %arg2[%c0_78, %c0_79, %c2_80, %c1_81, %c0_82] : memref<1x1x10x10x4xbf16, #tpu.memory_space<vmem>>, vector<1x1x8x8x4xbf16>
    %71 = vector.shape_cast %70 : vector<1x1x8x8x4xbf16> to vector<8x8x4xbf16>
    %72 = vector.shape_cast %71 : vector<8x8x4xbf16> to vector<64x4xbf16>
    %73 = tpu.concatenate %63, %66, %69, %72 in 1 : vector<64x4xbf16>, vector<64x4xbf16>, vector<64x4xbf16>, vector<64x4xbf16> -> vector<64x16xbf16>
    %c2_83 = arith.constant 2 : index
    %c0_84 = arith.constant 0 : index
    %c0_85 = arith.constant 0 : index
    %74 = vector.load %arg3[%c2_83, %c0_84, %c0_85] : memref<4x16x8xbf16, #tpu.memory_space<vmem>>, vector<1x16x8xbf16>
    %75 = vector.shape_cast %74 : vector<1x16x8xbf16> to vector<16x8xbf16>
    %cst_86 = arith.constant dense<0.000000e+00> : vector<64x8xf32>
    %76 = tpu.matmul %73, %75, %cst_86 {dimension_numbers = #tpu.dot_dimension_numbers<[1], [0], [0], [1], [0, 0, 1, 1], [], []>} : vector<64x16xbf16>, vector<16x8xbf16>, vector<64x8xf32> -> vector<64x8xf32>
    %cst_87 = arith.constant dense<0.000000e+00> : vector<8xf32>
    %77 = vector.multi_reduction <add>, %76, %cst_87 [0] : vector<64x8xf32> to vector<8xf32>
    %78 = vector.shape_cast %77 : vector<8xf32> to vector<1x8xf32>
    %79 = arith.addf %51, %78 : vector<1x8xf32>
    %80 = arith.mulf %76, %76 : vector<64x8xf32>
    %cst_88 = arith.constant dense<0.000000e+00> : vector<8xf32>
    %81 = vector.multi_reduction <add>, %80, %cst_88 [0] : vector<64x8xf32> to vector<8xf32>
    %82 = vector.shape_cast %81 : vector<8xf32> to vector<1x8xf32>
    %83 = arith.addf %55, %82 : vector<1x8xf32>
    %84 = vector.shape_cast %76 : vector<64x8xf32> to vector<8x8x8xf32>
    %85 = arith.truncf %84 : vector<8x8x8xf32> to vector<8x8x8xbf16>
    %c0_89 = arith.constant 0 : index
    %c1_90 = arith.constant 1 : index
    %c0_91 = arith.constant 0 : index
    %c0_92 = arith.constant 0 : index
    %c0_93 = arith.constant 0 : index
    %c0_94 = arith.constant 0 : index
    %86 = vector.load %arg4[%c0_89, %c1_90, %c0_91, %c0_92, %c0_93, %c0_94] : memref<1x2x2x8x8x8xbf16, #tpu.memory_space<vmem>>, vector<1x1x1x8x8x8xbf16>
    %87 = vector.shape_cast %86 : vector<1x1x1x8x8x8xbf16> to vector<8x8x8xbf16>
    %88 = vector.shape_cast %85 : vector<8x8x8xbf16> to vector<1x1x1x8x8x8xbf16>
    tpu.vector_store %arg4[%c0_89, %c1_90, %c0_91, %c0_92, %c0_93, %c0_94], %88 {strides = array<i32>} : memref<1x2x2x8x8x8xbf16, #tpu.memory_space<vmem>>, vector<1x1x1x8x8x8xbf16>,
    %c0_95 = arith.constant 0 : index
    %c0_96 = arith.constant 0 : index
    %c1_97 = arith.constant 1 : index
    %c1_98 = arith.constant 1 : index
    %c0_99 = arith.constant 0 : index
    %89 = vector.load %arg2[%c0_95, %c0_96, %c1_97, %c1_98, %c0_99] : memref<1x1x10x10x4xbf16, #tpu.memory_space<vmem>>, vector<1x1x8x8x4xbf16>
    %90 = vector.shape_cast %89 : vector<1x1x8x8x4xbf16> to vector<8x8x4xbf16>
    %91 = vector.shape_cast %90 : vector<8x8x4xbf16> to vector<64x4xbf16>
    %c0_100 = arith.constant 0 : index
    %c0_101 = arith.constant 0 : index
    %c1_102 = arith.constant 1 : index
    %c2_103 = arith.constant 2 : index
    %c0_104 = arith.constant 0 : index
    %92 = vector.load %arg2[%c0_100, %c0_101, %c1_102, %c2_103, %c0_104] : memref<1x1x10x10x4xbf16, #tpu.memory_space<vmem>>, vector<1x1x8x8x4xbf16>
    %93 = vector.shape_cast %92 : vector<1x1x8x8x4xbf16> to vector<8x8x4xbf16>
    %94 = vector.shape_cast %93 : vector<8x8x4xbf16> to vector<64x4xbf16>
    %c0_105 = arith.constant 0 : index
    %c0_106 = arith.constant 0 : index
    %c2_107 = arith.constant 2 : index
    %c1_108 = arith.constant 1 : index
    %c0_109 = arith.constant 0 : index
    %95 = vector.load %arg2[%c0_105, %c0_106, %c2_107, %c1_108, %c0_109] : memref<1x1x10x10x4xbf16, #tpu.memory_space<vmem>>, vector<1x1x8x8x4xbf16>
    %96 = vector.shape_cast %95 : vector<1x1x8x8x4xbf16> to vector<8x8x4xbf16>
    %97 = vector.shape_cast %96 : vector<8x8x4xbf16> to vector<64x4xbf16>
    %c0_110 = arith.constant 0 : index
    %c0_111 = arith.constant 0 : index
    %c2_112 = arith.constant 2 : index
    %c2_113 = arith.constant 2 : index
    %c0_114 = arith.constant 0 : index
    %98 = vector.load %arg2[%c0_110, %c0_111, %c2_112, %c2_113, %c0_114] : memref<1x1x10x10x4xbf16, #tpu.memory_space<vmem>>, vector<1x1x8x8x4xbf16>
    %99 = vector.shape_cast %98 : vector<1x1x8x8x4xbf16> to vector<8x8x4xbf16>
    %100 = vector.shape_cast %99 : vector<8x8x4xbf16> to vector<64x4xbf16>
    %101 = tpu.concatenate %91, %94, %97, %100 in 1 : vector<64x4xbf16>, vector<64x4xbf16>, vector<64x4xbf16>, vector<64x4xbf16> -> vector<64x16xbf16>
    %c3 = arith.constant 3 : index
    %c0_115 = arith.constant 0 : index
    %c0_116 = arith.constant 0 : index
    %102 = vector.load %arg3[%c3, %c0_115, %c0_116] : memref<4x16x8xbf16, #tpu.memory_space<vmem>>, vector<1x16x8xbf16>
    %103 = vector.shape_cast %102 : vector<1x16x8xbf16> to vector<16x8xbf16>
    %cst_117 = arith.constant dense<0.000000e+00> : vector<64x8xf32>
    %104 = tpu.matmul %101, %103, %cst_117 {dimension_numbers = #tpu.dot_dimension_numbers<[1], [0], [0], [1], [0, 0, 1, 1], [], []>} : vector<64x16xbf16>, vector<16x8xbf16>, vector<64x8xf32> -> vector<64x8xf32>
    %cst_118 = arith.constant dense<0.000000e+00> : vector<8xf32>
    %105 = vector.multi_reduction <add>, %104, %cst_118 [0] : vector<64x8xf32> to vector<8xf32>
    %106 = vector.shape_cast %105 : vector<8xf32> to vector<1x8xf32>
    %107 = arith.addf %79, %106 : vector<1x8xf32>
    %108 = arith.mulf %104, %104 : vector<64x8xf32>
    %cst_119 = arith.constant dense<0.000000e+00> : vector<8xf32>
    %109 = vector.multi_reduction <add>, %108, %cst_119 [0] : vector<64x8xf32> to vector<8xf32>
    %110 = vector.shape_cast %109 : vector<8xf32> to vector<1x8xf32>
    %111 = arith.addf %83, %110 : vector<1x8xf32>
    %112 = vector.shape_cast %104 : vector<64x8xf32> to vector<8x8x8xf32>
    %113 = arith.truncf %112 : vector<8x8x8xf32> to vector<8x8x8xbf16>
    %c0_120 = arith.constant 0 : index
    %c1_121 = arith.constant 1 : index
    %c1_122 = arith.constant 1 : index
    %c0_123 = arith.constant 0 : index
    %c0_124 = arith.constant 0 : index
    %c0_125 = arith.constant 0 : index
    %114 = vector.load %arg4[%c0_120, %c1_121, %c1_122, %c0_123, %c0_124, %c0_125] : memref<1x2x2x8x8x8xbf16, #tpu.memory_space<vmem>>, vector<1x1x1x8x8x8xbf16>
    %115 = vector.shape_cast %114 : vector<1x1x1x8x8x8xbf16> to vector<8x8x8xbf16>
    %116 = vector.shape_cast %113 : vector<8x8x8xbf16> to vector<1x1x1x8x8x8xbf16>
    tpu.vector_store %arg4[%c0_120, %c1_121, %c1_122, %c0_123, %c0_124, %c0_125], %116 {strides = array<i32>} : memref<1x2x2x8x8x8xbf16, #tpu.memory_space<vmem>>, vector<1x1x1x8x8x8xbf16>,
    %c0_126 = arith.constant 0 : index
    %c0_127 = arith.constant 0 : index
    %c0_128 = arith.constant 0 : index
    %117 = vector.load %arg5[%c0_126, %c0_127, %c0_128] : memref<1x2x8xf32, #tpu.memory_space<vmem>>, vector<1x1x8xf32>
    %118 = vector.shape_cast %117 : vector<1x1x8xf32> to vector<1x8xf32>
    %119 = arith.addf %118, %107 : vector<1x8xf32>
    %c0_129 = arith.constant 0 : index
    %c0_130 = arith.constant 0 : index
    %c0_131 = arith.constant 0 : index
    %120 = vector.load %arg5[%c0_129, %c0_130, %c0_131] : memref<1x2x8xf32, #tpu.memory_space<vmem>>, vector<1x1x8xf32>
    %121 = vector.shape_cast %120 : vector<1x1x8xf32> to vector<1x8xf32>
    %122 = vector.shape_cast %119 : vector<1x8xf32> to vector<1x1x8xf32>
    tpu.vector_store %arg5[%c0_129, %c0_130, %c0_131], %122 {strides = array<i32>} : memref<1x2x8xf32, #tpu.memory_space<vmem>>, vector<1x1x8xf32>,
    %c0_132 = arith.constant 0 : index
    %c1_133 = arith.constant 1 : index
    %c0_134 = arith.constant 0 : index
    %123 = vector.load %arg5[%c0_132, %c1_133, %c0_134] : memref<1x2x8xf32, #tpu.memory_space<vmem>>, vector<1x1x8xf32>
    %124 = vector.shape_cast %123 : vector<1x1x8xf32> to vector<1x8xf32>
    %125 = arith.addf %124, %111 : vector<1x8xf32>
    %c0_135 = arith.constant 0 : index
    %c1_136 = arith.constant 1 : index
    %c0_137 = arith.constant 0 : index
    %126 = vector.load %arg5[%c0_135, %c1_136, %c0_137] : memref<1x2x8xf32, #tpu.memory_space<vmem>>, vector<1x1x8xf32>
    %127 = vector.shape_cast %126 : vector<1x1x8xf32> to vector<1x8xf32>
    %128 = vector.shape_cast %125 : vector<1x8xf32> to vector<1x1x8xf32>
    tpu.vector_store %arg5[%c0_135, %c1_136, %c0_137], %128 {strides = array<i32>} : memref<1x2x8xf32, #tpu.memory_space<vmem>>, vector<1x1x8xf32>,
    return
  }
  func.func @transform_0(%arg0: i32, %arg1: i32) -> (i32, i32, i32, i32, i32) {
    %c0_i32 = arith.constant 0 : i32
    %c0_i32_0 = arith.constant 0 : i32
    %c0_i32_1 = arith.constant 0 : i32
    %c0_i32_2 = arith.constant 0 : i32
    return %arg0, %arg1, %c0_i32, %c0_i32_0, %c0_i32_1 : i32, i32, i32, i32, i32
  }
  func.func @transform_1(%arg0: i32, %arg1: i32) -> (i32, i32, i32) {
    %c0_i32 = arith.constant 0 : i32
    %c0_i32_0 = arith.constant 0 : i32
    %c0_i32_1 = arith.constant 0 : i32
    %c0_i32_2 = arith.constant 0 : i32
    return %c0_i32, %c0_i32_0, %c0_i32_1 : i32, i32, i32
  }
  func.func @transform_2(%arg0: i32, %arg1: i32) -> (i32, i32, i32, i32, i32, i32) {
    %c0_i32 = arith.constant 0 : i32
    %c0_i32_0 = arith.constant 0 : i32
    %c0_i32_1 = arith.constant 0 : i32
    %c0_i32_2 = arith.constant 0 : i32
    %c0_i32_3 = arith.constant 0 : i32
    return %arg0, %c0_i32, %c0_i32_0, %arg1, %c0_i32_1, %c0_i32_2 : i32, i32, i32, i32, i32, i32
  }
  func.func @transform_3(%arg0: i32, %arg1: i32) -> (i32, i32, i32) {
    %c0_i32 = arith.constant 0 : i32
    %c0_i32_0 = arith.constant 0 : i32
    %c0_i32_1 = arith.constant 0 : i32
    return %arg0, %c0_i32, %c0_i32_0 : i32, i32, i32
  }
}

module attributes {stable_mosaic.version = 11 : i64} {
  func.func @_norm_concat_kernel(%arg0: i32, %arg1: i32, %arg2: memref<1x2x2x8x8x8xbf16, #tpu.memory_space<vmem>>, %arg3: memref<1x2x8xf32, #tpu.memory_space<vmem>>, %arg4: memref<1x2x2x8x8x8xf32, #tpu.memory_space<vmem>>, %arg5: memref<1x2x2x8x8x16xf32, #tpu.memory_space<vmem>>) attributes {dimension_semantics = [#tpu.dimension_semantics<parallel>, #tpu.dimension_semantics<parallel>], iteration_bounds = array<i64: 2, 1>, scalar_prefetch = 0 : i64, scratch_operands = 0 : i64, tpu.core_type = #tpu.core_type<tc>, window_params = [{transform_indices = @transform_0, window_bounds = array<i64: 1, 2, 2, 8, 8, 8>}, {transform_indices = @transform_1, window_bounds = array<i64: 1, 2, 8>}, {transform_indices = @transform_2, window_bounds = array<i64: 1, 2, 2, 8, 8, 8>}, {transform_indices = @transform_3, window_bounds = array<i64: 1, 2, 2, 8, 8, 16>}]} {
    %c0 = arith.constant 0 : index
    %c0_0 = arith.constant 0 : index
    %c0_1 = arith.constant 0 : index
    %0 = vector.load %arg3[%c0, %c0_0, %c0_1] : memref<1x2x8xf32, #tpu.memory_space<vmem>>, vector<1x1x8xf32>
    %1 = vector.shape_cast %0 : vector<1x1x8xf32> to vector<1x8xf32>
    %cst = arith.constant 3.906250e-03 : f32
    %2 = vector.broadcast %cst : f32 to vector<1x8xf32>
    %3 = arith.mulf %1, %2 : vector<1x8xf32>
    %4 = vector.shape_cast %3 : vector<1x8xf32> to vector<1x1x8xf32>
    %c0_2 = arith.constant 0 : index
    %c1 = arith.constant 1 : index
    %c0_3 = arith.constant 0 : index
    %5 = vector.load %arg3[%c0_2, %c1, %c0_3] : memref<1x2x8xf32, #tpu.memory_space<vmem>>, vector<1x1x8xf32>
    %6 = vector.shape_cast %5 : vector<1x1x8xf32> to vector<1x8xf32>
    %cst_4 = arith.constant 3.906250e-03 : f32
    %7 = vector.broadcast %cst_4 : f32 to vector<1x8xf32>
    %8 = arith.mulf %6, %7 : vector<1x8xf32>
    %9 = vector.shape_cast %8 : vector<1x8xf32> to vector<1x1x8xf32>
    %10 = arith.mulf %4, %4 : vector<1x1x8xf32>
    %11 = arith.subf %9, %10 : vector<1x1x8xf32>
    %cst_5 = arith.constant 0.000000e+00 : f32
    %12 = vector.broadcast %cst_5 : f32 to vector<1x1x8xf32>
    %13 = arith.maximumf %11, %12 : vector<1x1x8xf32>
    %cst_6 = arith.constant 9.99999974E-6 : f32
    %14 = vector.broadcast %cst_6 : f32 to vector<1x1x8xf32>
    %15 = arith.addf %13, %14 : vector<1x1x8xf32>
    %16 = math.rsqrt %15 : vector<1x1x8xf32>
    %c0_7 = arith.constant 0 : index
    %c0_8 = arith.constant 0 : index
    %c0_9 = arith.constant 0 : index
    %c0_10 = arith.constant 0 : index
    %c0_11 = arith.constant 0 : index
    %c0_12 = arith.constant 0 : index
    %17 = vector.load %arg2[%c0_7, %c0_8, %c0_9, %c0_10, %c0_11, %c0_12] : memref<1x2x2x8x8x8xbf16, #tpu.memory_space<vmem>>, vector<1x1x1x8x8x8xbf16>
    %18 = vector.shape_cast %17 : vector<1x1x1x8x8x8xbf16> to vector<8x8x8xbf16>
    %19 = arith.extf %18 : vector<8x8x8xbf16> to vector<8x8x8xf32>
    %20 = vector.broadcast %4 : vector<1x1x8xf32> to vector<8x8x8xf32>
    %21 = arith.subf %19, %20 : vector<8x8x8xf32>
    %22 = vector.broadcast %16 : vector<1x1x8xf32> to vector<8x8x8xf32>
    %23 = arith.mulf %21, %22 : vector<8x8x8xf32>
    %cst_13 = arith.constant 0.000000e+00 : f32
    %24 = vector.broadcast %cst_13 : f32 to vector<8x8x8xf32>
    %25 = arith.maximumf %23, %24 : vector<8x8x8xf32>
    %c0_14 = arith.constant 0 : index
    %c0_15 = arith.constant 0 : index
    %c0_16 = arith.constant 0 : index
    %c0_17 = arith.constant 0 : index
    %c0_18 = arith.constant 0 : index
    %c0_19 = arith.constant 0 : index
    %26 = vector.load %arg5[%c0_14, %c0_15, %c0_16, %c0_17, %c0_18, %c0_19] : memref<1x2x2x8x8x16xf32, #tpu.memory_space<vmem>>, vector<1x1x1x8x8x8xf32>
    %27 = vector.shape_cast %26 : vector<1x1x1x8x8x8xf32> to vector<8x8x8xf32>
    %28 = vector.shape_cast %25 : vector<8x8x8xf32> to vector<1x1x1x8x8x8xf32>
    tpu.vector_store %arg5[%c0_14, %c0_15, %c0_16, %c0_17, %c0_18, %c0_19], %28 {strides = array<i32>} : memref<1x2x2x8x8x16xf32, #tpu.memory_space<vmem>>, vector<1x1x1x8x8x8xf32>,
    %c0_20 = arith.constant 0 : index
    %c0_21 = arith.constant 0 : index
    %c0_22 = arith.constant 0 : index
    %c0_23 = arith.constant 0 : index
    %c0_24 = arith.constant 0 : index
    %c0_25 = arith.constant 0 : index
    %29 = vector.load %arg4[%c0_20, %c0_21, %c0_22, %c0_23, %c0_24, %c0_25] : memref<1x2x2x8x8x8xf32, #tpu.memory_space<vmem>>, vector<1x1x1x8x8x8xf32>
    %30 = vector.shape_cast %29 : vector<1x1x1x8x8x8xf32> to vector<8x8x8xf32>
    %c0_26 = arith.constant 0 : index
    %c0_27 = arith.constant 0 : index
    %c0_28 = arith.constant 0 : index
    %c0_29 = arith.constant 0 : index
    %c0_30 = arith.constant 0 : index
    %c8 = arith.constant 8 : index
    %31 = vector.load %arg5[%c0_26, %c0_27, %c0_28, %c0_29, %c0_30, %c8] : memref<1x2x2x8x8x16xf32, #tpu.memory_space<vmem>>, vector<1x1x1x8x8x8xf32>
    %32 = vector.shape_cast %31 : vector<1x1x1x8x8x8xf32> to vector<8x8x8xf32>
    %33 = vector.shape_cast %30 : vector<8x8x8xf32> to vector<1x1x1x8x8x8xf32>
    tpu.vector_store %arg5[%c0_26, %c0_27, %c0_28, %c0_29, %c0_30, %c8], %33 {strides = array<i32>} : memref<1x2x2x8x8x16xf32, #tpu.memory_space<vmem>>, vector<1x1x1x8x8x8xf32>,
    %c0_31 = arith.constant 0 : index
    %c0_32 = arith.constant 0 : index
    %c1_33 = arith.constant 1 : index
    %c0_34 = arith.constant 0 : index
    %c0_35 = arith.constant 0 : index
    %c0_36 = arith.constant 0 : index
    %34 = vector.load %arg2[%c0_31, %c0_32, %c1_33, %c0_34, %c0_35, %c0_36] : memref<1x2x2x8x8x8xbf16, #tpu.memory_space<vmem>>, vector<1x1x1x8x8x8xbf16>
    %35 = vector.shape_cast %34 : vector<1x1x1x8x8x8xbf16> to vector<8x8x8xbf16>
    %36 = arith.extf %35 : vector<8x8x8xbf16> to vector<8x8x8xf32>
    %37 = vector.broadcast %4 : vector<1x1x8xf32> to vector<8x8x8xf32>
    %38 = arith.subf %36, %37 : vector<8x8x8xf32>
    %39 = vector.broadcast %16 : vector<1x1x8xf32> to vector<8x8x8xf32>
    %40 = arith.mulf %38, %39 : vector<8x8x8xf32>
    %cst_37 = arith.constant 0.000000e+00 : f32
    %41 = vector.broadcast %cst_37 : f32 to vector<8x8x8xf32>
    %42 = arith.maximumf %40, %41 : vector<8x8x8xf32>
    %c0_38 = arith.constant 0 : index
    %c0_39 = arith.constant 0 : index
    %c1_40 = arith.constant 1 : index
    %c0_41 = arith.constant 0 : index
    %c0_42 = arith.constant 0 : index
    %c0_43 = arith.constant 0 : index
    %43 = vector.load %arg5[%c0_38, %c0_39, %c1_40, %c0_41, %c0_42, %c0_43] : memref<1x2x2x8x8x16xf32, #tpu.memory_space<vmem>>, vector<1x1x1x8x8x8xf32>
    %44 = vector.shape_cast %43 : vector<1x1x1x8x8x8xf32> to vector<8x8x8xf32>
    %45 = vector.shape_cast %42 : vector<8x8x8xf32> to vector<1x1x1x8x8x8xf32>
    tpu.vector_store %arg5[%c0_38, %c0_39, %c1_40, %c0_41, %c0_42, %c0_43], %45 {strides = array<i32>} : memref<1x2x2x8x8x16xf32, #tpu.memory_space<vmem>>, vector<1x1x1x8x8x8xf32>,
    %c0_44 = arith.constant 0 : index
    %c0_45 = arith.constant 0 : index
    %c1_46 = arith.constant 1 : index
    %c0_47 = arith.constant 0 : index
    %c0_48 = arith.constant 0 : index
    %c0_49 = arith.constant 0 : index
    %46 = vector.load %arg4[%c0_44, %c0_45, %c1_46, %c0_47, %c0_48, %c0_49] : memref<1x2x2x8x8x8xf32, #tpu.memory_space<vmem>>, vector<1x1x1x8x8x8xf32>
    %47 = vector.shape_cast %46 : vector<1x1x1x8x8x8xf32> to vector<8x8x8xf32>
    %c0_50 = arith.constant 0 : index
    %c0_51 = arith.constant 0 : index
    %c1_52 = arith.constant 1 : index
    %c0_53 = arith.constant 0 : index
    %c0_54 = arith.constant 0 : index
    %c8_55 = arith.constant 8 : index
    %48 = vector.load %arg5[%c0_50, %c0_51, %c1_52, %c0_53, %c0_54, %c8_55] : memref<1x2x2x8x8x16xf32, #tpu.memory_space<vmem>>, vector<1x1x1x8x8x8xf32>
    %49 = vector.shape_cast %48 : vector<1x1x1x8x8x8xf32> to vector<8x8x8xf32>
    %50 = vector.shape_cast %47 : vector<8x8x8xf32> to vector<1x1x1x8x8x8xf32>
    tpu.vector_store %arg5[%c0_50, %c0_51, %c1_52, %c0_53, %c0_54, %c8_55], %50 {strides = array<i32>} : memref<1x2x2x8x8x16xf32, #tpu.memory_space<vmem>>, vector<1x1x1x8x8x8xf32>,
    %c0_56 = arith.constant 0 : index
    %c1_57 = arith.constant 1 : index
    %c0_58 = arith.constant 0 : index
    %c0_59 = arith.constant 0 : index
    %c0_60 = arith.constant 0 : index
    %c0_61 = arith.constant 0 : index
    %51 = vector.load %arg2[%c0_56, %c1_57, %c0_58, %c0_59, %c0_60, %c0_61] : memref<1x2x2x8x8x8xbf16, #tpu.memory_space<vmem>>, vector<1x1x1x8x8x8xbf16>
    %52 = vector.shape_cast %51 : vector<1x1x1x8x8x8xbf16> to vector<8x8x8xbf16>
    %53 = arith.extf %52 : vector<8x8x8xbf16> to vector<8x8x8xf32>
    %54 = vector.broadcast %4 : vector<1x1x8xf32> to vector<8x8x8xf32>
    %55 = arith.subf %53, %54 : vector<8x8x8xf32>
    %56 = vector.broadcast %16 : vector<1x1x8xf32> to vector<8x8x8xf32>
    %57 = arith.mulf %55, %56 : vector<8x8x8xf32>
    %cst_62 = arith.constant 0.000000e+00 : f32
    %58 = vector.broadcast %cst_62 : f32 to vector<8x8x8xf32>
    %59 = arith.maximumf %57, %58 : vector<8x8x8xf32>
    %c0_63 = arith.constant 0 : index
    %c1_64 = arith.constant 1 : index
    %c0_65 = arith.constant 0 : index
    %c0_66 = arith.constant 0 : index
    %c0_67 = arith.constant 0 : index
    %c0_68 = arith.constant 0 : index
    %60 = vector.load %arg5[%c0_63, %c1_64, %c0_65, %c0_66, %c0_67, %c0_68] : memref<1x2x2x8x8x16xf32, #tpu.memory_space<vmem>>, vector<1x1x1x8x8x8xf32>
    %61 = vector.shape_cast %60 : vector<1x1x1x8x8x8xf32> to vector<8x8x8xf32>
    %62 = vector.shape_cast %59 : vector<8x8x8xf32> to vector<1x1x1x8x8x8xf32>
    tpu.vector_store %arg5[%c0_63, %c1_64, %c0_65, %c0_66, %c0_67, %c0_68], %62 {strides = array<i32>} : memref<1x2x2x8x8x16xf32, #tpu.memory_space<vmem>>, vector<1x1x1x8x8x8xf32>,
    %c0_69 = arith.constant 0 : index
    %c1_70 = arith.constant 1 : index
    %c0_71 = arith.constant 0 : index
    %c0_72 = arith.constant 0 : index
    %c0_73 = arith.constant 0 : index
    %c0_74 = arith.constant 0 : index
    %63 = vector.load %arg4[%c0_69, %c1_70, %c0_71, %c0_72, %c0_73, %c0_74] : memref<1x2x2x8x8x8xf32, #tpu.memory_space<vmem>>, vector<1x1x1x8x8x8xf32>
    %64 = vector.shape_cast %63 : vector<1x1x1x8x8x8xf32> to vector<8x8x8xf32>
    %c0_75 = arith.constant 0 : index
    %c1_76 = arith.constant 1 : index
    %c0_77 = arith.constant 0 : index
    %c0_78 = arith.constant 0 : index
    %c0_79 = arith.constant 0 : index
    %c8_80 = arith.constant 8 : index
    %65 = vector.load %arg5[%c0_75, %c1_76, %c0_77, %c0_78, %c0_79, %c8_80] : memref<1x2x2x8x8x16xf32, #tpu.memory_space<vmem>>, vector<1x1x1x8x8x8xf32>
    %66 = vector.shape_cast %65 : vector<1x1x1x8x8x8xf32> to vector<8x8x8xf32>
    %67 = vector.shape_cast %64 : vector<8x8x8xf32> to vector<1x1x1x8x8x8xf32>
    tpu.vector_store %arg5[%c0_75, %c1_76, %c0_77, %c0_78, %c0_79, %c8_80], %67 {strides = array<i32>} : memref<1x2x2x8x8x16xf32, #tpu.memory_space<vmem>>, vector<1x1x1x8x8x8xf32>,
    %c0_81 = arith.constant 0 : index
    %c1_82 = arith.constant 1 : index
    %c1_83 = arith.constant 1 : index
    %c0_84 = arith.constant 0 : index
    %c0_85 = arith.constant 0 : index
    %c0_86 = arith.constant 0 : index
    %68 = vector.load %arg2[%c0_81, %c1_82, %c1_83, %c0_84, %c0_85, %c0_86] : memref<1x2x2x8x8x8xbf16, #tpu.memory_space<vmem>>, vector<1x1x1x8x8x8xbf16>
    %69 = vector.shape_cast %68 : vector<1x1x1x8x8x8xbf16> to vector<8x8x8xbf16>
    %70 = arith.extf %69 : vector<8x8x8xbf16> to vector<8x8x8xf32>
    %71 = vector.broadcast %4 : vector<1x1x8xf32> to vector<8x8x8xf32>
    %72 = arith.subf %70, %71 : vector<8x8x8xf32>
    %73 = vector.broadcast %16 : vector<1x1x8xf32> to vector<8x8x8xf32>
    %74 = arith.mulf %72, %73 : vector<8x8x8xf32>
    %cst_87 = arith.constant 0.000000e+00 : f32
    %75 = vector.broadcast %cst_87 : f32 to vector<8x8x8xf32>
    %76 = arith.maximumf %74, %75 : vector<8x8x8xf32>
    %c0_88 = arith.constant 0 : index
    %c1_89 = arith.constant 1 : index
    %c1_90 = arith.constant 1 : index
    %c0_91 = arith.constant 0 : index
    %c0_92 = arith.constant 0 : index
    %c0_93 = arith.constant 0 : index
    %77 = vector.load %arg5[%c0_88, %c1_89, %c1_90, %c0_91, %c0_92, %c0_93] : memref<1x2x2x8x8x16xf32, #tpu.memory_space<vmem>>, vector<1x1x1x8x8x8xf32>
    %78 = vector.shape_cast %77 : vector<1x1x1x8x8x8xf32> to vector<8x8x8xf32>
    %79 = vector.shape_cast %76 : vector<8x8x8xf32> to vector<1x1x1x8x8x8xf32>
    tpu.vector_store %arg5[%c0_88, %c1_89, %c1_90, %c0_91, %c0_92, %c0_93], %79 {strides = array<i32>} : memref<1x2x2x8x8x16xf32, #tpu.memory_space<vmem>>, vector<1x1x1x8x8x8xf32>,
    %c0_94 = arith.constant 0 : index
    %c1_95 = arith.constant 1 : index
    %c1_96 = arith.constant 1 : index
    %c0_97 = arith.constant 0 : index
    %c0_98 = arith.constant 0 : index
    %c0_99 = arith.constant 0 : index
    %80 = vector.load %arg4[%c0_94, %c1_95, %c1_96, %c0_97, %c0_98, %c0_99] : memref<1x2x2x8x8x8xf32, #tpu.memory_space<vmem>>, vector<1x1x1x8x8x8xf32>
    %81 = vector.shape_cast %80 : vector<1x1x1x8x8x8xf32> to vector<8x8x8xf32>
    %c0_100 = arith.constant 0 : index
    %c1_101 = arith.constant 1 : index
    %c1_102 = arith.constant 1 : index
    %c0_103 = arith.constant 0 : index
    %c0_104 = arith.constant 0 : index
    %c8_105 = arith.constant 8 : index
    %82 = vector.load %arg5[%c0_100, %c1_101, %c1_102, %c0_103, %c0_104, %c8_105] : memref<1x2x2x8x8x16xf32, #tpu.memory_space<vmem>>, vector<1x1x1x8x8x8xf32>
    %83 = vector.shape_cast %82 : vector<1x1x1x8x8x8xf32> to vector<8x8x8xf32>
    %84 = vector.shape_cast %81 : vector<8x8x8xf32> to vector<1x1x1x8x8x8xf32>
    tpu.vector_store %arg5[%c0_100, %c1_101, %c1_102, %c0_103, %c0_104, %c8_105], %84 {strides = array<i32>} : memref<1x2x2x8x8x16xf32, #tpu.memory_space<vmem>>, vector<1x1x1x8x8x8xf32>,
    return
  }
  func.func @transform_0(%arg0: i32, %arg1: i32) -> (i32, i32, i32, i32, i32, i32) {
    %c0_i32 = arith.constant 0 : i32
    %c0_i32_0 = arith.constant 0 : i32
    %c0_i32_1 = arith.constant 0 : i32
    %c0_i32_2 = arith.constant 0 : i32
    %c0_i32_3 = arith.constant 0 : i32
    return %arg0, %c0_i32, %c0_i32_0, %arg1, %c0_i32_1, %c0_i32_2 : i32, i32, i32, i32, i32, i32
  }
  func.func @transform_1(%arg0: i32, %arg1: i32) -> (i32, i32, i32) {
    %c0_i32 = arith.constant 0 : i32
    %c0_i32_0 = arith.constant 0 : i32
    %c0_i32_1 = arith.constant 0 : i32
    return %arg0, %c0_i32, %c0_i32_0 : i32, i32, i32
  }
  func.func @transform_2(%arg0: i32, %arg1: i32) -> (i32, i32, i32, i32, i32, i32) {
    %c0_i32 = arith.constant 0 : i32
    %c0_i32_0 = arith.constant 0 : i32
    %c0_i32_1 = arith.constant 0 : i32
    %c0_i32_2 = arith.constant 0 : i32
    %c0_i32_3 = arith.constant 0 : i32
    return %arg0, %c0_i32, %c0_i32_0, %arg1, %c0_i32_1, %c0_i32_2 : i32, i32, i32, i32, i32, i32
  }
  func.func @transform_3(%arg0: i32, %arg1: i32) -> (i32, i32, i32, i32, i32, i32) {
    %c0_i32 = arith.constant 0 : i32
    %c0_i32_0 = arith.constant 0 : i32
    %c0_i32_1 = arith.constant 0 : i32
    %c0_i32_2 = arith.constant 0 : i32
    %c0_i32_3 = arith.constant 0 : i32
    return %arg0, %c0_i32, %c0_i32_0, %arg1, %c0_i32_1, %c0_i32_2 : i32, i32, i32, i32, i32, i32
  }
}

</mosaic_0001>

<llo_original>
// kernel: unet_up.3
$region0: #{unet_up.3}
  #allocation0 [shape = 'u32[]', space=smem, size = 0x4, offset = 0x4, fixed_abs, tag = 'smem constant byte address 0x4 - core index']
  #allocation1 [shape = 'u32[72,128]{1,0:T(1,128)}', space=vmem, size = 0x9000, scoped, tag = 'internal scratch']
  %s0 = inlined_call_operand.vmem [shape: bf16[2,2,2,8,8,8], index: 0, kind: input, shape index: {}]
  %s1 = inlined_call_operand.vmem [shape: f32[2,2,8], index: 1, kind: input, shape index: {}]
  %s2 = inlined_call_operand.vmem [shape: f32[2,2,2,8,8,8], index: 2, kind: input, shape index: {}]
  %s3 = inlined_call_operand.vmem [shape: f32[2,2,2,8,8,16], index: 3, kind: output, shape index: {}]
  %s4 = sld [smem:[#allocation0]]
  $region45: #{unet_up.3} parent=0
    _
  %s6 = ssub.s32 1, %s4
  %s7 = scalar_select 0, %s6, %s4
  loop: start=0, step=1, limit=4
  $region2: #{unet_up.3} parent=0 // loop_pre_header
    _
  $region3: #{unet_up.3} parent=0 // loop_header
    %s9 = sphi 0, %s13
    %p10 = scmp.ge.s32.totalorder %s9, 4
    %s16 = sphi 0, %s28
    %s17 = sphi 0, %s24
    %s18 = sphi 0, %s16
    %s19 = sphi 0, %s17
    %s20 = sphi 0, %s18
    %s21 = sphi 0, %s19
    %s33 = sphi 0, %s35
    %s36 = sphi 0, %s33
    %s37 = sphi 0, %s36
    %s53 = sphi 0, %s37
    %s59 = sphi 0, %s61
    %s62 = sphi 0, %s59
    %s63 = sphi 0, %s62
    %s79 = sphi 0, %s63
    %s87 = sphi 0, %s89
    %s90 = sphi 0, %s87
    %s91 = sphi 0, %s90
    %s107 = sphi 0, %s91
    %s115 = sphi 0, %s117
    %s118 = sphi 0, %s115
    %s119 = sphi 0, %s118
    %s135 = sphi 0, %s119
  $region4: #{unet_up.3} parent=0 // loop_header_branch
    %12 = sbr.rel (%p10) target = $region8
  $region5: #{unet_up.3} parent=0 // loop_body
    %s14 = ssub.s32 %s9, 1
    %s15 = ssub.s32 %s9, 2
    %s22 = sadd.s32 1, %s17
    %p23 = scmp.ge.s32.totalorder %s22, 1
    %s24 = scalar_select %p23, 0, %s22
    %s25 = sadd.s32 1, %s16
    %s26 = scalar_select %p23, %s25, %s16
    %p27 = scmp.ge.s32.totalorder %s26, 2
    %s28 = scalar_select %p27, 0, %s26
    %s29 = ssub.s32 %s16, %s28
    %s30 = ssub.s32 %s17, %s24
    %s31 = sor.u32 %s29, %s30
    %p32 = scmp.eq.s32.totalorder %s31, 0
    %s34 = sadd.s32 %s33, 1
    %s35 = scalar_select %p32, %s33, %s34
    %p38 = pneg %p32
    %p39 = scmp.eq.s32.totalorder %s9, 1
    %p40 = por %p38, %p39
    %p41 = scmp.ne.s32.totalorder %s33, %s36
    %p42 = scmp.eq.s32.totalorder %s9, 0
    %p43 = por %p41, %p42
    %p44 = scmp.ne.s32.totalorder %s33, %s36
    %p45 = scmp.eq.s32.totalorder %s14, 1
    %p46 = por %p44, %p45
    %p47 = scmp.ne.s32.totalorder %s36, %s37
    %p48 = scmp.eq.s32.totalorder %s14, 0
    %p49 = por %p47, %p48
    %p50 = scmp.ne.s32.totalorder %s36, %s37
    %p51 = scmp.eq.s32.totalorder %s15, 1
    %p52 = por %p50, %p51
    %p54 = scmp.ne.s32.totalorder %s37, %s53
    %p55 = scmp.eq.s32.totalorder %s15, 0
    %p56 = por %p54, %p55
    %s57 = ssub.s32 %s16, %s28
    %p58 = scmp.eq.s32.totalorder %s57, 0
    %s60 = sadd.s32 %s59, 1
    %s61 = scalar_select %p58, %s59, %s60
    %p64 = pneg %p58
    %p65 = scmp.eq.s32.totalorder %s9, 1
    %p66 = por %p64, %p65
    %p67 = scmp.ne.s32.totalorder %s59, %s62
    %p68 = scmp.eq.s32.totalorder %s9, 0
    %p69 = por %p67, %p68
    %p70 = scmp.ne.s32.totalorder %s59, %s62
    %p71 = scmp.eq.s32.totalorder %s14, 1
    %p72 = por %p70, %p71
    %p73 = scmp.ne.s32.totalorder %s62, %s63
    %p74 = scmp.eq.s32.totalorder %s14, 0
    %p75 = por %p73, %p74
    %p76 = scmp.ne.s32.totalorder %s62, %s63
    %p77 = scmp.eq.s32.totalorder %s15, 1
    %p78 = por %p76, %p77
    %p80 = scmp.ne.s32.totalorder %s63, %s79
    %p81 = scmp.eq.s32.totalorder %s15, 0
    %p82 = por %p80, %p81
    %s83 = ssub.s32 %s16, %s28
    %s84 = ssub.s32 %s17, %s24
    %s85 = sor.u32 %s83, %s84
    %p86 = scmp.eq.s32.totalorder %s85, 0
    %s88 = sadd.s32 %s87, 1
    %s89 = scalar_select %p86, %s87, %s88
    %p92 = pneg %p86
    %p93 = scmp.eq.s32.totalorder %s9, 1
    %p94 = por %p92, %p93
    %p95 = scmp.ne.s32.totalorder %s87, %s90
    %p96 = scmp.eq.s32.totalorder %s9, 0
    %p97 = por %p95, %p96
    %p98 = scmp.ne.s32.totalorder %s87, %s90
    %p99 = scmp.eq.s32.totalorder %s14, 1
    %p100 = por %p98, %p99
    %p101 = scmp.ne.s32.totalorder %s90, %s91
    %p102 = scmp.eq.s32.totalorder %s14, 0
    %p103 = por %p101, %p102
    %p104 = scmp.ne.s32.totalorder %s90, %s91
    %p105 = scmp.eq.s32.totalorder %s15, 1
    %p106 = por %p104, %p105
    %p108 = scmp.ne.s32.totalorder %s91, %s107
    %p109 = scmp.eq.s32.totalorder %s15, 0
    %p110 = por %p108, %p109
    %s111 = ssub.s32 %s16, %s28
    %s112 = ssub.s32 %s17, %s24
    %s113 = sor.u32 %s111, %s112
    %p114 = scmp.eq.s32.totalorder %s113, 0
    %s116 = sadd.s32 %s115, 1
    %s117 = scalar_select %p114, %s115, %s116
    %p120 = pneg %p114
    %p121 = scmp.eq.s32.totalorder %s9, 1
    %p122 = por %p120, %p121
    %p123 = scmp.ne.s32.totalorder %s115, %s118
    %p124 = scmp.eq.s32.totalorder %s9, 0
    %p125 = por %p123, %p124
    %p126 = scmp.ne.s32.totalorder %s115, %s118
    %p127 = scmp.eq.s32.totalorder %s14, 1
    %p128 = por %p126, %p127
    %p129 = scmp.ne.s32.totalorder %s118, %s119
    %p130 = scmp.eq.s32.totalorder %s14, 0
    %p131 = por %p129, %p130
    %p132 = scmp.ne.s32.totalorder %s118, %s119
    %p133 = scmp.eq.s32.totalorder %s15, 1
    %p134 = por %p132, %p133
    %p136 = scmp.ne.s32.totalorder %s119, %s135
    %p137 = scmp.eq.s32.totalorder %s15, 0
    %p138 = por %p136, %p137
    %p139 = scmp.le.s32.totalorder 1, %s9
    %p140 = scmp.lt.s32.totalorder %s9, 3
    %p141 = pnand %p139, %p140
    %p142 = pneg %p141
    // Predicated region
    $region9: #{unet_up.3} parent=5 // pred_check
      _
    $region10: #{unet_up.3} parent=5 // pred_check_branch
      %144 = sbr.rel (%p141) target = $region12
    $region11: #{unet_up.3} parent=5 // pred_region
      %s145 = ssub.s32 %s9, 1
    $region12: #{unet_up.3} parent=5 // pred_fallthru
      _
    %p146 = scmp.lt.s32.totalorder %s9, 2
    // Predicated region
    $region13: #{unet_up.3} parent=5 // pred_check
      %p147 = pneg %p146
    $region14: #{unet_up.3} parent=5 // pred_check_branch
      %149 = sbr.rel (%p147) target = $region16
    $region15: #{unet_up.3} parent=5 // pred_region
      // Predicated region
      $region17: #{unet_up.3} parent=15 // pred_check
        %p150 = pneg %p43
      $region18: #{unet_up.3} parent=15 // pred_check_branch
        %152 = sbr.rel (%p150) target = $region20
      $region19: #{unet_up.3} parent=15 // pred_region
        %s153 = smul.u32 8, %s17
        %p154 = scmp.lt.s32.totalorder %s16, 1
        %s155 = scalar_select %p154, %s16, 1
        %p156 = scmp.lt.s32.totalorder %s153, 7
        %s157 = scalar_select %p156, %s153, 7
        %s158 = smul.addr %s155, 32
        %s159 = sadd.s32 %s157, %s158
        %s160 = smul.addr %s159, 4
        %s161 = scalar_lea.vmem %s0, %s160
        %s162 = smul.u32 8, %s17
      $region20: #{unet_up.3} parent=15 // pred_fallthru
        _
      // Predicated region
      $region21: #{unet_up.3} parent=15 // pred_check
        %p163 = pneg %p69
      $region22: #{unet_up.3} parent=15 // pred_check_branch
        %165 = sbr.rel (%p163) target = $region24
      $region23: #{unet_up.3} parent=15 // pred_region
        %p166 = scmp.lt.s32.totalorder %s16, 1
        %s167 = scalar_select %p166, %s16, 1
        %s168 = smul.addr %s167, 2
        %s169 = scalar_lea.vmem %s1, %s168
      $region24: #{unet_up.3} parent=15 // pred_fallthru
        _
      // Predicated region
      $region25: #{unet_up.3} parent=15 // pred_check
        %p170 = pneg %p97
      $region26: #{unet_up.3} parent=15 // pred_check_branch
        %172 = sbr.rel (%p170) target = $region28
      $region27: #{unet_up.3} parent=15 // pred_region
        %s173 = smul.u32 8, %s17
        %p174 = scmp.lt.s32.totalorder %s16, 1
        %s175 = scalar_select %p174, %s16, 1
        %p176 = scmp.lt.s32.totalorder %s173, 7
        %s177 = scalar_select %p176, %s173, 7
        %s178 = smul.addr %s175, 32
        %s179 = sadd.s32 %s177, %s178
        %s180 = smul.addr %s179, 8
        %s181 = scalar_lea.vmem %s2, %s180
        %s182 = smul.u32 8, %s17
      $region28: #{unet_up.3} parent=15 // pred_fallthru
        _
    $region16: #{unet_up.3} parent=5 // pred_fallthru
      _
    %p183 = scmp.le.s32.totalorder 1, %s9
    %p184 = scmp.lt.s32.totalorder %s9, 3
    %p185 = pnand %p183, %p184
    %p186 = pneg %p185
    // Predicated region
    $region29: #{unet_up.3} parent=5 // pred_check
      _
    $region30: #{unet_up.3} parent=5 // pred_check_branch
      %188 = sbr.rel (%p185) target = $region32
    $region31: #{unet_up.3} parent=5 // pred_region
      %s189 = ssub.s32 %s9, 1
      %s190 = smul.u32 8, %s19
      %p191 = scmp.lt.s32.totalorder %s18, 1
      %s192 = scalar_select %p191, %s18, 1
      %p193 = scmp.lt.s32.totalorder %s190, 7
      %s194 = scalar_select %p193, %s190, 7
      %s195 = smul.addr %s192, 32
      %s196 = sadd.s32 %s194, %s195
      %s197 = smul.addr %s196, 4
      %s198 = scalar_lea.vmem %s0, %s197
      %p199 = pneg %p49
      %p200 = pneg %p46
      %p201 = scmp.lt.s32.totalorder %s18, 1
      %s202 = scalar_select %p201, %s18, 1
      %s203 = smul.addr %s202, 2
      %s204 = scalar_lea.vmem %s1, %s203
      %p205 = pneg %p75
      %p206 = pneg %p72
      %s207 = smul.u32 8, %s19
      %p208 = scmp.lt.s32.totalorder %s18, 1
      %s209 = scalar_select %p208, %s18, 1
      %p210 = scmp.lt.s32.totalorder %s207, 7
      %s211 = scalar_select %p210, %s207, 7
      %s212 = smul.addr %s209, 32
      %s213 = sadd.s32 %s211, %s212
      %s214 = smul.addr %s213, 8
      %s215 = scalar_lea.vmem %s2, %s214
      %p216 = pneg %p103
      %p217 = pneg %p100
      %p218 = pneg %p131
      %p219 = pneg %p128
      %s220 = smul.u32 8, %s19
      %p221 = scmp.lt.s32.totalorder %s18, 1
      %s222 = scalar_select %p221, %s18, 1
      %p223 = scmp.lt.s32.totalorder %s220, 7
      %s224 = scalar_select %p223, %s220, 7
      %s225 = smul.addr %s222, 32
      %s226 = sadd.s32 %s224, %s225
      %s227 = smul.addr %s226, 8
      %s228 = scalar_lea.vmem %s3, %s227
      %s229 = smul.u32 8, %s19
      %p230 = scmp.lt.s32.totalorder %s18, 1
      %s231 = scalar_select %p230, %s18, 1
      %p232 = scmp.lt.s32.totalorder %s229, 7
      %s233 = scalar_select %p232, %s229, 7
      %s234 = smul.addr %s231, 32
      %s235 = sadd.s32 %s233, %s234
      %s236 = smul.addr %s235, 4
      %s237 = scalar_lea.vmem %s0, %s236
      %s238 = smul.u32 8, %s19
      %p239 = scmp.lt.s32.totalorder %s18, 1
      %s240 = scalar_select %p239, %s18, 1
      %s241 = smul.addr %s240, 2
      %s242 = scalar_lea.vmem %s1, %s241
      %s243 = smul.u32 8, %s19
      %p244 = scmp.lt.s32.totalorder %s18, 1
      %s245 = scalar_select %p244, %s18, 1
      %p246 = scmp.lt.s32.totalorder %s243, 7
      %s247 = scalar_select %p246, %s243, 7
      %s248 = smul.addr %s245, 32
      %s249 = sadd.s32 %s247, %s248
      %s250 = smul.addr %s249, 8
      %s251 = scalar_lea.vmem %s2, %s250
      %s252 = smul.u32 8, %s19
      %s253 = smul.u32 8, %s19
      %p254 = scmp.lt.s32.totalorder %s18, 1
      %s255 = scalar_select %p254, %s18, 1
      %p256 = scmp.lt.s32.totalorder %s253, 7
      %s257 = scalar_select %p256, %s253, 7
      %s258 = smul.addr %s255, 32
      %s259 = sadd.s32 %s257, %s258
      %s260 = smul.addr %s259, 8
      %s261 = scalar_lea.vmem %s3, %s260
      %s262 = smul.u32 8, %s19
      %v263 = vld [vmem:[%s242] sm:$0x1]
      %v264 = vmul.f32 %v263, 0.00390625
      %v265 = vld [vmem:[%s242 + $0x1] sm:$0x1]
      %v266 = vmul.f32 %v265, 0.00390625
      %v267 = vmul.f32 %v264, %v264
      %v268 = vsub.f32 %v266, %v267
      %v269 = vmax.f32 %v268, 0.0
      %v270 = vadd.f32 %v269, 1e-05
      %v271 = vrsqrt.pop %v270
      %v272 = vmul.f32 %v271, %v270
      %v273 = vmul.f32 %v272, %v271
      %v274 = vmul.f32 0.5, %v273
      %v275 = vsub.f32 1.5, %v274
      %v276 = vmul.f32 %v271, %v275
      %vm277 = vweird.f32 %v270
      %vm278 = vweird.f32 %v271
      %vm279 = vmor %vm277, %vm278
      %v280 = vsel %vm279, %v271, %v276
      %v281 = vld [vmem:[%s237] sm:$0xf]
      %v282 = vld [vmem:[%s237 + $0x4] sm:$0xf]
      %v283 = vld [vmem:[%s237 + $0x8] sm:$0xf]
      %v284 = vld [vmem:[%s237 + $0xc] sm:$0xf]
      %v285 = vld [vmem:[%s237 + $0x10] sm:$0xf]
      %v286 = vld [vmem:[%s237 + $0x14] sm:$0xf]
      %v287 = vld [vmem:[%s237 + $0x18] sm:$0xf]
      %v288 = vld [vmem:[%s237 + $0x1c] sm:$0xf]
      %v289 = vunpack.c.l.bf16 %v281
      %v290 = vunpack.c.l.bf16 %v282
      %v291 = vunpack.c.l.bf16 %v283
      %v292 = vunpack.c.l.bf16 %v284
      %v293 = vunpack.c.l.bf16 %v285
      %v294 = vunpack.c.l.bf16 %v286
      %v295 = vunpack.c.l.bf16 %v287
      %v296 = vunpack.c.l.bf16 %v288
      %v297 = vperm.slane %v264, 0
      %v298 = vsub.f32 %v289, %v297
      %v299 = vsub.f32 %v290, %v297
      %v300 = vsub.f32 %v291, %v297
      %v301 = vsub.f32 %v292, %v297
      %v302 = vsub.f32 %v293, %v297
      %v303 = vsub.f32 %v294, %v297
      %v304 = vsub.f32 %v295, %v297
      %v305 = vsub.f32 %v296, %v297
      %v306 = vperm.slane %v280, 0
      %v307 = vmul.f32 %v298, %v306
      %v308 = vmul.f32 %v299, %v306
      %v309 = vmul.f32 %v300, %v306
      %v310 = vmul.f32 %v301, %v306
      %v311 = vmul.f32 %v302, %v306
      %v312 = vmul.f32 %v303, %v306
      %v313 = vmul.f32 %v304, %v306
      %v314 = vmul.f32 %v305, %v306
      %v315 = vmax.f32 %v307, 0.0
      %v316 = vmax.f32 %v308, 0.0
      %v317 = vmax.f32 %v309, 0.0
      %v318 = vmax.f32 %v310, 0.0
      %v319 = vmax.f32 %v311, 0.0
      %v320 = vmax.f32 %v312, 0.0
      %v321 = vmax.f32 %v313, 0.0
      %v322 = vmax.f32 %v314, 0.0
      %vm323 = vcmask 64512
      %324 = vst.msk [vmem:[%s261] sm:$0xff] %vm323, %v315
      %325 = vst.msk [vmem:[%s261 + $0x8] sm:$0xff] %vm323, %v316
      %326 = vst.msk [vmem:[%s261 + $0x10] sm:$0xff] %vm323, %v317
      %327 = vst.msk [vmem:[%s261 + $0x18] sm:$0xff] %vm323, %v318
      %328 = vst.msk [vmem:[%s261 + $0x20] sm:$0xff] %vm323, %v319
      %329 = vst.msk [vmem:[%s261 + $0x28] sm:$0xff] %vm323, %v320
      %330 = vst.msk [vmem:[%s261 + $0x30] sm:$0xff] %vm323, %v321
      %331 = vst.msk [vmem:[%s261 + $0x38] sm:$0xff] %vm323, %v322
      %v332 = vld [vmem:[%s251] sm:$0xff]
      %v333 = vld [vmem:[%s251 + $0x8] sm:$0xff]
      %v334 = vld [vmem:[%s251 + $0x10] sm:$0xff]
      %v335 = vld [vmem:[%s251 + $0x18] sm:$0xff]
      %v336 = vld [vmem:[%s251 + $0x20] sm:$0xff]
      %v337 = vld [vmem:[%s251 + $0x28] sm:$0xff]
      %v338 = vld [vmem:[%s251 + $0x30] sm:$0xff]
      %v339 = vld [vmem:[%s251 + $0x38] sm:$0xff]
      %348 = vrot.lane.b32.xlu0 %v332, 8
      %v349 = vpop.permute.xlu0 %348
      %350 = vrot.lane.b32.xlu0 %v333, 8
      %v351 = vpop.permute.xlu0 %350
      %352 = vrot.lane.b32.xlu0 %v334, 8
      %v353 = vpop.permute.xlu0 %352
      %354 = vrot.lane.b32.xlu0 %v335, 8
      %v355 = vpop.permute.xlu0 %354
      %356 = vrot.lane.b32.xlu0 %v336, 8
      %v357 = vpop.permute.xlu0 %356
      %358 = vrot.lane.b32.xlu0 %v337, 8
      %v359 = vpop.permute.xlu0 %358
      %360 = vrot.lane.b32.xlu0 %v338, 8
      %v361 = vpop.permute.xlu0 %360
      %362 = vrot.lane.b32.xlu0 %v339, 8
      %v363 = vpop.permute.xlu0 %362
      %vm372 = vcmask 130112
      %373 = vst.msk [vmem:[%s261] sm:$0xff] %vm372, %v349
      %374 = vst.msk [vmem:[%s261 + $0x8] sm:$0xff] %vm372, %v351
      %375 = vst.msk [vmem:[%s261 + $0x10] sm:$0xff] %vm372, %v353
      %376 = vst.msk [vmem:[%s261 + $0x18] sm:$0xff] %vm372, %v355
      %377 = vst.msk [vmem:[%s261 + $0x20] sm:$0xff] %vm372, %v357
      %378 = vst.msk [vmem:[%s261 + $0x28] sm:$0xff] %vm372, %v359
      %379 = vst.msk [vmem:[%s261 + $0x30] sm:$0xff] %vm372, %v361
      %380 = vst.msk [vmem:[%s261 + $0x38] sm:$0xff] %vm372, %v363
      %s381 = scalar_lea.vmem %s237, 32
      %v382 = vld [vmem:[%s381] sm:$0xf]
      %v383 = vld [vmem:[%s381 + $0x4] sm:$0xf]
      %v384 = vld [vmem:[%s381 + $0x8] sm:$0xf]
      %v385 = vld [vmem:[%s381 + $0xc] sm:$0xf]
      %v386 = vld [vmem:[%s381 + $0x10] sm:$0xf]
      %v387 = vld [vmem:[%s381 + $0x14] sm:$0xf]
      %v388 = vld [vmem:[%s381 + $0x18] sm:$0xf]
      %v389 = vld [vmem:[%s381 + $0x1c] sm:$0xf]
      %v390 = vunpack.c.l.bf16 %v382
      %v391 = vunpack.c.l.bf16 %v383
      %v392 = vunpack.c.l.bf16 %v384
      %v393 = vunpack.c.l.bf16 %v385
      %v394 = vunpack.c.l.bf16 %v386
      %v395 = vunpack.c.l.bf16 %v387
      %v396 = vunpack.c.l.bf16 %v388
      %v397 = vunpack.c.l.bf16 %v389
      %v398 = vsub.f32 %v390, %v297
      %v399 = vsub.f32 %v391, %v297
      %v400 = vsub.f32 %v392, %v297
      %v401 = vsub.f32 %v393, %v297
      %v402 = vsub.f32 %v394, %v297
      %v403 = vsub.f32 %v395, %v297
      %v404 = vsub.f32 %v396, %v297
      %v405 = vsub.f32 %v397, %v297
      %v406 = vmul.f32 %v398, %v306
      %v407 = vmul.f32 %v399, %v306
      %v408 = vmul.f32 %v400, %v306
      %v409 = vmul.f32 %v401, %v306
      %v410 = vmul.f32 %v402, %v306
      %v411 = vmul.f32 %v403, %v306
      %v412 = vmul.f32 %v404, %v306
      %v413 = vmul.f32 %v405, %v306
      %v414 = vmax.f32 %v406, 0.0
      %v415 = vmax.f32 %v407, 0.0
      %v416 = vmax.f32 %v408, 0.0
      %v417 = vmax.f32 %v409, 0.0
      %v418 = vmax.f32 %v410, 0.0
      %v419 = vmax.f32 %v411, 0.0
      %v420 = vmax.f32 %v412, 0.0
      %v421 = vmax.f32 %v413, 0.0
      %s422 = scalar_lea.vmem %s261, 64
      %423 = vst.msk [vmem:[%s422] sm:$0xff] %vm323, %v414
      %424 = vst.msk [vmem:[%s422 + $0x8] sm:$0xff] %vm323, %v415
      %425 = vst.msk [vmem:[%s422 + $0x10] sm:$0xff] %vm323, %v416
      %426 = vst.msk [vmem:[%s422 + $0x18] sm:$0xff] %vm323, %v417
      %427 = vst.msk [vmem:[%s422 + $0x20] sm:$0xff] %vm323, %v418
      %428 = vst.msk [vmem:[%s422 + $0x28] sm:$0xff] %vm323, %v419
      %429 = vst.msk [vmem:[%s422 + $0x30] sm:$0xff] %vm323, %v420
      %430 = vst.msk [vmem:[%s422 + $0x38] sm:$0xff] %vm323, %v421
      %s431 = scalar_lea.vmem %s251, 64
      %v432 = vld [vmem:[%s431] sm:$0xff]
      %v433 = vld [vmem:[%s431 + $0x8] sm:$0xff]
      %v434 = vld [vmem:[%s431 + $0x10] sm:$0xff]
      %v435 = vld [vmem:[%s431 + $0x18] sm:$0xff]
      %v436 = vld [vmem:[%s431 + $0x20] sm:$0xff]
      %v437 = vld [vmem:[%s431 + $0x28] sm:$0xff]
      %v438 = vld [vmem:[%s431 + $0x30] sm:$0xff]
      %v439 = vld [vmem:[%s431 + $0x38] sm:$0xff]
      %448 = vrot.lane.b32.xlu0 %v432, 8
      %v449 = vpop.permute.xlu0 %448
      %450 = vrot.lane.b32.xlu0 %v433, 8
      %v451 = vpop.permute.xlu0 %450
      %452 = vrot.lane.b32.xlu0 %v434, 8
      %v453 = vpop.permute.xlu0 %452
      %454 = vrot.lane.b32.xlu0 %v435, 8
      %v455 = vpop.permute.xlu0 %454
      %456 = vrot.lane.b32.xlu0 %v436, 8
      %v457 = vpop.permute.xlu0 %456
      %458 = vrot.lane.b32.xlu0 %v437, 8
      %v459 = vpop.permute.xlu0 %458
      %460 = vrot.lane.b32.xlu0 %v438, 8
      %v461 = vpop.permute.xlu0 %460
      %462 = vrot.lane.b32.xlu0 %v439, 8
      %v463 = vpop.permute.xlu0 %462
      %472 = vst.msk [vmem:[%s422] sm:$0xff] %vm372, %v449
      %473 = vst.msk [vmem:[%s422 + $0x8] sm:$0xff] %vm372, %v451
      %474 = vst.msk [vmem:[%s422 + $0x10] sm:$0xff] %vm372, %v453
      %475 = vst.msk [vmem:[%s422 + $0x18] sm:$0xff] %vm372, %v455
      %476 = vst.msk [vmem:[%s422 + $0x20] sm:$0xff] %vm372, %v457
      %477 = vst.msk [vmem:[%s422 + $0x28] sm:$0xff] %vm372, %v459
      %478 = vst.msk [vmem:[%s422 + $0x30] sm:$0xff] %vm372, %v461
      %479 = vst.msk [vmem:[%s422 + $0x38] sm:$0xff] %vm372, %v463
      %s480 = scalar_lea.vmem %s237, 64
      %v481 = vld [vmem:[%s480] sm:$0xf]
      %v482 = vld [vmem:[%s480 + $0x4] sm:$0xf]
      %v483 = vld [vmem:[%s480 + $0x8] sm:$0xf]
      %v484 = vld [vmem:[%s480 + $0xc] sm:$0xf]
      %v485 = vld [vmem:[%s480 + $0x10] sm:$0xf]
      %v486 = vld [vmem:[%s480 + $0x14] sm:$0xf]
      %v487 = vld [vmem:[%s480 + $0x18] sm:$0xf]
      %v488 = vld [vmem:[%s480 + $0x1c] sm:$0xf]
      %v489 = vunpack.c.l.bf16 %v481
      %v490 = vunpack.c.l.bf16 %v482
      %v491 = vunpack.c.l.bf16 %v483
      %v492 = vunpack.c.l.bf16 %v484
      %v493 = vunpack.c.l.bf16 %v485
      %v494 = vunpack.c.l.bf16 %v486
      %v495 = vunpack.c.l.bf16 %v487
      %v496 = vunpack.c.l.bf16 %v488
      %v497 = vsub.f32 %v489, %v297
      %v498 = vsub.f32 %v490, %v297
      %v499 = vsub.f32 %v491, %v297
      %v500 = vsub.f32 %v492, %v297
      %v501 = vsub.f32 %v493, %v297
      %v502 = vsub.f32 %v494, %v297
      %v503 = vsub.f32 %v495, %v297
      %v504 = vsub.f32 %v496, %v297
      %v505 = vmul.f32 %v497, %v306
      %v506 = vmul.f32 %v498, %v306
      %v507 = vmul.f32 %v499, %v306
      %v508 = vmul.f32 %v500, %v306
      %v509 = vmul.f32 %v501, %v306
      %v510 = vmul.f32 %v502, %v306
      %v511 = vmul.f32 %v503, %v306
      %v512 = vmul.f32 %v504, %v306
      %v513 = vmax.f32 %v505, 0.0
      %v514 = vmax.f32 %v506, 0.0
      %v515 = vmax.f32 %v507, 0.0
      %v516 = vmax.f32 %v508, 0.0
      %v517 = vmax.f32 %v509, 0.0
      %v518 = vmax.f32 %v510, 0.0
      %v519 = vmax.f32 %v511, 0.0
      %v520 = vmax.f32 %v512, 0.0
      %s521 = scalar_lea.vmem %s261, 128
      %522 = vst.msk [vmem:[%s521] sm:$0xff] %vm323, %v513
      %523 = vst.msk [vmem:[%s521 + $0x8] sm:$0xff] %vm323, %v514
      %524 = vst.msk [vmem:[%s521 + $0x10] sm:$0xff] %vm323, %v515
      %525 = vst.msk [vmem:[%s521 + $0x18] sm:$0xff] %vm323, %v516
      %526 = vst.msk [vmem:[%s521 + $0x20] sm:$0xff] %vm323, %v517
      %527 = vst.msk [vmem:[%s521 + $0x28] sm:$0xff] %vm323, %v518
      %528 = vst.msk [vmem:[%s521 + $0x30] sm:$0xff] %vm323, %v519
      %529 = vst.msk [vmem:[%s521 + $0x38] sm:$0xff] %vm323, %v520
      %s530 = scalar_lea.vmem %s251, 128
      %v531 = vld [vmem:[%s530] sm:$0xff]
      %v532 = vld [vmem:[%s530 + $0x8] sm:$0xff]
      %v533 = vld [vmem:[%s530 + $0x10] sm:$0xff]
      %v534 = vld [vmem:[%s530 + $0x18] sm:$0xff]
      %v535 = vld [vmem:[%s530 + $0x20] sm:$0xff]
      %v536 = vld [vmem:[%s530 + $0x28] sm:$0xff]
      %v537 = vld [vmem:[%s530 + $0x30] sm:$0xff]
      %v538 = vld [vmem:[%s530 + $0x38] sm:$0xff]
      %547 = vrot.lane.b32.xlu0 %v531, 8
      %v548 = vpop.permute.xlu0 %547
      %549 = vrot.lane.b32.xlu0 %v532, 8
      %v550 = vpop.permute.xlu0 %549
      %551 = vrot.lane.b32.xlu0 %v533, 8
      %v552 = vpop.permute.xlu0 %551
      %553 = vrot.lane.b32.xlu0 %v534, 8
      %v554 = vpop.permute.xlu0 %553
      %555 = vrot.lane.b32.xlu0 %v535, 8
      %v556 = vpop.permute.xlu0 %555
      %557 = vrot.lane.b32.xlu0 %v536, 8
      %v558 = vpop.permute.xlu0 %557
      %559 = vrot.lane.b32.xlu0 %v537, 8
      %v560 = vpop.permute.xlu0 %559
      %561 = vrot.lane.b32.xlu0 %v538, 8
      %v562 = vpop.permute.xlu0 %561
      %571 = vst.msk [vmem:[%s521] sm:$0xff] %vm372, %v548
      %572 = vst.msk [vmem:[%s521 + $0x8] sm:$0xff] %vm372, %v550
      %573 = vst.msk [vmem:[%s521 + $0x10] sm:$0xff] %vm372, %v552
      %574 = vst.msk [vmem:[%s521 + $0x18] sm:$0xff] %vm372, %v554
      %575 = vst.msk [vmem:[%s521 + $0x20] sm:$0xff] %vm372, %v556
      %576 = vst.msk [vmem:[%s521 + $0x28] sm:$0xff] %vm372, %v558
      %577 = vst.msk [vmem:[%s521 + $0x30] sm:$0xff] %vm372, %v560
      %578 = vst.msk [vmem:[%s521 + $0x38] sm:$0xff] %vm372, %v562
      %s579 = scalar_lea.vmem %s237, 96
      %v580 = vld [vmem:[%s579] sm:$0xf]
      %v581 = vld [vmem:[%s579 + $0x4] sm:$0xf]
      %v582 = vld [vmem:[%s579 + $0x8] sm:$0xf]
      %v583 = vld [vmem:[%s579 + $0xc] sm:$0xf]
      %v584 = vld [vmem:[%s579 + $0x10] sm:$0xf]
      %v585 = vld [vmem:[%s579 + $0x14] sm:$0xf]
      %v586 = vld [vmem:[%s579 + $0x18] sm:$0xf]
      %v587 = vld [vmem:[%s579 + $0x1c] sm:$0xf]
      %v588 = vunpack.c.l.bf16 %v580
      %v589 = vunpack.c.l.bf16 %v581
      %v590 = vunpack.c.l.bf16 %v582
      %v591 = vunpack.c.l.bf16 %v583
      %v592 = vunpack.c.l.bf16 %v584
      %v593 = vunpack.c.l.bf16 %v585
      %v594 = vunpack.c.l.bf16 %v586
      %v595 = vunpack.c.l.bf16 %v587
      %v596 = vsub.f32 %v588, %v297
      %v597 = vsub.f32 %v589, %v297
      %v598 = vsub.f32 %v590, %v297
      %v599 = vsub.f32 %v591, %v297
      %v600 = vsub.f32 %v592, %v297
      %v601 = vsub.f32 %v593, %v297
      %v602 = vsub.f32 %v594, %v297
      %v603 = vsub.f32 %v595, %v297
      %v604 = vmul.f32 %v596, %v306
      %v605 = vmul.f32 %v597, %v306
      %v606 = vmul.f32 %v598, %v306
      %v607 = vmul.f32 %v599, %v306
      %v608 = vmul.f32 %v600, %v306
      %v609 = vmul.f32 %v601, %v306
      %v610 = vmul.f32 %v602, %v306
      %v611 = vmul.f32 %v603, %v306
      %v612 = vmax.f32 %v604, 0.0
      %v613 = vmax.f32 %v605, 0.0
      %v614 = vmax.f32 %v606, 0.0
      %v615 = vmax.f32 %v607, 0.0
      %v616 = vmax.f32 %v608, 0.0
      %v617 = vmax.f32 %v609, 0.0
      %v618 = vmax.f32 %v610, 0.0
      %v619 = vmax.f32 %v611, 0.0
      %s620 = scalar_lea.vmem %s261, 192
      %621 = vst.msk [vmem:[%s620] sm:$0xff] %vm323, %v612
      %622 = vst.msk [vmem:[%s620 + $0x8] sm:$0xff] %vm323, %v613
      %623 = vst.msk [vmem:[%s620 + $0x10] sm:$0xff] %vm323, %v614
      %624 = vst.msk [vmem:[%s620 + $0x18] sm:$0xff] %vm323, %v615
      %625 = vst.msk [vmem:[%s620 + $0x20] sm:$0xff] %vm323, %v616
      %626 = vst.msk [vmem:[%s620 + $0x28] sm:$0xff] %vm323, %v617
      %627 = vst.msk [vmem:[%s620 + $0x30] sm:$0xff] %vm323, %v618
      %628 = vst.msk [vmem:[%s620 + $0x38] sm:$0xff] %vm323, %v619
      %s629 = scalar_lea.vmem %s251, 192
      %v630 = vld [vmem:[%s629] sm:$0xff]
      %v631 = vld [vmem:[%s629 + $0x8] sm:$0xff]
      %v632 = vld [vmem:[%s629 + $0x10] sm:$0xff]
      %v633 = vld [vmem:[%s629 + $0x18] sm:$0xff]
      %v634 = vld [vmem:[%s629 + $0x20] sm:$0xff]
      %v635 = vld [vmem:[%s629 + $0x28] sm:$0xff]
      %v636 = vld [vmem:[%s629 + $0x30] sm:$0xff]
      %v637 = vld [vmem:[%s629 + $0x38] sm:$0xff]
      %646 = vrot.lane.b32.xlu0 %v630, 8
      %v647 = vpop.permute.xlu0 %646
      %648 = vrot.lane.b32.xlu0 %v631, 8
      %v649 = vpop.permute.xlu0 %648
      %650 = vrot.lane.b32.xlu0 %v632, 8
      %v651 = vpop.permute.xlu0 %650
      %652 = vrot.lane.b32.xlu0 %v633, 8
      %v653 = vpop.permute.xlu0 %652
      %654 = vrot.lane.b32.xlu0 %v634, 8
      %v655 = vpop.permute.xlu0 %654
      %656 = vrot.lane.b32.xlu0 %v635, 8
      %v657 = vpop.permute.xlu0 %656
      %658 = vrot.lane.b32.xlu0 %v636, 8
      %v659 = vpop.permute.xlu0 %658
      %660 = vrot.lane.b32.xlu0 %v637, 8
      %v661 = vpop.permute.xlu0 %660
      %670 = vst.msk [vmem:[%s620] sm:$0xff] %vm372, %v647
      %671 = vst.msk [vmem:[%s620 + $0x8] sm:$0xff] %vm372, %v649
      %672 = vst.msk [vmem:[%s620 + $0x10] sm:$0xff] %vm372, %v651
      %673 = vst.msk [vmem:[%s620 + $0x18] sm:$0xff] %vm372, %v653
      %674 = vst.msk [vmem:[%s620 + $0x20] sm:$0xff] %vm372, %v655
      %675 = vst.msk [vmem:[%s620 + $0x28] sm:$0xff] %vm372, %v657
      %676 = vst.msk [vmem:[%s620 + $0x30] sm:$0xff] %vm372, %v659
      %677 = vst.msk [vmem:[%s620 + $0x38] sm:$0xff] %vm372, %v661
      %s678 = smul.u32 8, %s19
      %p679 = scmp.lt.s32.totalorder %s18, 1
      %s680 = scalar_select %p679, %s18, 1
      %p681 = scmp.lt.s32.totalorder %s678, 7
      %s682 = scalar_select %p681, %s678, 7
      %s683 = smul.addr %s680, 32
      %s684 = sadd.s32 %s682, %s683
      %s685 = smul.addr %s684, 8
      %s686 = scalar_lea.vmem %s3, %s685
      // Predicated region
      $region33: #{unet_up.3} parent=31 // pred_check
        %p687 = pneg %p128
      $region34: #{unet_up.3} parent=31 // pred_check_branch
        %689 = sbr.rel (%p687) target = $region36
      $region35: #{unet_up.3} parent=31 // pred_region
        %s690 = smul.u32 8, %s19
      $region36: #{unet_up.3} parent=31 // pred_fallthru
        _
    $region32: #{unet_up.3} parent=5 // pred_fallthru
      _
    %p691 = scmp.le.s32.totalorder 2, %s9
    // Predicated region
    $region37: #{unet_up.3} parent=5 // pred_check
      %p692 = pneg %p691
    $region38: #{unet_up.3} parent=5 // pred_check_branch
      %694 = sbr.rel (%p692) target = $region40
    $region39: #{unet_up.3} parent=5 // pred_region
      %s695 = ssub.s32 %s9, 2
      // Predicated region
      $region41: #{unet_up.3} parent=39 // pred_check
        %p696 = pneg %p134
      $region42: #{unet_up.3} parent=39 // pred_check_branch
        %698 = sbr.rel (%p696) target = $region44
      $region43: #{unet_up.3} parent=39 // pred_region
        %s699 = smul.u32 8, %s21
        %p700 = scmp.lt.s32.totalorder %s20, 1
        %s701 = scalar_select %p700, %s20, 1
        %p702 = scmp.lt.s32.totalorder %s699, 7
        %s703 = scalar_select %p702, %s699, 7
        %s704 = smul.addr %s701, 32
        %s705 = sadd.s32 %s703, %s704
        %s706 = smul.addr %s705, 8
        %s707 = scalar_lea.vmem %s3, %s706
      $region44: #{unet_up.3} parent=39 // pred_fallthru
        _
    $region40: #{unet_up.3} parent=5 // pred_fallthru
      _
  $region6: #{unet_up.3} parent=0 // loop_footer
    %s13 = sadd.s32 1, %s9
  $region7: #{unet_up.3} parent=0 // loop_footer_branch
    %8 = sbr.rel target = $region3
  $region8: #{unet_up.3} parent=0 // loop_exit
    _

// kernel: unet_up.2
$region0: #{unet_up.2}
  #allocation0 [shape = 'u32[]', space=smem, size = 0x4, offset = 0x4, fixed_abs, tag = 'smem constant byte address 0x4 - core index']
  #allocation1 [shape = 'u32[72,128]{1,0:T(1,128)}', space=vmem, size = 0x9000, scoped, tag = 'internal scratch']
  %s0 = inlined_call_operand.vmem [shape: bf16[2,1,10,10,4], index: 0, kind: input, shape index: {}]
  %s1 = inlined_call_operand.vmem [shape: bf16[4,16,8], index: 1, kind: input, shape index: {}]
  %s2 = inlined_call_operand.vmem [shape: bf16[2,2,2,8,8,8], index: 2, kind: output, shape index: {0}]
  %s3 = inlined_call_operand.vmem [shape: f32[2,2,8], index: 3, kind: output, shape index: {1}]
  %4 = xla_tuple %s2, %s3
  %s5 = sld [smem:[#allocation0]]
  $region53: #{unet_up.2} parent=0
    _
  %s7 = ssub.s32 1, %s5
  %s8 = scalar_select 0, %s7, %s5
  loop: start=0, step=1, limit=4
  $region2: #{unet_up.2} parent=0 // loop_pre_header
    _
  $region3: #{unet_up.2} parent=0 // loop_header
    %s10 = sphi 0, %s14
    %p11 = scmp.ge.s32.totalorder %s10, 4
    %s17 = sphi 0, %s29
    %s18 = sphi 0, %s25
    %s19 = sphi 0, %s17
    %s20 = sphi 0, %s18
    %s21 = sphi 0, %s19
    %s22 = sphi 0, %s20
    %s34 = sphi 0, %s36
    %s37 = sphi 0, %s34
    %s38 = sphi 0, %s37
    %s54 = sphi 0, %s38
    %s58 = sphi 0, %s58
    %s60 = sphi 0, %s58
    %s61 = sphi 0, %s60
    %s75 = sphi 0, %s61
    %s83 = sphi 0, %s85
    %s86 = sphi 0, %s83
    %s87 = sphi 0, %s86
    %s103 = sphi 0, %s87
    %s109 = sphi 0, %s111
    %s112 = sphi 0, %s109
    %s113 = sphi 0, %s112
    %s129 = sphi 0, %s113
  $region4: #{unet_up.2} parent=0 // loop_header_branch
    %13 = sbr.rel (%p11) target = $region8
  $region5: #{unet_up.2} parent=0 // loop_body
    %s15 = ssub.s32 %s10, 1
    %s16 = ssub.s32 %s10, 2
    %s23 = sadd.s32 1, %s18
    %p24 = scmp.ge.s32.totalorder %s23, 1
    %s25 = scalar_select %p24, 0, %s23
    %s26 = sadd.s32 1, %s17
    %s27 = scalar_select %p24, %s26, %s17
    %p28 = scmp.ge.s32.totalorder %s27, 2
    %s29 = scalar_select %p28, 0, %s27
    %s30 = ssub.s32 %s17, %s29
    %s31 = ssub.s32 %s18, %s25
    %s32 = sor.u32 %s30, %s31
    %p33 = scmp.eq.s32.totalorder %s32, 0
    %s35 = sadd.s32 %s34, 1
    %s36 = scalar_select %p33, %s34, %s35
    %p39 = pneg %p33
    %p40 = scmp.eq.s32.totalorder %s10, 1
    %p41 = por %p39, %p40
    %p42 = scmp.ne.s32.totalorder %s34, %s37
    %p43 = scmp.eq.s32.totalorder %s10, 0
    %p44 = por %p42, %p43
    %p45 = scmp.ne.s32.totalorder %s34, %s37
    %p46 = scmp.eq.s32.totalorder %s15, 1
    %p47 = por %p45, %p46
    %p48 = scmp.ne.s32.totalorder %s37, %s38
    %p49 = scmp.eq.s32.totalorder %s15, 0
    %p50 = por %p48, %p49
    %p51 = scmp.ne.s32.totalorder %s37, %s38
    %p52 = scmp.eq.s32.totalorder %s16, 1
    %p53 = por %p51, %p52
    %p55 = scmp.ne.s32.totalorder %s38, %s54
    %p56 = scmp.eq.s32.totalorder %s16, 0
    %p57 = por %p55, %p56
    %s59 = sadd.s32 %s58, 1
    %p62 = scmp.eq.s32.totalorder %s10, 1
    %p63 = scmp.ne.s32.totalorder %s58, %s60
    %p64 = scmp.eq.s32.totalorder %s10, 0
    %p65 = por %p63, %p64
    %p66 = scmp.ne.s32.totalorder %s58, %s60
    %p67 = scmp.eq.s32.totalorder %s15, 1
    %p68 = por %p66, %p67
    %p69 = scmp.ne.s32.totalorder %s60, %s61
    %p70 = scmp.eq.s32.totalorder %s15, 0
    %p71 = por %p69, %p70
    %p72 = scmp.ne.s32.totalorder %s60, %s61
    %p73 = scmp.eq.s32.totalorder %s16, 1
    %p74 = por %p72, %p73
    %p76 = scmp.ne.s32.totalorder %s61, %s75
    %p77 = scmp.eq.s32.totalorder %s16, 0
    %p78 = por %p76, %p77
    %s79 = ssub.s32 %s17, %s29
    %s80 = ssub.s32 %s18, %s25
    %s81 = sor.u32 %s79, %s80
    %p82 = scmp.eq.s32.totalorder %s81, 0
    %s84 = sadd.s32 %s83, 1
    %s85 = scalar_select %p82, %s83, %s84
    %p88 = pneg %p82
    %p89 = scmp.eq.s32.totalorder %s10, 1
    %p90 = por %p88, %p89
    %p91 = scmp.ne.s32.totalorder %s83, %s86
    %p92 = scmp.eq.s32.totalorder %s10, 0
    %p93 = por %p91, %p92
    %p94 = scmp.ne.s32.totalorder %s83, %s86
    %p95 = scmp.eq.s32.totalorder %s15, 1
    %p96 = por %p94, %p95
    %p97 = scmp.ne.s32.totalorder %s86, %s87
    %p98 = scmp.eq.s32.totalorder %s15, 0
    %p99 = por %p97, %p98
    %p100 = scmp.ne.s32.totalorder %s86, %s87
    %p101 = scmp.eq.s32.totalorder %s16, 1
    %p102 = por %p100, %p101
    %p104 = scmp.ne.s32.totalorder %s87, %s103
    %p105 = scmp.eq.s32.totalorder %s16, 0
    %p106 = por %p104, %p105
    %s107 = ssub.s32 %s17, %s29
    %p108 = scmp.eq.s32.totalorder %s107, 0
    %s110 = sadd.s32 %s109, 1
    %s111 = scalar_select %p108, %s109, %s110
    %p114 = pneg %p108
    %p115 = scmp.eq.s32.totalorder %s10, 1
    %p116 = por %p114, %p115
    %p117 = scmp.ne.s32.totalorder %s109, %s112
    %p118 = scmp.eq.s32.totalorder %s10, 0
    %p119 = por %p117, %p118
    %p120 = scmp.ne.s32.totalorder %s109, %s112
    %p121 = scmp.eq.s32.totalorder %s15, 1
    %p122 = por %p120, %p121
    %p123 = scmp.ne.s32.totalorder %s112, %s113
    %p124 = scmp.eq.s32.totalorder %s15, 0
    %p125 = por %p123, %p124
    %p126 = scmp.ne.s32.totalorder %s112, %s113
    %p127 = scmp.eq.s32.totalorder %s16, 1
    %p128 = por %p126, %p127
    %p130 = scmp.ne.s32.totalorder %s113, %s129
    %p131 = scmp.eq.s32.totalorder %s16, 0
    %p132 = por %p130, %p131
    %p133 = scmp.le.s32.totalorder 1, %s10
    %p134 = scmp.lt.s32.totalorder %s10, 3
    %p135 = pnand %p133, %p134
    %p136 = pneg %p135
    // Predicated region
    $region9: #{unet_up.2} parent=5 // pred_check
      _
    $region10: #{unet_up.2} parent=5 // pred_check_branch
      %138 = sbr.rel (%p135) target = $region12
    $region11: #{unet_up.2} parent=5 // pred_region
      %s139 = ssub.s32 %s10, 1
      // Predicated region
      $region13: #{unet_up.2} parent=11 // pred_check
        %p140 = pneg %p71
      $region14: #{unet_up.2} parent=11 // pred_check_branch
        %142 = sbr.rel (%p140) target = $region16
      $region15: #{unet_up.2} parent=11 // pred_region
        _
      $region16: #{unet_up.2} parent=11 // pred_fallthru
        _
    $region12: #{unet_up.2} parent=5 // pred_fallthru
      _
    %p143 = scmp.lt.s32.totalorder %s10, 2
    // Predicated region
    $region17: #{unet_up.2} parent=5 // pred_check
      %p144 = pneg %p143
    $region18: #{unet_up.2} parent=5 // pred_check_branch
      %146 = sbr.rel (%p144) target = $region20
    $region19: #{unet_up.2} parent=5 // pred_region
      // Predicated region
      $region21: #{unet_up.2} parent=19 // pred_check
        %p147 = pneg %p44
      $region22: #{unet_up.2} parent=19 // pred_check_branch
        %149 = sbr.rel (%p147) target = $region24
      $region23: #{unet_up.2} parent=19 // pred_region
        %p150 = scmp.lt.s32.totalorder %s17, 1
        %s151 = scalar_select %p150, %s17, 1
        %p152 = scmp.lt.s32.totalorder %s18, 0
        %s153 = scalar_select %p152, %s18, 0
        %s154 = smul.addr %s153, 20
        %s155 = smul.addr %s151, 20
        %s156 = sadd.s32 %s154, %s155
        %s157 = smul.addr %s156, 4
        %s158 = scalar_lea.vmem %s0, %s157
      $region24: #{unet_up.2} parent=19 // pred_fallthru
        _
    $region20: #{unet_up.2} parent=5 // pred_fallthru
      _
    %p159 = scmp.le.s32.totalorder 1, %s10
    %p160 = scmp.lt.s32.totalorder %s10, 3
    %p161 = pnand %p159, %p160
    %p162 = pneg %p161
    // Predicated region
    $region25: #{unet_up.2} parent=5 // pred_check
      _
    $region26: #{unet_up.2} parent=5 // pred_check_branch
      %164 = sbr.rel (%p161) target = $region28
    $region27: #{unet_up.2} parent=5 // pred_region
      %s165 = ssub.s32 %s10, 1
      %p166 = scmp.lt.s32.totalorder %s19, 1
      %s167 = scalar_select %p166, %s19, 1
      %p168 = scmp.lt.s32.totalorder %s20, 0
      %s169 = scalar_select %p168, %s20, 0
      %s170 = smul.addr %s169, 20
      %s171 = smul.addr %s167, 20
      %s172 = sadd.s32 %s170, %s171
      %s173 = smul.addr %s172, 4
      %s174 = scalar_lea.vmem %s0, %s173
      %p175 = pneg %p50
      %p176 = pneg %p47
      %p177 = pneg %p71
      %p178 = pneg %p68
      %p179 = pneg %p99
      %p180 = pneg %p96
      %s181 = smul.u32 8, %s20
      %p182 = scmp.lt.s32.totalorder %s19, 1
      %s183 = scalar_select %p182, %s19, 1
      %p184 = scmp.lt.s32.totalorder %s181, 7
      %s185 = scalar_select %p184, %s181, 7
      %s186 = smul.addr %s183, 32
      %s187 = sadd.s32 %s185, %s186
      %s188 = smul.addr %s187, 4
      %s189 = scalar_lea.vmem %s2, %s188
      %p190 = pneg %p125
      %p191 = pneg %p122
      %p192 = scmp.lt.s32.totalorder %s19, 1
      %s193 = scalar_select %p192, %s19, 1
      %s194 = smul.addr %s193, 2
      %s195 = scalar_lea.vmem %s3, %s194
      %p196 = scmp.lt.s32.totalorder %s19, 1
      %s197 = scalar_select %p196, %s19, 1
      %p198 = scmp.lt.s32.totalorder %s20, 0
      %s199 = scalar_select %p198, %s20, 0
      %s200 = smul.addr %s199, 20
      %s201 = smul.addr %s197, 20
      %s202 = sadd.s32 %s200, %s201
      %s203 = smul.addr %s202, 4
      %s204 = scalar_lea.vmem %s0, %s203
      %s205 = smul.u32 8, %s20
      %p206 = scmp.lt.s32.totalorder %s19, 1
      %s207 = scalar_select %p206, %s19, 1
      %p208 = scmp.lt.s32.totalorder %s205, 7
      %s209 = scalar_select %p208, %s205, 7
      %s210 = smul.addr %s207, 32
      %s211 = sadd.s32 %s209, %s210
      %s212 = smul.addr %s211, 4
      %s213 = scalar_lea.vmem %s2, %s212
      %s214 = smul.u32 8, %s20
      %p215 = scmp.lt.s32.totalorder %s19, 1
      %s216 = scalar_select %p215, %s19, 1
      %s217 = smul.addr %s216, 2
      %s218 = scalar_lea.vmem %s3, %s217
      %p220 = scmp.eq.s32.totalorder %s20, 0
      // Predicated region
      $region29: #{unet_up.2} parent=27 // pred_check
        %p221 = pneg %p220
      $region30: #{unet_up.2} parent=27 // pred_check_branch
        %223 = sbr.rel (%p221) target = $region32
      $region31: #{unet_up.2} parent=27 // pred_region
        %vm224 = vcmask 58368
        %225 = vst.msk [vmem:[%s218] sm:$0x3] %vm224, 0.0
      $region32: #{unet_up.2} parent=27 // pred_fallthru
        _
      %v226 = vld [vmem:[%s204] sm:$0xf]
      %v227 = vld [vmem:[%s204 + $0x8] sm:$0xf]
      %v228 = vld [vmem:[%s204 + $0x10] sm:$0xf]
      %v229 = vld [vmem:[%s204 + $0x18] sm:$0xf]
      %v230 = vld [vmem:[%s204 + $0x20] sm:$0xf]
      %v231 = vld [vmem:[%s204 + $0x28] sm:$0xf]
      %v232 = vld [vmem:[%s204 + $0x30] sm:$0xf]
      %v233 = vld [vmem:[%s204 + $0x38] sm:$0xf]
      %v234 = vld [vmem:[%s204 + $0x4] sm:$0x1]
      %v235 = vld [vmem:[%s204 + $0xc] sm:$0x1]
      %v236 = vld [vmem:[%s204 + $0x14] sm:$0x1]
      %v237 = vld [vmem:[%s204 + $0x1c] sm:$0x1]
      %v238 = vld [vmem:[%s204 + $0x24] sm:$0x1]
      %v239 = vld [vmem:[%s204 + $0x2c] sm:$0x1]
      %v240 = vld [vmem:[%s204 + $0x34] sm:$0x1]
      %v241 = vld [vmem:[%s204 + $0x3c] sm:$0x1]
      %vm242 = vsmask.f32 3328
      %vm243 = vsmask.f32 7440
      %vm244 = vmor %vm242, %vm243
      %v246 = vshrl.u32 %v226, 16
      %v248 = vrot.slane %v246, 4
      %v249 = vshll.u32 %v226, 16
      %v251 = vrot.slane %v249, 5
      %v252 = vor.u32 %v248, %v251
      %v253 = vrot.slane %v252, 4
      %v255 = vshll.u32 %v234, 16
      %v257 = vrot.slane %v255, 5
      %v258 = vsel %vm244, %v253, %v257
      %v260 = vshrl.u32 %v227, 16
      %v262 = vrot.slane %v260, 4
      %v263 = vshll.u32 %v227, 16
      %v265 = vrot.slane %v263, 5
      %v266 = vor.u32 %v262, %v265
      %v267 = vrot.slane %v266, 4
      %v269 = vshll.u32 %v235, 16
      %v271 = vrot.slane %v269, 5
      %v272 = vsel %vm244, %v267, %v271
      %v274 = vshrl.u32 %v228, 16
      %v276 = vrot.slane %v274, 4
      %v277 = vshll.u32 %v228, 16
      %v279 = vrot.slane %v277, 5
      %v280 = vor.u32 %v276, %v279
      %v281 = vrot.slane %v280, 4
      %v283 = vshll.u32 %v236, 16
      %v285 = vrot.slane %v283, 5
      %v286 = vsel %vm244, %v281, %v285
      %v288 = vshrl.u32 %v229, 16
      %v290 = vrot.slane %v288, 4
      %v291 = vshll.u32 %v229, 16
      %v293 = vrot.slane %v291, 5
      %v294 = vor.u32 %v290, %v293
      %v295 = vrot.slane %v294, 4
      %v297 = vshll.u32 %v237, 16
      %v299 = vrot.slane %v297, 5
      %v300 = vsel %vm244, %v295, %v299
      %v302 = vshrl.u32 %v230, 16
      %v304 = vrot.slane %v302, 4
      %v305 = vshll.u32 %v230, 16
      %v307 = vrot.slane %v305, 5
      %v308 = vor.u32 %v304, %v307
      %v309 = vrot.slane %v308, 4
      %v311 = vshll.u32 %v238, 16
      %v313 = vrot.slane %v311, 5
      %v314 = vsel %vm244, %v309, %v313
      %v316 = vshrl.u32 %v231, 16
      %v318 = vrot.slane %v316, 4
      %v319 = vshll.u32 %v231, 16
      %v321 = vrot.slane %v319, 5
      %v322 = vor.u32 %v318, %v321
      %v323 = vrot.slane %v322, 4
      %v325 = vshll.u32 %v239, 16
      %v327 = vrot.slane %v325, 5
      %v328 = vsel %vm244, %v323, %v327
      %v330 = vshrl.u32 %v232, 16
      %v332 = vrot.slane %v330, 4
      %v333 = vshll.u32 %v232, 16
      %v335 = vrot.slane %v333, 5
      %v336 = vor.u32 %v332, %v335
      %v337 = vrot.slane %v336, 4
      %v339 = vshll.u32 %v240, 16
      %v341 = vrot.slane %v339, 5
      %v342 = vsel %vm244, %v337, %v341
      %v344 = vshrl.u32 %v233, 16
      %v346 = vrot.slane %v344, 4
      %v347 = vshll.u32 %v233, 16
      %v349 = vrot.slane %v347, 5
      %v350 = vor.u32 %v346, %v349
      %v351 = vrot.slane %v350, 4
      %v353 = vshll.u32 %v241, 16
      %v355 = vrot.slane %v353, 5
      %v356 = vsel %vm244, %v351, %v355
      %s357 = scalar_lea.vmem %s204, 8
      %v358 = vld [vmem:[%s357] sm:$0xf]
      %v359 = vld [vmem:[%s357 + $0x8] sm:$0xf]
      %v360 = vld [vmem:[%s357 + $0x10] sm:$0xf]
      %v361 = vld [vmem:[%s357 + $0x18] sm:$0xf]
      %v362 = vld [vmem:[%s357 + $0x20] sm:$0xf]
      %v363 = vld [vmem:[%s357 + $0x28] sm:$0xf]
      %v364 = vld [vmem:[%s357 + $0x30] sm:$0xf]
      %v365 = vld [vmem:[%s357 + $0x38] sm:$0xf]
      %v366 = vld [vmem:[%s357 + $0x4] sm:$0x1]
      %v367 = vld [vmem:[%s357 + $0xc] sm:$0x1]
      %v368 = vld [vmem:[%s357 + $0x14] sm:$0x1]
      %v369 = vld [vmem:[%s357 + $0x1c] sm:$0x1]
      %v370 = vld [vmem:[%s357 + $0x24] sm:$0x1]
      %v371 = vld [vmem:[%s357 + $0x2c] sm:$0x1]
      %v372 = vld [vmem:[%s357 + $0x34] sm:$0x1]
      %v373 = vld [vmem:[%s357 + $0x3c] sm:$0x1]
      %v375 = vshrl.u32 %v358, 16
      %v377 = vrot.slane %v375, 4
      %v378 = vshll.u32 %v358, 16
      %v380 = vrot.slane %v378, 5
      %v381 = vor.u32 %v377, %v380
      %v382 = vrot.slane %v381, 4
      %v384 = vshll.u32 %v366, 16
      %v386 = vrot.slane %v384, 5
      %v387 = vsel %vm244, %v382, %v386
      %v389 = vshrl.u32 %v359, 16
      %v391 = vrot.slane %v389, 4
      %v392 = vshll.u32 %v359, 16
      %v394 = vrot.slane %v392, 5
      %v395 = vor.u32 %v391, %v394
      %v396 = vrot.slane %v395, 4
      %v398 = vshll.u32 %v367, 16
      %v400 = vrot.slane %v398, 5
      %v401 = vsel %vm244, %v396, %v400
      %v403 = vshrl.u32 %v360, 16
      %v405 = vrot.slane %v403, 4
      %v406 = vshll.u32 %v360, 16
      %v408 = vrot.slane %v406, 5
      %v409 = vor.u32 %v405, %v408
      %v410 = vrot.slane %v409, 4
      %v412 = vshll.u32 %v368, 16
      %v414 = vrot.slane %v412, 5
      %v415 = vsel %vm244, %v410, %v414
      %v417 = vshrl.u32 %v361, 16
      %v419 = vrot.slane %v417, 4
      %v420 = vshll.u32 %v361, 16
      %v422 = vrot.slane %v420, 5
      %v423 = vor.u32 %v419, %v422
      %v424 = vrot.slane %v423, 4
      %v426 = vshll.u32 %v369, 16
      %v428 = vrot.slane %v426, 5
      %v429 = vsel %vm244, %v424, %v428
      %v431 = vshrl.u32 %v362, 16
      %v433 = vrot.slane %v431, 4
      %v434 = vshll.u32 %v362, 16
      %v436 = vrot.slane %v434, 5
      %v437 = vor.u32 %v433, %v436
      %v438 = vrot.slane %v437, 4
      %v440 = vshll.u32 %v370, 16
      %v442 = vrot.slane %v440, 5
      %v443 = vsel %vm244, %v438, %v442
      %v445 = vshrl.u32 %v363, 16
      %v447 = vrot.slane %v445, 4
      %v448 = vshll.u32 %v363, 16
      %v450 = vrot.slane %v448, 5
      %v451 = vor.u32 %v447, %v450
      %v452 = vrot.slane %v451, 4
      %v454 = vshll.u32 %v371, 16
      %v456 = vrot.slane %v454, 5
      %v457 = vsel %vm244, %v452, %v456
      %v459 = vshrl.u32 %v364, 16
      %v461 = vrot.slane %v459, 4
      %v462 = vshll.u32 %v364, 16
      %v464 = vrot.slane %v462, 5
      %v465 = vor.u32 %v461, %v464
      %v466 = vrot.slane %v465, 4
      %v468 = vshll.u32 %v372, 16
      %v470 = vrot.slane %v468, 5
      %v471 = vsel %vm244, %v466, %v470
      %v473 = vshrl.u32 %v365, 16
      %v475 = vrot.slane %v473, 4
      %v476 = vshll.u32 %v365, 16
      %v478 = vrot.slane %v476, 5
      %v479 = vor.u32 %v475, %v478
      %v480 = vrot.slane %v479, 4
      %v482 = vshll.u32 %v373, 16
      %v484 = vrot.slane %v482, 5
      %v485 = vsel %vm244, %v480, %v484
      %v494 = vunpack.c.l.b16 %v226
      %v495 = vunpack.c.l.b16 %v227
      %v496 = vunpack.c.l.b16 %v228
      %v497 = vunpack.c.l.b16 %v229
      %v498 = vunpack.c.l.b16 %v230
      %v499 = vunpack.c.l.b16 %v231
      %v500 = vunpack.c.l.b16 %v232
      %v501 = vunpack.c.l.b16 %v233
      %v502 = vpack.c.b16 %v495, %v494
      %v503 = vpack.c.b16 %v497, %v496
      %v504 = vpack.c.b16 %v499, %v498
      %v505 = vpack.c.b16 %v501, %v500
      %v506 = vunpack.c.l.b16 %v258
      %v507 = vunpack.c.l.b16 %v272
      %v508 = vunpack.c.l.b16 %v286
      %v509 = vunpack.c.l.b16 %v300
      %v510 = vunpack.c.l.b16 %v314
      %v511 = vunpack.c.l.b16 %v328
      %v512 = vunpack.c.l.b16 %v342
      %v513 = vunpack.c.l.b16 %v356
      %v514 = vpack.c.b16 %v507, %v506
      %v515 = vpack.c.b16 %v509, %v508
      %v516 = vpack.c.b16 %v511, %v510
      %v517 = vpack.c.b16 %v513, %v512
      %518 = vrot.lane.b32.xlu0 %v514, 4
      %v519 = vpop.permute.xlu0 %518
      %520 = vrot.lane.b32.xlu0 %v515, 4
      %v521 = vpop.permute.xlu0 %520
      %522 = vrot.lane.b32.xlu0 %v516, 4
      %v523 = vpop.permute.xlu0 %522
      %524 = vrot.lane.b32.xlu0 %v517, 4
      %v525 = vpop.permute.xlu0 %524
      %v534 = vunpack.c.l.b16 %v358
      %v535 = vunpack.c.l.b16 %v359
      %v536 = vunpack.c.l.b16 %v360
      %v537 = vunpack.c.l.b16 %v361
      %v538 = vunpack.c.l.b16 %v362
      %v539 = vunpack.c.l.b16 %v363
      %v540 = vunpack.c.l.b16 %v364
      %v541 = vunpack.c.l.b16 %v365
      %v542 = vpack.c.b16 %v535, %v534
      %v543 = vpack.c.b16 %v537, %v536
      %v544 = vpack.c.b16 %v539, %v538
      %v545 = vpack.c.b16 %v541, %v540
      %546 = vrot.lane.b32.xlu0 %v542, 8
      %v547 = vpop.permute.xlu0 %546
      %548 = vrot.lane.b32.xlu0 %v543, 8
      %v549 = vpop.permute.xlu0 %548
      %550 = vrot.lane.b32.xlu0 %v544, 8
      %v551 = vpop.permute.xlu0 %550
      %552 = vrot.lane.b32.xlu0 %v545, 8
      %v553 = vpop.permute.xlu0 %552
      %v554 = vunpack.c.l.b16 %v387
      %v555 = vunpack.c.l.b16 %v401
      %v556 = vunpack.c.l.b16 %v415
      %v557 = vunpack.c.l.b16 %v429
      %v558 = vunpack.c.l.b16 %v443
      %v559 = vunpack.c.l.b16 %v457
      %v560 = vunpack.c.l.b16 %v471
      %v561 = vunpack.c.l.b16 %v485
      %v562 = vpack.c.b16 %v555, %v554
      %v563 = vpack.c.b16 %v557, %v556
      %v564 = vpack.c.b16 %v559, %v558
      %v565 = vpack.c.b16 %v561, %v560
      %566 = vrot.lane.b32.xlu0 %v562, 12
      %v567 = vpop.permute.xlu0 %566
      %568 = vrot.lane.b32.xlu0 %v563, 12
      %v569 = vpop.permute.xlu0 %568
      %570 = vrot.lane.b32.xlu0 %v564, 12
      %v571 = vpop.permute.xlu0 %570
      %572 = vrot.lane.b32.xlu0 %v565, 12
      %v573 = vpop.permute.xlu0 %572
      %vm574 = vcmask 31744
      %v577 = vsel %vm574, %v502, %v519
      %v580 = vsel %vm574, %v503, %v521
      %v583 = vsel %vm574, %v504, %v523
      %v586 = vsel %vm574, %v505, %v525
      %vm587 = vcmask 64512
      %v589 = vsel %vm587, %v577, %v547
      %v591 = vsel %vm587, %v580, %v549
      %v593 = vsel %vm587, %v583, %v551
      %v595 = vsel %vm587, %v586, %v553
      %vm596 = vcmask 97280
      %v598 = vsel %vm596, %v589, %v567
      %v600 = vsel %vm596, %v591, %v569
      %v602 = vsel %vm596, %v593, %v571
      %v604 = vsel %vm596, %v595, %v573
      %v605 = vld [vmem:[%s1] sm:$0xf]
      %v606 = vld [vmem:[%s1 + $0x4] sm:$0xf]
      %v609 = vunpack.c.l.b16 %v605
      %v610 = vunpack.c.l.b16 %v606
      %v611 = vpack.c.b16 %v610, %v609
      %vm613 = vcmask 130048
      %v614 = vsel %vm613, %v598, 0
      %v616 = vsel %vm613, %v600, 0
      %v618 = vsel %vm613, %v602, 0
      %v620 = vsel %vm613, %v604, 0
      %622 = vmatpush.bf16.msra.mxu0 0
      %623 = vmatpush.bf16.msra.mxu0 0
      %624 = vmatpush.bf16.msra.mxu0 0
      %625 = vmatpush.bf16.msra.mxu0 0
      %626 = vmatpush.bf16.msra.mxu0 0
      %627 = vmatpush.bf16.msra.mxu0 0
      %628 = vmatpush.bf16.msra.mxu0 0
      %629 = vmatpush.bf16.msra.mxu0 %v611
      %630 = vmatmul.bf16.gmra.mxu0 %v614
      %v631 = vpop.f32.mrf.mxu0
      %v632 = vadd.f32 0.0, %v631
      %v633 = vpop.f32.mrf.mxu0
      %v634 = vadd.f32 0.0, %v633
      %635 = vmatmul.bf16.gmra.mxu0 %v616
      %v636 = vpop.f32.mrf.mxu0
      %v637 = vadd.f32 0.0, %v636
      %v638 = vpop.f32.mrf.mxu0
      %v639 = vadd.f32 0.0, %v638
      %640 = vmatmul.bf16.gmra.mxu0 %v618
      %v641 = vpop.f32.mrf.mxu0
      %v642 = vadd.f32 0.0, %v641
      %v643 = vpop.f32.mrf.mxu0
      %v644 = vadd.f32 0.0, %v643
      %645 = vmatmul.bf16.gmra.mxu0 %v620
      %v646 = vpop.f32.mrf.mxu0
      %v647 = vadd.f32 0.0, %v646
      %v648 = vpop.f32.mrf.mxu0
      %v649 = vadd.f32 0.0, %v648
      %650 = vdwg.mxu0
      %v651 = vsel %vm587, %v632, 0.0
      %v652 = vsel %vm587, %v634, 0.0
      %v653 = vadd.f32 %v651, %v652
      %v654 = vsel %vm587, %v637, 0.0
      %v655 = vadd.f32 %v653, %v654
      %v656 = vsel %vm587, %v639, 0.0
      %v657 = vadd.f32 %v655, %v656
      %v658 = vsel %vm587, %v642, 0.0
      %v659 = vadd.f32 %v657, %v658
      %v660 = vsel %vm587, %v644, 0.0
      %v661 = vadd.f32 %v659, %v660
      %v662 = vsel %vm587, %v647, 0.0
      %v663 = vadd.f32 %v661, %v662
      %v664 = vsel %vm587, %v649, 0.0
      %v665 = vadd.f32 %v663, %v664
      %v666 = vrot.slane %v665, 4
      %v667 = vadd.f32 %v665, %v666
      %v668 = vrot.slane %v667, 2
      %v669 = vadd.f32 %v667, %v668
      %v670 = vrot.slane %v669, 1
      %v671 = vadd.f32 %v669, %v670
      %v672 = vadd.f32 %v671, 0.0
      %v673 = vmul.f32 %v632, %v632
      %v674 = vmul.f32 %v634, %v634
      %v675 = vmul.f32 %v637, %v637
      %v676 = vmul.f32 %v639, %v639
      %v677 = vmul.f32 %v642, %v642
      %v678 = vmul.f32 %v644, %v644
      %v679 = vmul.f32 %v647, %v647
      %v680 = vmul.f32 %v649, %v649
      %v681 = vsel %vm587, %v673, 0.0
      %v682 = vsel %vm587, %v674, 0.0
      %v683 = vadd.f32 %v681, %v682
      %v684 = vsel %vm587, %v675, 0.0
      %v685 = vadd.f32 %v683, %v684
      %v686 = vsel %vm587, %v676, 0.0
      %v687 = vadd.f32 %v685, %v686
      %v688 = vsel %vm587, %v677, 0.0
      %v689 = vadd.f32 %v687, %v688
      %v690 = vsel %vm587, %v678, 0.0
      %v691 = vadd.f32 %v689, %v690
      %v692 = vsel %vm587, %v679, 0.0
      %v693 = vadd.f32 %v691, %v692
      %v694 = vsel %vm587, %v680, 0.0
      %v695 = vadd.f32 %v693, %v694
      %v696 = vrot.slane %v695, 4
      %v697 = vadd.f32 %v695, %v696
      %v698 = vrot.slane %v697, 2
      %v699 = vadd.f32 %v697, %v698
      %v700 = vrot.slane %v699, 1
      %v701 = vadd.f32 %v699, %v700
      %v702 = vadd.f32 %v701, 0.0
      %v703 = vpack.c.bf16 %v632, %v632
      %v704 = vpack.c.bf16 %v634, %v634
      %v705 = vpack.c.bf16 %v637, %v637
      %v706 = vpack.c.bf16 %v639, %v639
      %v707 = vpack.c.bf16 %v642, %v642
      %v708 = vpack.c.bf16 %v644, %v644
      %v709 = vpack.c.bf16 %v647, %v647
      %v710 = vpack.c.bf16 %v649, %v649
      %vm711 = vcmask 60416
      %712 = vst.msk [vmem:[%s213] sm:$0xf] %vm711, %v703
      %713 = vst.msk [vmem:[%s213 + $0x4] sm:$0xf] %vm711, %v704
      %714 = vst.msk [vmem:[%s213 + $0x8] sm:$0xf] %vm711, %v705
      %715 = vst.msk [vmem:[%s213 + $0xc] sm:$0xf] %vm711, %v706
      %716 = vst.msk [vmem:[%s213 + $0x10] sm:$0xf] %vm711, %v707
      %717 = vst.msk [vmem:[%s213 + $0x14] sm:$0xf] %vm711, %v708
      %718 = vst.msk [vmem:[%s213 + $0x18] sm:$0xf] %vm711, %v709
      %719 = vst.msk [vmem:[%s213 + $0x1c] sm:$0xf] %vm711, %v710
      %v720 = vld [vmem:[%s204] sm:$0xf]
      %v721 = vld [vmem:[%s204 + $0x4] sm:$0x1]
      %v722 = vld [vmem:[%s204 + $0x8] sm:$0xf]
      %v723 = vld [vmem:[%s204 + $0xc] sm:$0x1]
      %v724 = vld [vmem:[%s204 + $0x10] sm:$0xf]
      %v725 = vld [vmem:[%s204 + $0x14] sm:$0x1]
      %v726 = vld [vmem:[%s204 + $0x18] sm:$0xf]
      %v727 = vld [vmem:[%s204 + $0x1c] sm:$0x1]
      %v728 = vld [vmem:[%s204 + $0x20] sm:$0xf]
      %v729 = vld [vmem:[%s204 + $0x24] sm:$0x1]
      %v730 = vld [vmem:[%s204 + $0x28] sm:$0xf]
      %v731 = vld [vmem:[%s204 + $0x2c] sm:$0x1]
      %v732 = vld [vmem:[%s204 + $0x30] sm:$0xf]
      %v733 = vld [vmem:[%s204 + $0x34] sm:$0x1]
      %v734 = vld [vmem:[%s204 + $0x38] sm:$0xf]
      %v735 = vld [vmem:[%s204 + $0x3c] sm:$0x1]
      %v737 = vshrl.u32 %v720, 16
      %v739 = vrot.slane %v737, 4
      %v740 = vshll.u32 %v720, 16
      %v742 = vrot.slane %v740, 5
      %v743 = vor.u32 %v739, %v742
      %v744 = vrot.slane %v743, 4
      %v746 = vshll.u32 %v721, 16
      %v748 = vrot.slane %v746, 5
      %v749 = vsel %vm244, %v744, %v748
      %v751 = vshrl.u32 %v722, 16
      %v753 = vrot.slane %v751, 4
      %v754 = vshll.u32 %v722, 16
      %v756 = vrot.slane %v754, 5
      %v757 = vor.u32 %v753, %v756
      %v758 = vrot.slane %v757, 4
      %v760 = vshll.u32 %v723, 16
      %v762 = vrot.slane %v760, 5
      %v763 = vsel %vm244, %v758, %v762
      %v765 = vshrl.u32 %v724, 16
      %v767 = vrot.slane %v765, 4
      %v768 = vshll.u32 %v724, 16
      %v770 = vrot.slane %v768, 5
      %v771 = vor.u32 %v767, %v770
      %v772 = vrot.slane %v771, 4
      %v774 = vshll.u32 %v725, 16
      %v776 = vrot.slane %v774, 5
      %v777 = vsel %vm244, %v772, %v776
      %v779 = vshrl.u32 %v726, 16
      %v781 = vrot.slane %v779, 4
      %v782 = vshll.u32 %v726, 16
      %v784 = vrot.slane %v782, 5
      %v785 = vor.u32 %v781, %v784
      %v786 = vrot.slane %v785, 4
      %v788 = vshll.u32 %v727, 16
      %v790 = vrot.slane %v788, 5
      %v791 = vsel %vm244, %v786, %v790
      %v793 = vshrl.u32 %v728, 16
      %v795 = vrot.slane %v793, 4
      %v796 = vshll.u32 %v728, 16
      %v798 = vrot.slane %v796, 5
      %v799 = vor.u32 %v795, %v798
      %v800 = vrot.slane %v799, 4
      %v802 = vshll.u32 %v729, 16
      %v804 = vrot.slane %v802, 5
      %v805 = vsel %vm244, %v800, %v804
      %v807 = vshrl.u32 %v730, 16
      %v809 = vrot.slane %v807, 4
      %v810 = vshll.u32 %v730, 16
      %v812 = vrot.slane %v810, 5
      %v813 = vor.u32 %v809, %v812
      %v814 = vrot.slane %v813, 4
      %v816 = vshll.u32 %v731, 16
      %v818 = vrot.slane %v816, 5
      %v819 = vsel %vm244, %v814, %v818
      %v821 = vshrl.u32 %v732, 16
      %v823 = vrot.slane %v821, 4
      %v824 = vshll.u32 %v732, 16
      %v826 = vrot.slane %v824, 5
      %v827 = vor.u32 %v823, %v826
      %v828 = vrot.slane %v827, 4
      %v830 = vshll.u32 %v733, 16
      %v832 = vrot.slane %v830, 5
      %v833 = vsel %vm244, %v828, %v832
      %v835 = vshrl.u32 %v734, 16
      %v837 = vrot.slane %v835, 4
      %v838 = vshll.u32 %v734, 16
      %v840 = vrot.slane %v838, 5
      %v841 = vor.u32 %v837, %v840
      %v842 = vrot.slane %v841, 4
      %v844 = vshll.u32 %v735, 16
      %v846 = vrot.slane %v844, 5
      %v847 = vsel %vm244, %v842, %v846
      %v848 = vld [vmem:[%s204] sm:$0xe]
      %v849 = vld [vmem:[%s204 + $0x8] sm:$0xe]
      %v850 = vld [vmem:[%s204 + $0x10] sm:$0xe]
      %v851 = vld [vmem:[%s204 + $0x18] sm:$0xe]
      %v852 = vld [vmem:[%s204 + $0x20] sm:$0xe]
      %v853 = vld [vmem:[%s204 + $0x28] sm:$0xe]
      %v854 = vld [vmem:[%s204 + $0x30] sm:$0xe]
      %v855 = vld [vmem:[%s204 + $0x38] sm:$0xe]
      %vm872 = vcmask 1042432
      %vm873 = vcmask 1046532
      %vm874 = vmor %vm872, %vm873
      %v875 = vrot.slane %v848, 5
      %v876 = vrot.slane %v875, 4
      %v877 = vrot.slane %v721, 5
      %v878 = vsel %vm874, %v876, %v877
      %v879 = vrot.slane %v849, 5
      %v880 = vrot.slane %v879, 4
      %v881 = vrot.slane %v723, 5
      %v882 = vsel %vm874, %v880, %v881
      %v883 = vrot.slane %v850, 5
      %v884 = vrot.slane %v883, 4
      %v885 = vrot.slane %v725, 5
      %v886 = vsel %vm874, %v884, %v885
      %v887 = vrot.slane %v851, 5
      %v888 = vrot.slane %v887, 4
      %v889 = vrot.slane %v727, 5
      %v890 = vsel %vm874, %v888, %v889
      %v891 = vrot.slane %v852, 5
      %v892 = vrot.slane %v891, 4
      %v893 = vrot.slane %v729, 5
      %v894 = vsel %vm874, %v892, %v893
      %v895 = vrot.slane %v853, 5
      %v896 = vrot.slane %v895, 4
      %v897 = vrot.slane %v731, 5
      %v898 = vsel %vm874, %v896, %v897
      %v899 = vrot.slane %v854, 5
      %v900 = vrot.slane %v899, 4
      %v901 = vrot.slane %v733, 5
      %v902 = vsel %vm874, %v900, %v901
      %v903 = vrot.slane %v855, 5
      %v904 = vrot.slane %v903, 4
      %v905 = vrot.slane %v735, 5
      %v906 = vsel %vm874, %v904, %v905
      %v907 = vld [vmem:[%s357] sm:$0xf]
      %v908 = vld [vmem:[%s357 + $0x4] sm:$0x1]
      %v909 = vld [vmem:[%s357 + $0x8] sm:$0xf]
      %v910 = vld [vmem:[%s357 + $0xc] sm:$0x1]
      %v911 = vld [vmem:[%s357 + $0x10] sm:$0xf]
      %v912 = vld [vmem:[%s357 + $0x14] sm:$0x1]
      %v913 = vld [vmem:[%s357 + $0x18] sm:$0xf]
      %v914 = vld [vmem:[%s357 + $0x1c] sm:$0x1]
      %v915 = vld [vmem:[%s357 + $0x20] sm:$0xf]
      %v916 = vld [vmem:[%s357 + $0x24] sm:$0x1]
      %v917 = vld [vmem:[%s357 + $0x28] sm:$0xf]
      %v918 = vld [vmem:[%s357 + $0x2c] sm:$0x1]
      %v919 = vld [vmem:[%s357 + $0x30] sm:$0xf]
      %v920 = vld [vmem:[%s357 + $0x34] sm:$0x1]
      %v921 = vld [vmem:[%s357 + $0x38] sm:$0xf]
      %v922 = vld [vmem:[%s357 + $0x3c] sm:$0x1]
      %v924 = vshrl.u32 %v907, 16
      %v926 = vrot.slane %v924, 4
      %v927 = vshll.u32 %v907, 16
      %v929 = vrot.slane %v927, 5
      %v930 = vor.u32 %v926, %v929
      %v931 = vrot.slane %v930, 4
      %v933 = vshll.u32 %v908, 16
      %v935 = vrot.slane %v933, 5
      %v936 = vsel %vm244, %v931, %v935
      %v938 = vshrl.u32 %v909, 16
      %v940 = vrot.slane %v938, 4
      %v941 = vshll.u32 %v909, 16
      %v943 = vrot.slane %v941, 5
      %v944 = vor.u32 %v940, %v943
      %v945 = vrot.slane %v944, 4
      %v947 = vshll.u32 %v910, 16
      %v949 = vrot.slane %v947, 5
      %v950 = vsel %vm244, %v945, %v949
      %v952 = vshrl.u32 %v911, 16
      %v954 = vrot.slane %v952, 4
      %v955 = vshll.u32 %v911, 16
      %v957 = vrot.slane %v955, 5
      %v958 = vor.u32 %v954, %v957
      %v959 = vrot.slane %v958, 4
      %v961 = vshll.u32 %v912, 16
      %v963 = vrot.slane %v961, 5
      %v964 = vsel %vm244, %v959, %v963
      %v966 = vshrl.u32 %v913, 16
      %v968 = vrot.slane %v966, 4
      %v969 = vshll.u32 %v913, 16
      %v971 = vrot.slane %v969, 5
      %v972 = vor.u32 %v968, %v971
      %v973 = vrot.slane %v972, 4
      %v975 = vshll.u32 %v914, 16
      %v977 = vrot.slane %v975, 5
      %v978 = vsel %vm244, %v973, %v977
      %v980 = vshrl.u32 %v915, 16
      %v982 = vrot.slane %v980, 4
      %v983 = vshll.u32 %v915, 16
      %v985 = vrot.slane %v983, 5
      %v986 = vor.u32 %v982, %v985
      %v987 = vrot.slane %v986, 4
      %v989 = vshll.u32 %v916, 16
      %v991 = vrot.slane %v989, 5
      %v992 = vsel %vm244, %v987, %v991
      %v994 = vshrl.u32 %v917, 16
      %v996 = vrot.slane %v994, 4
      %v997 = vshll.u32 %v917, 16
      %v999 = vrot.slane %v997, 5
      %v1000 = vor.u32 %v996, %v999
      %v1001 = vrot.slane %v1000, 4
      %v1003 = vshll.u32 %v918, 16
      %v1005 = vrot.slane %v1003, 5
      %v1006 = vsel %vm244, %v1001, %v1005
      %v1008 = vshrl.u32 %v919, 16
      %v1010 = vrot.slane %v1008, 4
      %v1011 = vshll.u32 %v919, 16
      %v1013 = vrot.slane %v1011, 5
      %v1014 = vor.u32 %v1010, %v1013
      %v1015 = vrot.slane %v1014, 4
      %v1017 = vshll.u32 %v920, 16
      %v1019 = vrot.slane %v1017, 5
      %v1020 = vsel %vm244, %v1015, %v1019
      %v1022 = vshrl.u32 %v921, 16
      %v1024 = vrot.slane %v1022, 4
      %v1025 = vshll.u32 %v921, 16
      %v1027 = vrot.slane %v1025, 5
      %v1028 = vor.u32 %v1024, %v1027
      %v1029 = vrot.slane %v1028, 4
      %v1031 = vshll.u32 %v922, 16
      %v1033 = vrot.slane %v1031, 5
      %v1034 = vsel %vm244, %v1029, %v1033
      %v1035 = vld [vmem:[%s357] sm:$0xe]
      %v1036 = vld [vmem:[%s357 + $0x8] sm:$0xe]
      %v1037 = vld [vmem:[%s357 + $0x10] sm:$0xe]
      %v1038 = vld [vmem:[%s357 + $0x18] sm:$0xe]
      %v1039 = vld [vmem:[%s357 + $0x20] sm:$0xe]
      %v1040 = vld [vmem:[%s357 + $0x28] sm:$0xe]
      %v1041 = vld [vmem:[%s357 + $0x30] sm:$0xe]
      %v1042 = vld [vmem:[%s357 + $0x38] sm:$0xe]
      %v1059 = vrot.slane %v1035, 5
      %v1060 = vrot.slane %v1059, 4
      %v1061 = vrot.slane %v908, 5
      %v1062 = vsel %vm874, %v1060, %v1061
      %v1063 = vrot.slane %v1036, 5
      %v1064 = vrot.slane %v1063, 4
      %v1065 = vrot.slane %v910, 5
      %v1066 = vsel %vm874, %v1064, %v1065
      %v1067 = vrot.slane %v1037, 5
      %v1068 = vrot.slane %v1067, 4
      %v1069 = vrot.slane %v912, 5
      %v1070 = vsel %vm874, %v1068, %v1069
      %v1071 = vrot.slane %v1038, 5
      %v1072 = vrot.slane %v1071, 4
      %v1073 = vrot.slane %v914, 5
      %v1074 = vsel %vm874, %v1072, %v1073
      %v1075 = vrot.slane %v1039, 5
      %v1076 = vrot.slane %v1075, 4
      %v1077 = vrot.slane %v916, 5
      %v1078 = vsel %vm874, %v1076, %v1077
      %v1079 = vrot.slane %v1040, 5
      %v1080 = vrot.slane %v1079, 4
      %v1081 = vrot.slane %v918, 5
      %v1082 = vsel %vm874, %v1080, %v1081
      %v1083 = vrot.slane %v1041, 5
      %v1084 = vrot.slane %v1083, 4
      %v1085 = vrot.slane %v920, 5
      %v1086 = vsel %vm874, %v1084, %v1085
      %v1087 = vrot.slane %v1042, 5
      %v1088 = vrot.slane %v1087, 4
      %v1089 = vrot.slane %v922, 5
      %v1090 = vsel %vm874, %v1088, %v1089
      %v1091 = vunpack.c.l.b16 %v749
      %v1092 = vunpack.c.l.b16 %v763
      %v1093 = vunpack.c.l.b16 %v777
      %v1094 = vunpack.c.l.b16 %v791
      %v1095 = vunpack.c.l.b16 %v805
      %v1096 = vunpack.c.l.b16 %v819
      %v1097 = vunpack.c.l.b16 %v833
      %v1098 = vunpack.c.l.b16 %v847
      %v1099 = vpack.c.b16 %v1092, %v1091
      %v1100 = vpack.c.b16 %v1094, %v1093
      %v1101 = vpack.c.b16 %v1096, %v1095
      %v1102 = vpack.c.b16 %v1098, %v1097
      %v1103 = vunpack.c.l.b16 %v878
      %v1104 = vunpack.c.l.b16 %v882
      %v1105 = vunpack.c.l.b16 %v886
      %v1106 = vunpack.c.l.b16 %v890
      %v1107 = vunpack.c.l.b16 %v894
      %v1108 = vunpack.c.l.b16 %v898
      %v1109 = vunpack.c.l.b16 %v902
      %v1110 = vunpack.c.l.b16 %v906
      %v1111 = vpack.c.b16 %v1104, %v1103
      %v1112 = vpack.c.b16 %v1106, %v1105
      %v1113 = vpack.c.b16 %v1108, %v1107
      %v1114 = vpack.c.b16 %v1110, %v1109
      %1115 = vrot.lane.b32.xlu0 %v1111, 4
      %v1116 = vpop.permute.xlu0 %1115
      %1117 = vrot.lane.b32.xlu0 %v1112, 4
      %v1118 = vpop.permute.xlu0 %1117
      %1119 = vrot.lane.b32.xlu0 %v1113, 4
      %v1120 = vpop.permute.xlu0 %1119
      %1121 = vrot.lane.b32.xlu0 %v1114, 4
      %v1122 = vpop.permute.xlu0 %1121
      %v1123 = vunpack.c.l.b16 %v936
      %v1124 = vunpack.c.l.b16 %v950
      %v1125 = vunpack.c.l.b16 %v964
      %v1126 = vunpack.c.l.b16 %v978
      %v1127 = vunpack.c.l.b16 %v992
      %v1128 = vunpack.c.l.b16 %v1006
      %v1129 = vunpack.c.l.b16 %v1020
      %v1130 = vunpack.c.l.b16 %v1034
      %v1131 = vpack.c.b16 %v1124, %v1123
      %v1132 = vpack.c.b16 %v1126, %v1125
      %v1133 = vpack.c.b16 %v1128, %v1127
      %v1134 = vpack.c.b16 %v1130, %v1129
      %1135 = vrot.lane.b32.xlu0 %v1131, 8
      %v1136 = vpop.permute.xlu0 %1135
      %1137 = vrot.lane.b32.xlu0 %v1132, 8
      %v1138 = vpop.permute.xlu0 %1137
      %1139 = vrot.lane.b32.xlu0 %v1133, 8
      %v1140 = vpop.permute.xlu0 %1139
      %1141 = vrot.lane.b32.xlu0 %v1134, 8
      %v1142 = vpop.permute.xlu0 %1141
      %v1143 = vunpack.c.l.b16 %v1062
      %v1144 = vunpack.c.l.b16 %v1066
      %v1145 = vunpack.c.l.b16 %v1070
      %v1146 = vunpack.c.l.b16 %v1074
      %v1147 = vunpack.c.l.b16 %v1078
      %v1148 = vunpack.c.l.b16 %v1082
      %v1149 = vunpack.c.l.b16 %v1086
      %v1150 = vunpack.c.l.b16 %v1090
      %v1151 = vpack.c.b16 %v1144, %v1143
      %v1152 = vpack.c.b16 %v1146, %v1145
      %v1153 = vpack.c.b16 %v1148, %v1147
      %v1154 = vpack.c.b16 %v1150, %v1149
      %1155 = vrot.lane.b32.xlu0 %v1151, 12
      %v1156 = vpop.permute.xlu0 %1155
      %1157 = vrot.lane.b32.xlu0 %v1152, 12
      %v1158 = vpop.permute.xlu0 %1157
      %1159 = vrot.lane.b32.xlu0 %v1153, 12
      %v1160 = vpop.permute.xlu0 %1159
      %1161 = vrot.lane.b32.xlu0 %v1154, 12
      %v1162 = vpop.permute.xlu0 %1161
      %v1165 = vsel %vm574, %v1099, %v1116
      %v1168 = vsel %vm574, %v1100, %v1118
      %v1171 = vsel %vm574, %v1101, %v1120
      %v1174 = vsel %vm574, %v1102, %v1122
      %v1176 = vsel %vm587, %v1165, %v1136
      %v1178 = vsel %vm587, %v1168, %v1138
      %v1180 = vsel %vm587, %v1171, %v1140
      %v1182 = vsel %vm587, %v1174, %v1142
      %v1184 = vsel %vm596, %v1176, %v1156
      %v1186 = vsel %vm596, %v1178, %v1158
      %v1188 = vsel %vm596, %v1180, %v1160
      %v1190 = vsel %vm596, %v1182, %v1162
      %s1191 = scalar_lea.vmem %s1, 8
      %v1192 = vld [vmem:[%s1191] sm:$0xf]
      %v1193 = vld [vmem:[%s1191 + $0x4] sm:$0xf]
      %v1196 = vunpack.c.l.b16 %v1192
      %v1197 = vunpack.c.l.b16 %v1193
      %v1198 = vpack.c.b16 %v1197, %v1196
      %v1200 = vsel %vm613, %v1184, 0
      %v1202 = vsel %vm613, %v1186, 0
      %v1204 = vsel %vm613, %v1188, 0
      %v1206 = vsel %vm613, %v1190, 0
      %1208 = vmatpush.bf16.msra.mxu0 0
      %1209 = vmatpush.bf16.msra.mxu0 0
      %1210 = vmatpush.bf16.msra.mxu0 0
      %1211 = vmatpush.bf16.msra.mxu0 0
      %1212 = vmatpush.bf16.msra.mxu0 0
      %1213 = vmatpush.bf16.msra.mxu0 0
      %1214 = vmatpush.bf16.msra.mxu0 0
      %1215 = vmatpush.bf16.msra.mxu0 %v1198
      %1216 = vmatmul.bf16.gmra.mxu0 %v1200
      %v1217 = vpop.f32.mrf.mxu0
      %v1218 = vadd.f32 0.0, %v1217
      %v1219 = vpop.f32.mrf.mxu0
      %v1220 = vadd.f32 0.0, %v1219
      %1221 = vmatmul.bf16.gmra.mxu0 %v1202
      %v1222 = vpop.f32.mrf.mxu0
      %v1223 = vadd.f32 0.0, %v1222
      %v1224 = vpop.f32.mrf.mxu0
      %v1225 = vadd.f32 0.0, %v1224
      %1226 = vmatmul.bf16.gmra.mxu0 %v1204
      %v1227 = vpop.f32.mrf.mxu0
      %v1228 = vadd.f32 0.0, %v1227
      %v1229 = vpop.f32.mrf.mxu0
      %v1230 = vadd.f32 0.0, %v1229
      %1231 = vmatmul.bf16.gmra.mxu0 %v1206
      %v1232 = vpop.f32.mrf.mxu0
      %v1233 = vadd.f32 0.0, %v1232
      %v1234 = vpop.f32.mrf.mxu0
      %v1235 = vadd.f32 0.0, %v1234
      %1236 = vdwg.mxu0
      %v1237 = vsel %vm587, %v1218, 0.0
      %v1238 = vsel %vm587, %v1220, 0.0
      %v1239 = vadd.f32 %v1237, %v1238
      %v1240 = vsel %vm587, %v1223, 0.0
      %v1241 = vadd.f32 %v1239, %v1240
      %v1242 = vsel %vm587, %v1225, 0.0
      %v1243 = vadd.f32 %v1241, %v1242
      %v1244 = vsel %vm587, %v1228, 0.0
      %v1245 = vadd.f32 %v1243, %v1244
      %v1246 = vsel %vm587, %v1230, 0.0
      %v1247 = vadd.f32 %v1245, %v1246
      %v1248 = vsel %vm587, %v1233, 0.0
      %v1249 = vadd.f32 %v1247, %v1248
      %v1250 = vsel %vm587, %v1235, 0.0
      %v1251 = vadd.f32 %v1249, %v1250
      %v1252 = vrot.slane %v1251, 4
      %v1253 = vadd.f32 %v1251, %v1252
      %v1254 = vrot.slane %v1253, 2
      %v1255 = vadd.f32 %v1253, %v1254
      %v1256 = vrot.slane %v1255, 1
      %v1257 = vadd.f32 %v1255, %v1256
      %v1258 = vadd.f32 %v672, %v1257
      %v1259 = vmul.f32 %v1218, %v1218
      %v1260 = vmul.f32 %v1220, %v1220
      %v1261 = vmul.f32 %v1223, %v1223
      %v1262 = vmul.f32 %v1225, %v1225
      %v1263 = vmul.f32 %v1228, %v1228
      %v1264 = vmul.f32 %v1230, %v1230
      %v1265 = vmul.f32 %v1233, %v1233
      %v1266 = vmul.f32 %v1235, %v1235
      %v1267 = vsel %vm587, %v1259, 0.0
      %v1268 = vsel %vm587, %v1260, 0.0
      %v1269 = vadd.f32 %v1267, %v1268
      %v1270 = vsel %vm587, %v1261, 0.0
      %v1271 = vadd.f32 %v1269, %v1270
      %v1272 = vsel %vm587, %v1262, 0.0
      %v1273 = vadd.f32 %v1271, %v1272
      %v1274 = vsel %vm587, %v1263, 0.0
      %v1275 = vadd.f32 %v1273, %v1274
      %v1276 = vsel %vm587, %v1264, 0.0
      %v1277 = vadd.f32 %v1275, %v1276
      %v1278 = vsel %vm587, %v1265, 0.0
      %v1279 = vadd.f32 %v1277, %v1278
      %v1280 = vsel %vm587, %v1266, 0.0
      %v1281 = vadd.f32 %v1279, %v1280
      %v1282 = vrot.slane %v1281, 4
      %v1283 = vadd.f32 %v1281, %v1282
      %v1284 = vrot.slane %v1283, 2
      %v1285 = vadd.f32 %v1283, %v1284
      %v1286 = vrot.slane %v1285, 1
      %v1287 = vadd.f32 %v1285, %v1286
      %v1288 = vadd.f32 %v702, %v1287
      %v1289 = vpack.c.bf16 %v1218, %v1218
      %v1290 = vpack.c.bf16 %v1220, %v1220
      %v1291 = vpack.c.bf16 %v1223, %v1223
      %v1292 = vpack.c.bf16 %v1225, %v1225
      %v1293 = vpack.c.bf16 %v1228, %v1228
      %v1294 = vpack.c.bf16 %v1230, %v1230
      %v1295 = vpack.c.bf16 %v1233, %v1233
      %v1296 = vpack.c.bf16 %v1235, %v1235
      %s1297 = scalar_lea.vmem %s213, 32
      %1298 = vst.msk [vmem:[%s1297] sm:$0xf] %vm711, %v1289
      %1299 = vst.msk [vmem:[%s1297 + $0x4] sm:$0xf] %vm711, %v1290
      %1300 = vst.msk [vmem:[%s1297 + $0x8] sm:$0xf] %vm711, %v1291
      %1301 = vst.msk [vmem:[%s1297 + $0xc] sm:$0xf] %vm711, %v1292
      %1302 = vst.msk [vmem:[%s1297 + $0x10] sm:$0xf] %vm711, %v1293
      %1303 = vst.msk [vmem:[%s1297 + $0x14] sm:$0xf] %vm711, %v1294
      %1304 = vst.msk [vmem:[%s1297 + $0x18] sm:$0xf] %vm711, %v1295
      %1305 = vst.msk [vmem:[%s1297 + $0x1c] sm:$0xf] %vm711, %v1296
      %v1306 = vld [vmem:[%s357] sm:$0xf]
      %v1307 = vld [vmem:[%s357 + $0x8] sm:$0xf]
      %v1308 = vld [vmem:[%s357 + $0x10] sm:$0xf]
      %v1309 = vld [vmem:[%s357 + $0x18] sm:$0xf]
      %v1310 = vld [vmem:[%s357 + $0x20] sm:$0xf]
      %v1311 = vld [vmem:[%s357 + $0x28] sm:$0xf]
      %v1312 = vld [vmem:[%s357 + $0x30] sm:$0xf]
      %v1313 = vld [vmem:[%s357 + $0x38] sm:$0xf]
      %v1314 = vld [vmem:[%s357 + $0x4] sm:$0x1]
      %v1315 = vld [vmem:[%s357 + $0xc] sm:$0x1]
      %v1316 = vld [vmem:[%s357 + $0x14] sm:$0x1]
      %v1317 = vld [vmem:[%s357 + $0x1c] sm:$0x1]
      %v1318 = vld [vmem:[%s357 + $0x24] sm:$0x1]
      %v1319 = vld [vmem:[%s357 + $0x2c] sm:$0x1]
      %v1320 = vld [vmem:[%s357 + $0x34] sm:$0x1]
      %v1321 = vld [vmem:[%s357 + $0x3c] sm:$0x1]
      %v1323 = vshrl.u32 %v1306, 16
      %v1325 = vrot.slane %v1323, 4
      %v1326 = vshll.u32 %v1306, 16
      %v1328 = vrot.slane %v1326, 5
      %v1329 = vor.u32 %v1325, %v1328
      %v1330 = vrot.slane %v1329, 4
      %v1332 = vshll.u32 %v1314, 16
      %v1334 = vrot.slane %v1332, 5
      %v1335 = vsel %vm244, %v1330, %v1334
      %v1337 = vshrl.u32 %v1307, 16
      %v1339 = vrot.slane %v1337, 4
      %v1340 = vshll.u32 %v1307, 16
      %v1342 = vrot.slane %v1340, 5
      %v1343 = vor.u32 %v1339, %v1342
      %v1344 = vrot.slane %v1343, 4
      %v1346 = vshll.u32 %v1315, 16
      %v1348 = vrot.slane %v1346, 5
      %v1349 = vsel %vm244, %v1344, %v1348
      %v1351 = vshrl.u32 %v1308, 16
      %v1353 = vrot.slane %v1351, 4
      %v1354 = vshll.u32 %v1308, 16
      %v1356 = vrot.slane %v1354, 5
      %v1357 = vor.u32 %v1353, %v1356
      %v1358 = vrot.slane %v1357, 4
      %v1360 = vshll.u32 %v1316, 16
      %v1362 = vrot.slane %v1360, 5
      %v1363 = vsel %vm244, %v1358, %v1362
      %v1365 = vshrl.u32 %v1309, 16
      %v1367 = vrot.slane %v1365, 4
      %v1368 = vshll.u32 %v1309, 16
      %v1370 = vrot.slane %v1368, 5
      %v1371 = vor.u32 %v1367, %v1370
      %v1372 = vrot.slane %v1371, 4
      %v1374 = vshll.u32 %v1317, 16
      %v1376 = vrot.slane %v1374, 5
      %v1377 = vsel %vm244, %v1372, %v1376
      %v1379 = vshrl.u32 %v1310, 16
      %v1381 = vrot.slane %v1379, 4
      %v1382 = vshll.u32 %v1310, 16
      %v1384 = vrot.slane %v1382, 5
      %v1385 = vor.u32 %v1381, %v1384
      %v1386 = vrot.slane %v1385, 4
      %v1388 = vshll.u32 %v1318, 16
      %v1390 = vrot.slane %v1388, 5
      %v1391 = vsel %vm244, %v1386, %v1390
      %v1393 = vshrl.u32 %v1311, 16
      %v1395 = vrot.slane %v1393, 4
      %v1396 = vshll.u32 %v1311, 16
      %v1398 = vrot.slane %v1396, 5
      %v1399 = vor.u32 %v1395, %v1398
      %v1400 = vrot.slane %v1399, 4
      %v1402 = vshll.u32 %v1319, 16
      %v1404 = vrot.slane %v1402, 5
      %v1405 = vsel %vm244, %v1400, %v1404
      %v1407 = vshrl.u32 %v1312, 16
      %v1409 = vrot.slane %v1407, 4
      %v1410 = vshll.u32 %v1312, 16
      %v1412 = vrot.slane %v1410, 5
      %v1413 = vor.u32 %v1409, %v1412
      %v1414 = vrot.slane %v1413, 4
      %v1416 = vshll.u32 %v1320, 16
      %v1418 = vrot.slane %v1416, 5
      %v1419 = vsel %vm244, %v1414, %v1418
      %v1421 = vshrl.u32 %v1313, 16
      %v1423 = vrot.slane %v1421, 4
      %v1424 = vshll.u32 %v1313, 16
      %v1426 = vrot.slane %v1424, 5
      %v1427 = vor.u32 %v1423, %v1426
      %v1428 = vrot.slane %v1427, 4
      %v1430 = vshll.u32 %v1321, 16
      %v1432 = vrot.slane %v1430, 5
      %v1433 = vsel %vm244, %v1428, %v1432
      %s1434 = scalar_lea.vmem %s204, 16
      %v1435 = vld [vmem:[%s1434] sm:$0xf]
      %v1436 = vld [vmem:[%s1434 + $0x8] sm:$0xf]
      %v1437 = vld [vmem:[%s1434 + $0x10] sm:$0xf]
      %v1438 = vld [vmem:[%s1434 + $0x18] sm:$0xf]
      %v1439 = vld [vmem:[%s1434 + $0x20] sm:$0xf]
      %v1440 = vld [vmem:[%s1434 + $0x28] sm:$0xf]
      %v1441 = vld [vmem:[%s1434 + $0x30] sm:$0xf]
      %v1442 = vld [vmem:[%s1434 + $0x38] sm:$0xf]
      %v1443 = vld [vmem:[%s1434 + $0x4] sm:$0x1]
      %v1444 = vld [vmem:[%s1434 + $0xc] sm:$0x1]
      %v1445 = vld [vmem:[%s1434 + $0x14] sm:$0x1]
      %v1446 = vld [vmem:[%s1434 + $0x1c] sm:$0x1]
      %v1447 = vld [vmem:[%s1434 + $0x24] sm:$0x1]
      %v1448 = vld [vmem:[%s1434 + $0x2c] sm:$0x1]
      %v1449 = vld [vmem:[%s1434 + $0x34] sm:$0x1]
      %v1450 = vld [vmem:[%s1434 + $0x3c] sm:$0x1]
      %v1452 = vshrl.u32 %v1435, 16
      %v1454 = vrot.slane %v1452, 4
      %v1455 = vshll.u32 %v1435, 16
      %v1457 = vrot.slane %v1455, 5
      %v1458 = vor.u32 %v1454, %v1457
      %v1459 = vrot.slane %v1458, 4
      %v1461 = vshll.u32 %v1443, 16
      %v1463 = vrot.slane %v1461, 5
      %v1464 = vsel %vm244, %v1459, %v1463
      %v1466 = vshrl.u32 %v1436, 16
      %v1468 = vrot.slane %v1466, 4
      %v1469 = vshll.u32 %v1436, 16
      %v1471 = vrot.slane %v1469, 5
      %v1472 = vor.u32 %v1468, %v1471
      %v1473 = vrot.slane %v1472, 4
      %v1475 = vshll.u32 %v1444, 16
      %v1477 = vrot.slane %v1475, 5
      %v1478 = vsel %vm244, %v1473, %v1477
      %v1480 = vshrl.u32 %v1437, 16
      %v1482 = vrot.slane %v1480, 4
      %v1483 = vshll.u32 %v1437, 16
      %v1485 = vrot.slane %v1483, 5
      %v1486 = vor.u32 %v1482, %v1485
      %v1487 = vrot.slane %v1486, 4
      %v1489 = vshll.u32 %v1445, 16
      %v1491 = vrot.slane %v1489, 5
      %v1492 = vsel %vm244, %v1487, %v1491
      %v1494 = vshrl.u32 %v1438, 16
      %v1496 = vrot.slane %v1494, 4
      %v1497 = vshll.u32 %v1438, 16
      %v1499 = vrot.slane %v1497, 5
      %v1500 = vor.u32 %v1496, %v1499
      %v1501 = vrot.slane %v1500, 4
      %v1503 = vshll.u32 %v1446, 16
      %v1505 = vrot.slane %v1503, 5
      %v1506 = vsel %vm244, %v1501, %v1505
      %v1508 = vshrl.u32 %v1439, 16
      %v1510 = vrot.slane %v1508, 4
      %v1511 = vshll.u32 %v1439, 16
      %v1513 = vrot.slane %v1511, 5
      %v1514 = vor.u32 %v1510, %v1513
      %v1515 = vrot.slane %v1514, 4
      %v1517 = vshll.u32 %v1447, 16
      %v1519 = vrot.slane %v1517, 5
      %v1520 = vsel %vm244, %v1515, %v1519
      %v1522 = vshrl.u32 %v1440, 16
      %v1524 = vrot.slane %v1522, 4
      %v1525 = vshll.u32 %v1440, 16
      %v1527 = vrot.slane %v1525, 5
      %v1528 = vor.u32 %v1524, %v1527
      %v1529 = vrot.slane %v1528, 4
      %v1531 = vshll.u32 %v1448, 16
      %v1533 = vrot.slane %v1531, 5
      %v1534 = vsel %vm244, %v1529, %v1533
      %v1536 = vshrl.u32 %v1441, 16
      %v1538 = vrot.slane %v1536, 4
      %v1539 = vshll.u32 %v1441, 16
      %v1541 = vrot.slane %v1539, 5
      %v1542 = vor.u32 %v1538, %v1541
      %v1543 = vrot.slane %v1542, 4
      %v1545 = vshll.u32 %v1449, 16
      %v1547 = vrot.slane %v1545, 5
      %v1548 = vsel %vm244, %v1543, %v1547
      %v1550 = vshrl.u32 %v1442, 16
      %v1552 = vrot.slane %v1550, 4
      %v1553 = vshll.u32 %v1442, 16
      %v1555 = vrot.slane %v1553, 5
      %v1556 = vor.u32 %v1552, %v1555
      %v1557 = vrot.slane %v1556, 4
      %v1559 = vshll.u32 %v1450, 16
      %v1561 = vrot.slane %v1559, 5
      %v1562 = vsel %vm244, %v1557, %v1561
      %v1571 = vunpack.c.l.b16 %v1306
      %v1572 = vunpack.c.l.b16 %v1307
      %v1573 = vunpack.c.l.b16 %v1308
      %v1574 = vunpack.c.l.b16 %v1309
      %v1575 = vunpack.c.l.b16 %v1310
      %v1576 = vunpack.c.l.b16 %v1311
      %v1577 = vunpack.c.l.b16 %v1312
      %v1578 = vunpack.c.l.b16 %v1313
      %v1579 = vpack.c.b16 %v1572, %v1571
      %v1580 = vpack.c.b16 %v1574, %v1573
      %v1581 = vpack.c.b16 %v1576, %v1575
      %v1582 = vpack.c.b16 %v1578, %v1577
      %v1583 = vunpack.c.l.b16 %v1335
      %v1584 = vunpack.c.l.b16 %v1349
      %v1585 = vunpack.c.l.b16 %v1363
      %v1586 = vunpack.c.l.b16 %v1377
      %v1587 = vunpack.c.l.b16 %v1391
      %v1588 = vunpack.c.l.b16 %v1405
      %v1589 = vunpack.c.l.b16 %v1419
      %v1590 = vunpack.c.l.b16 %v1433
      %v1591 = vpack.c.b16 %v1584, %v1583
      %v1592 = vpack.c.b16 %v1586, %v1585
      %v1593 = vpack.c.b16 %v1588, %v1587
      %v1594 = vpack.c.b16 %v1590, %v1589
      %1595 = vrot.lane.b32.xlu0 %v1591, 4
      %v1596 = vpop.permute.xlu0 %1595
      %1597 = vrot.lane.b32.xlu0 %v1592, 4
      %v1598 = vpop.permute.xlu0 %1597
      %1599 = vrot.lane.b32.xlu0 %v1593, 4
      %v1600 = vpop.permute.xlu0 %1599
      %1601 = vrot.lane.b32.xlu0 %v1594, 4
      %v1602 = vpop.permute.xlu0 %1601
      %v1611 = vunpack.c.l.b16 %v1435
      %v1612 = vunpack.c.l.b16 %v1436
      %v1613 = vunpack.c.l.b16 %v1437
      %v1614 = vunpack.c.l.b16 %v1438
      %v1615 = vunpack.c.l.b16 %v1439
      %v1616 = vunpack.c.l.b16 %v1440
      %v1617 = vunpack.c.l.b16 %v1441
      %v1618 = vunpack.c.l.b16 %v1442
      %v1619 = vpack.c.b16 %v1612, %v1611
      %v1620 = vpack.c.b16 %v1614, %v1613
      %v1621 = vpack.c.b16 %v1616, %v1615
      %v1622 = vpack.c.b16 %v1618, %v1617
      %1623 = vrot.lane.b32.xlu0 %v1619, 8
      %v1624 = vpop.permute.xlu0 %1623
      %1625 = vrot.lane.b32.xlu0 %v1620, 8
      %v1626 = vpop.permute.xlu0 %1625
      %1627 = vrot.lane.b32.xlu0 %v1621, 8
      %v1628 = vpop.permute.xlu0 %1627
      %1629 = vrot.lane.b32.xlu0 %v1622, 8
      %v1630 = vpop.permute.xlu0 %1629
      %v1631 = vunpack.c.l.b16 %v1464
      %v1632 = vunpack.c.l.b16 %v1478
      %v1633 = vunpack.c.l.b16 %v1492
      %v1634 = vunpack.c.l.b16 %v1506
      %v1635 = vunpack.c.l.b16 %v1520
      %v1636 = vunpack.c.l.b16 %v1534
      %v1637 = vunpack.c.l.b16 %v1548
      %v1638 = vunpack.c.l.b16 %v1562
      %v1639 = vpack.c.b16 %v1632, %v1631
      %v1640 = vpack.c.b16 %v1634, %v1633
      %v1641 = vpack.c.b16 %v1636, %v1635
      %v1642 = vpack.c.b16 %v1638, %v1637
      %1643 = vrot.lane.b32.xlu0 %v1639, 12
      %v1644 = vpop.permute.xlu0 %1643
      %1645 = vrot.lane.b32.xlu0 %v1640, 12
      %v1646 = vpop.permute.xlu0 %1645
      %1647 = vrot.lane.b32.xlu0 %v1641, 12
      %v1648 = vpop.permute.xlu0 %1647
      %1649 = vrot.lane.b32.xlu0 %v1642, 12
      %v1650 = vpop.permute.xlu0 %1649
      %v1653 = vsel %vm574, %v1579, %v1596
      %v1656 = vsel %vm574, %v1580, %v1598
      %v1659 = vsel %vm574, %v1581, %v1600
      %v1662 = vsel %vm574, %v1582, %v1602
      %v1664 = vsel %vm587, %v1653, %v1624
      %v1666 = vsel %vm587, %v1656, %v1626
      %v1668 = vsel %vm587, %v1659, %v1628
      %v1670 = vsel %vm587, %v1662, %v1630
      %v1672 = vsel %vm596, %v1664, %v1644
      %v1674 = vsel %vm596, %v1666, %v1646
      %v1676 = vsel %vm596, %v1668, %v1648
      %v1678 = vsel %vm596, %v1670, %v1650
      %s1679 = scalar_lea.vmem %s1, 16
      %v1680 = vld [vmem:[%s1679] sm:$0xf]
      %v1681 = vld [vmem:[%s1679 + $0x4] sm:$0xf]
      %v1684 = vunpack.c.l.b16 %v1680
      %v1685 = vunpack.c.l.b16 %v1681
      %v1686 = vpack.c.b16 %v1685, %v1684
      %v1688 = vsel %vm613, %v1672, 0
      %v1690 = vsel %vm613, %v1674, 0
      %v1692 = vsel %vm613, %v1676, 0
      %v1694 = vsel %vm613, %v1678, 0
      %1696 = vmatpush.bf16.msra.mxu0 0
      %1697 = vmatpush.bf16.msra.mxu0 0
      %1698 = vmatpush.bf16.msra.mxu0 0
      %1699 = vmatpush.bf16.msra.mxu0 0
      %1700 = vmatpush.bf16.msra.mxu0 0
      %1701 = vmatpush.bf16.msra.mxu0 0
      %1702 = vmatpush.bf16.msra.mxu0 0
      %1703 = vmatpush.bf16.msra.mxu0 %v1686
      %1704 = vmatmul.bf16.gmra.mxu0 %v1688
      %v1705 = vpop.f32.mrf.mxu0
      %v1706 = vadd.f32 0.0, %v1705
      %v1707 = vpop.f32.mrf.mxu0
      %v1708 = vadd.f32 0.0, %v1707
      %1709 = vmatmul.bf16.gmra.mxu0 %v1690
      %v1710 = vpop.f32.mrf.mxu0
      %v1711 = vadd.f32 0.0, %v1710
      %v1712 = vpop.f32.mrf.mxu0
      %v1713 = vadd.f32 0.0, %v1712
      %1714 = vmatmul.bf16.gmra.mxu0 %v1692
      %v1715 = vpop.f32.mrf.mxu0
      %v1716 = vadd.f32 0.0, %v1715
      %v1717 = vpop.f32.mrf.mxu0
      %v1718 = vadd.f32 0.0, %v1717
      %1719 = vmatmul.bf16.gmra.mxu0 %v1694
      %v1720 = vpop.f32.mrf.mxu0
      %v1721 = vadd.f32 0.0, %v1720
      %v1722 = vpop.f32.mrf.mxu0
      %v1723 = vadd.f32 0.0, %v1722
      %1724 = vdwg.mxu0
      %v1725 = vsel %vm587, %v1706, 0.0
      %v1726 = vsel %vm587, %v1708, 0.0
      %v1727 = vadd.f32 %v1725, %v1726
      %v1728 = vsel %vm587, %v1711, 0.0
      %v1729 = vadd.f32 %v1727, %v1728
      %v1730 = vsel %vm587, %v1713, 0.0
      %v1731 = vadd.f32 %v1729, %v1730
      %v1732 = vsel %vm587, %v1716, 0.0
      %v1733 = vadd.f32 %v1731, %v1732
      %v1734 = vsel %vm587, %v1718, 0.0
      %v1735 = vadd.f32 %v1733, %v1734
      %v1736 = vsel %vm587, %v1721, 0.0
      %v1737 = vadd.f32 %v1735, %v1736
      %v1738 = vsel %vm587, %v1723, 0.0
      %v1739 = vadd.f32 %v1737, %v1738
      %v1740 = vrot.slane %v1739, 4
      %v1741 = vadd.f32 %v1739, %v1740
      %v1742 = vrot.slane %v1741, 2
      %v1743 = vadd.f32 %v1741, %v1742
      %v1744 = vrot.slane %v1743, 1
      %v1745 = vadd.f32 %v1743, %v1744
      %v1746 = vadd.f32 %v1258, %v1745
      %v1747 = vmul.f32 %v1706, %v1706
      %v1748 = vmul.f32 %v1708, %v1708
      %v1749 = vmul.f32 %v1711, %v1711
      %v1750 = vmul.f32 %v1713, %v1713
      %v1751 = vmul.f32 %v1716, %v1716
      %v1752 = vmul.f32 %v1718, %v1718
      %v1753 = vmul.f32 %v1721, %v1721
      %v1754 = vmul.f32 %v1723, %v1723
      %v1755 = vsel %vm587, %v1747, 0.0
      %v1756 = vsel %vm587, %v1748, 0.0
      %v1757 = vadd.f32 %v1755, %v1756
      %v1758 = vsel %vm587, %v1749, 0.0
      %v1759 = vadd.f32 %v1757, %v1758
      %v1760 = vsel %vm587, %v1750, 0.0
      %v1761 = vadd.f32 %v1759, %v1760
      %v1762 = vsel %vm587, %v1751, 0.0
      %v1763 = vadd.f32 %v1761, %v1762
      %v1764 = vsel %vm587, %v1752, 0.0
      %v1765 = vadd.f32 %v1763, %v1764
      %v1766 = vsel %vm587, %v1753, 0.0
      %v1767 = vadd.f32 %v1765, %v1766
      %v1768 = vsel %vm587, %v1754, 0.0
      %v1769 = vadd.f32 %v1767, %v1768
      %v1770 = vrot.slane %v1769, 4
      %v1771 = vadd.f32 %v1769, %v1770
      %v1772 = vrot.slane %v1771, 2
      %v1773 = vadd.f32 %v1771, %v1772
      %v1774 = vrot.slane %v1773, 1
      %v1775 = vadd.f32 %v1773, %v1774
      %v1776 = vadd.f32 %v1288, %v1775
      %v1777 = vpack.c.bf16 %v1706, %v1706
      %v1778 = vpack.c.bf16 %v1708, %v1708
      %v1779 = vpack.c.bf16 %v1711, %v1711
      %v1780 = vpack.c.bf16 %v1713, %v1713
      %v1781 = vpack.c.bf16 %v1716, %v1716
      %v1782 = vpack.c.bf16 %v1718, %v1718
      %v1783 = vpack.c.bf16 %v1721, %v1721
      %v1784 = vpack.c.bf16 %v1723, %v1723
      %s1785 = scalar_lea.vmem %s213, 64
      %1786 = vst.msk [vmem:[%s1785] sm:$0xf] %vm711, %v1777
      %1787 = vst.msk [vmem:[%s1785 + $0x4] sm:$0xf] %vm711, %v1778
      %1788 = vst.msk [vmem:[%s1785 + $0x8] sm:$0xf] %vm711, %v1779
      %1789 = vst.msk [vmem:[%s1785 + $0xc] sm:$0xf] %vm711, %v1780
      %1790 = vst.msk [vmem:[%s1785 + $0x10] sm:$0xf] %vm711, %v1781
      %1791 = vst.msk [vmem:[%s1785 + $0x14] sm:$0xf] %vm711, %v1782
      %1792 = vst.msk [vmem:[%s1785 + $0x18] sm:$0xf] %vm711, %v1783
      %1793 = vst.msk [vmem:[%s1785 + $0x1c] sm:$0xf] %vm711, %v1784
      %v1794 = vld [vmem:[%s357] sm:$0xf]
      %v1795 = vld [vmem:[%s357 + $0x4] sm:$0x1]
      %v1796 = vld [vmem:[%s357 + $0x8] sm:$0xf]
      %v1797 = vld [vmem:[%s357 + $0xc] sm:$0x1]
      %v1798 = vld [vmem:[%s357 + $0x10] sm:$0xf]
      %v1799 = vld [vmem:[%s357 + $0x14] sm:$0x1]
      %v1800 = vld [vmem:[%s357 + $0x18] sm:$0xf]
      %v1801 = vld [vmem:[%s357 + $0x1c] sm:$0x1]
      %v1802 = vld [vmem:[%s357 + $0x20] sm:$0xf]
      %v1803 = vld [vmem:[%s357 + $0x24] sm:$0x1]
      %v1804 = vld [vmem:[%s357 + $0x28] sm:$0xf]
      %v1805 = vld [vmem:[%s357 + $0x2c] sm:$0x1]
      %v1806 = vld [vmem:[%s357 + $0x30] sm:$0xf]
      %v1807 = vld [vmem:[%s357 + $0x34] sm:$0x1]
      %v1808 = vld [vmem:[%s357 + $0x38] sm:$0xf]
      %v1809 = vld [vmem:[%s357 + $0x3c] sm:$0x1]
      %v1811 = vshrl.u32 %v1794, 16
      %v1813 = vrot.slane %v1811, 4
      %v1814 = vshll.u32 %v1794, 16
      %v1816 = vrot.slane %v1814, 5
      %v1817 = vor.u32 %v1813, %v1816
      %v1818 = vrot.slane %v1817, 4
      %v1820 = vshll.u32 %v1795, 16
      %v1822 = vrot.slane %v1820, 5
      %v1823 = vsel %vm244, %v1818, %v1822
      %v1825 = vshrl.u32 %v1796, 16
      %v1827 = vrot.slane %v1825, 4
      %v1828 = vshll.u32 %v1796, 16
      %v1830 = vrot.slane %v1828, 5
      %v1831 = vor.u32 %v1827, %v1830
      %v1832 = vrot.slane %v1831, 4
      %v1834 = vshll.u32 %v1797, 16
      %v1836 = vrot.slane %v1834, 5
      %v1837 = vsel %vm244, %v1832, %v1836
      %v1839 = vshrl.u32 %v1798, 16
      %v1841 = vrot.slane %v1839, 4
      %v1842 = vshll.u32 %v1798, 16
      %v1844 = vrot.slane %v1842, 5
      %v1845 = vor.u32 %v1841, %v1844
      %v1846 = vrot.slane %v1845, 4
      %v1848 = vshll.u32 %v1799, 16
      %v1850 = vrot.slane %v1848, 5
      %v1851 = vsel %vm244, %v1846, %v1850
      %v1853 = vshrl.u32 %v1800, 16
      %v1855 = vrot.slane %v1853, 4
      %v1856 = vshll.u32 %v1800, 16
      %v1858 = vrot.slane %v1856, 5
      %v1859 = vor.u32 %v1855, %v1858
      %v1860 = vrot.slane %v1859, 4
      %v1862 = vshll.u32 %v1801, 16
      %v1864 = vrot.slane %v1862, 5
      %v1865 = vsel %vm244, %v1860, %v1864
      %v1867 = vshrl.u32 %v1802, 16
      %v1869 = vrot.slane %v1867, 4
      %v1870 = vshll.u32 %v1802, 16
      %v1872 = vrot.slane %v1870, 5
      %v1873 = vor.u32 %v1869, %v1872
      %v1874 = vrot.slane %v1873, 4
      %v1876 = vshll.u32 %v1803, 16
      %v1878 = vrot.slane %v1876, 5
      %v1879 = vsel %vm244, %v1874, %v1878
      %v1881 = vshrl.u32 %v1804, 16
      %v1883 = vrot.slane %v1881, 4
      %v1884 = vshll.u32 %v1804, 16
      %v1886 = vrot.slane %v1884, 5
      %v1887 = vor.u32 %v1883, %v1886
      %v1888 = vrot.slane %v1887, 4
      %v1890 = vshll.u32 %v1805, 16
      %v1892 = vrot.slane %v1890, 5
      %v1893 = vsel %vm244, %v1888, %v1892
      %v1895 = vshrl.u32 %v1806, 16
      %v1897 = vrot.slane %v1895, 4
      %v1898 = vshll.u32 %v1806, 16
      %v1900 = vrot.slane %v1898, 5
      %v1901 = vor.u32 %v1897, %v1900
      %v1902 = vrot.slane %v1901, 4
      %v1904 = vshll.u32 %v1807, 16
      %v1906 = vrot.slane %v1904, 5
      %v1907 = vsel %vm244, %v1902, %v1906
      %v1909 = vshrl.u32 %v1808, 16
      %v1911 = vrot.slane %v1909, 4
      %v1912 = vshll.u32 %v1808, 16
      %v1914 = vrot.slane %v1912, 5
      %v1915 = vor.u32 %v1911, %v1914
      %v1916 = vrot.slane %v1915, 4
      %v1918 = vshll.u32 %v1809, 16
      %v1920 = vrot.slane %v1918, 5
      %v1921 = vsel %vm244, %v1916, %v1920
      %v1922 = vld [vmem:[%s357] sm:$0xe]
      %v1923 = vld [vmem:[%s357 + $0x8] sm:$0xe]
      %v1924 = vld [vmem:[%s357 + $0x10] sm:$0xe]
      %v1925 = vld [vmem:[%s357 + $0x18] sm:$0xe]
      %v1926 = vld [vmem:[%s357 + $0x20] sm:$0xe]
      %v1927 = vld [vmem:[%s357 + $0x28] sm:$0xe]
      %v1928 = vld [vmem:[%s357 + $0x30] sm:$0xe]
      %v1929 = vld [vmem:[%s357 + $0x38] sm:$0xe]
      %v1946 = vrot.slane %v1922, 5
      %v1947 = vrot.slane %v1946, 4
      %v1948 = vrot.slane %v1795, 5
      %v1949 = vsel %vm874, %v1947, %v1948
      %v1950 = vrot.slane %v1923, 5
      %v1951 = vrot.slane %v1950, 4
      %v1952 = vrot.slane %v1797, 5
      %v1953 = vsel %vm874, %v1951, %v1952
      %v1954 = vrot.slane %v1924, 5
      %v1955 = vrot.slane %v1954, 4
      %v1956 = vrot.slane %v1799, 5
      %v1957 = vsel %vm874, %v1955, %v1956
      %v1958 = vrot.slane %v1925, 5
      %v1959 = vrot.slane %v1958, 4
      %v1960 = vrot.slane %v1801, 5
      %v1961 = vsel %vm874, %v1959, %v1960
      %v1962 = vrot.slane %v1926, 5
      %v1963 = vrot.slane %v1962, 4
      %v1964 = vrot.slane %v1803, 5
      %v1965 = vsel %vm874, %v1963, %v1964
      %v1966 = vrot.slane %v1927, 5
      %v1967 = vrot.slane %v1966, 4
      %v1968 = vrot.slane %v1805, 5
      %v1969 = vsel %vm874, %v1967, %v1968
      %v1970 = vrot.slane %v1928, 5
      %v1971 = vrot.slane %v1970, 4
      %v1972 = vrot.slane %v1807, 5
      %v1973 = vsel %vm874, %v1971, %v1972
      %v1974 = vrot.slane %v1929, 5
      %v1975 = vrot.slane %v1974, 4
      %v1976 = vrot.slane %v1809, 5
      %v1977 = vsel %vm874, %v1975, %v1976
      %v1978 = vld [vmem:[%s1434] sm:$0xf]
      %v1979 = vld [vmem:[%s1434 + $0x4] sm:$0x1]
      %v1980 = vld [vmem:[%s1434 + $0x8] sm:$0xf]
      %v1981 = vld [vmem:[%s1434 + $0xc] sm:$0x1]
      %v1982 = vld [vmem:[%s1434 + $0x10] sm:$0xf]
      %v1983 = vld [vmem:[%s1434 + $0x14] sm:$0x1]
      %v1984 = vld [vmem:[%s1434 + $0x18] sm:$0xf]
      %v1985 = vld [vmem:[%s1434 + $0x1c] sm:$0x1]
      %v1986 = vld [vmem:[%s1434 + $0x20] sm:$0xf]
      %v1987 = vld [vmem:[%s1434 + $0x24] sm:$0x1]
      %v1988 = vld [vmem:[%s1434 + $0x28] sm:$0xf]
      %v1989 = vld [vmem:[%s1434 + $0x2c] sm:$0x1]
      %v1990 = vld [vmem:[%s1434 + $0x30] sm:$0xf]
      %v1991 = vld [vmem:[%s1434 + $0x34] sm:$0x1]
      %v1992 = vld [vmem:[%s1434 + $0x38] sm:$0xf]
      %v1993 = vld [vmem:[%s1434 + $0x3c] sm:$0x1]
      %v1995 = vshrl.u32 %v1978, 16
      %v1997 = vrot.slane %v1995, 4
      %v1998 = vshll.u32 %v1978, 16
      %v2000 = vrot.slane %v1998, 5
      %v2001 = vor.u32 %v1997, %v2000
      %v2002 = vrot.slane %v2001, 4
      %v2004 = vshll.u32 %v1979, 16
      %v2006 = vrot.slane %v2004, 5
      %v2007 = vsel %vm244, %v2002, %v2006
      %v2009 = vshrl.u32 %v1980, 16
      %v2011 = vrot.slane %v2009, 4
      %v2012 = vshll.u32 %v1980, 16
      %v2014 = vrot.slane %v2012, 5
      %v2015 = vor.u32 %v2011, %v2014
      %v2016 = vrot.slane %v2015, 4
      %v2018 = vshll.u32 %v1981, 16
      %v2020 = vrot.slane %v2018, 5
      %v2021 = vsel %vm244, %v2016, %v2020
      %v2023 = vshrl.u32 %v1982, 16
      %v2025 = vrot.slane %v2023, 4
      %v2026 = vshll.u32 %v1982, 16
      %v2028 = vrot.slane %v2026, 5
      %v2029 = vor.u32 %v2025, %v2028
      %v2030 = vrot.slane %v2029, 4
      %v2032 = vshll.u32 %v1983, 16
      %v2034 = vrot.slane %v2032, 5
      %v2035 = vsel %vm244, %v2030, %v2034
      %v2037 = vshrl.u32 %v1984, 16
      %v2039 = vrot.slane %v2037, 4
      %v2040 = vshll.u32 %v1984, 16
      %v2042 = vrot.slane %v2040, 5
      %v2043 = vor.u32 %v2039, %v2042
      %v2044 = vrot.slane %v2043, 4
      %v2046 = vshll.u32 %v1985, 16
      %v2048 = vrot.slane %v2046, 5
      %v2049 = vsel %vm244, %v2044, %v2048
      %v2051 = vshrl.u32 %v1986, 16
      %v2053 = vrot.slane %v2051, 4
      %v2054 = vshll.u32 %v1986, 16
      %v2056 = vrot.slane %v2054, 5
      %v2057 = vor.u32 %v2053, %v2056
      %v2058 = vrot.slane %v2057, 4
      %v2060 = vshll.u32 %v1987, 16
      %v2062 = vrot.slane %v2060, 5
      %v2063 = vsel %vm244, %v2058, %v2062
      %v2065 = vshrl.u32 %v1988, 16
      %v2067 = vrot.slane %v2065, 4
      %v2068 = vshll.u32 %v1988, 16
      %v2070 = vrot.slane %v2068, 5
      %v2071 = vor.u32 %v2067, %v2070
      %v2072 = vrot.slane %v2071, 4
      %v2074 = vshll.u32 %v1989, 16
      %v2076 = vrot.slane %v2074, 5
      %v2077 = vsel %vm244, %v2072, %v2076
      %v2079 = vshrl.u32 %v1990, 16
      %v2081 = vrot.slane %v2079, 4
      %v2082 = vshll.u32 %v1990, 16
      %v2084 = vrot.slane %v2082, 5
      %v2085 = vor.u32 %v2081, %v2084
      %v2086 = vrot.slane %v2085, 4
      %v2088 = vshll.u32 %v1991, 16
      %v2090 = vrot.slane %v2088, 5
      %v2091 = vsel %vm244, %v2086, %v2090
      %v2093 = vshrl.u32 %v1992, 16
      %v2095 = vrot.slane %v2093, 4
      %v2096 = vshll.u32 %v1992, 16
      %v2098 = vrot.slane %v2096, 5
      %v2099 = vor.u32 %v2095, %v2098
      %v2100 = vrot.slane %v2099, 4
      %v2102 = vshll.u32 %v1993, 16
      %v2104 = vrot.slane %v2102, 5
      %v2105 = vsel %vm244, %v2100, %v2104
      %v2106 = vld [vmem:[%s1434] sm:$0xe]
      %v2107 = vld [vmem:[%s1434 + $0x8] sm:$0xe]
      %v2108 = vld [vmem:[%s1434 + $0x10] sm:$0xe]
      %v2109 = vld [vmem:[%s1434 + $0x18] sm:$0xe]
      %v2110 = vld [vmem:[%s1434 + $0x20] sm:$0xe]
      %v2111 = vld [vmem:[%s1434 + $0x28] sm:$0xe]
      %v2112 = vld [vmem:[%s1434 + $0x30] sm:$0xe]
      %v2113 = vld [vmem:[%s1434 + $0x38] sm:$0xe]
      %v2130 = vrot.slane %v2106, 5
      %v2131 = vrot.slane %v2130, 4
      %v2132 = vrot.slane %v1979, 5
      %v2133 = vsel %vm874, %v2131, %v2132
      %v2134 = vrot.slane %v2107, 5
      %v2135 = vrot.slane %v2134, 4
      %v2136 = vrot.slane %v1981, 5
      %v2137 = vsel %vm874, %v2135, %v2136
      %v2138 = vrot.slane %v2108, 5
      %v2139 = vrot.slane %v2138, 4
      %v2140 = vrot.slane %v1983, 5
      %v2141 = vsel %vm874, %v2139, %v2140
      %v2142 = vrot.slane %v2109, 5
      %v2143 = vrot.slane %v2142, 4
      %v2144 = vrot.slane %v1985, 5
      %v2145 = vsel %vm874, %v2143, %v2144
      %v2146 = vrot.slane %v2110, 5
      %v2147 = vrot.slane %v2146, 4
      %v2148 = vrot.slane %v1987, 5
      %v2149 = vsel %vm874, %v2147, %v2148
      %v2150 = vrot.slane %v2111, 5
      %v2151 = vrot.slane %v2150, 4
      %v2152 = vrot.slane %v1989, 5
      %v2153 = vsel %vm874, %v2151, %v2152
      %v2154 = vrot.slane %v2112, 5
      %v2155 = vrot.slane %v2154, 4
      %v2156 = vrot.slane %v1991, 5
      %v2157 = vsel %vm874, %v2155, %v2156
      %v2158 = vrot.slane %v2113, 5
      %v2159 = vrot.slane %v2158, 4
      %v2160 = vrot.slane %v1993, 5
      %v2161 = vsel %vm874, %v2159, %v2160
      %v2162 = vunpack.c.l.b16 %v1823
      %v2163 = vunpack.c.l.b16 %v1837
      %v2164 = vunpack.c.l.b16 %v1851
      %v2165 = vunpack.c.l.b16 %v1865
      %v2166 = vunpack.c.l.b16 %v1879
      %v2167 = vunpack.c.l.b16 %v1893
      %v2168 = vunpack.c.l.b16 %v1907
      %v2169 = vunpack.c.l.b16 %v1921
      %v2170 = vpack.c.b16 %v2163, %v2162
      %v2171 = vpack.c.b16 %v2165, %v2164
      %v2172 = vpack.c.b16 %v2167, %v2166
      %v2173 = vpack.c.b16 %v2169, %v2168
      %v2174 = vunpack.c.l.b16 %v1949
      %v2175 = vunpack.c.l.b16 %v1953
      %v2176 = vunpack.c.l.b16 %v1957
      %v2177 = vunpack.c.l.b16 %v1961
      %v2178 = vunpack.c.l.b16 %v1965
      %v2179 = vunpack.c.l.b16 %v1969
      %v2180 = vunpack.c.l.b16 %v1973
      %v2181 = vunpack.c.l.b16 %v1977
      %v2182 = vpack.c.b16 %v2175, %v2174
      %v2183 = vpack.c.b16 %v2177, %v2176
      %v2184 = vpack.c.b16 %v2179, %v2178
      %v2185 = vpack.c.b16 %v2181, %v2180
      %2186 = vrot.lane.b32.xlu0 %v2182, 4
      %v2187 = vpop.permute.xlu0 %2186
      %2188 = vrot.lane.b32.xlu0 %v2183, 4
      %v2189 = vpop.permute.xlu0 %2188
      %2190 = vrot.lane.b32.xlu0 %v2184, 4
      %v2191 = vpop.permute.xlu0 %2190
      %2192 = vrot.lane.b32.xlu0 %v2185, 4
      %v2193 = vpop.permute.xlu0 %2192
      %v2194 = vunpack.c.l.b16 %v2007
      %v2195 = vunpack.c.l.b16 %v2021
      %v2196 = vunpack.c.l.b16 %v2035
      %v2197 = vunpack.c.l.b16 %v2049
      %v2198 = vunpack.c.l.b16 %v2063
      %v2199 = vunpack.c.l.b16 %v2077
      %v2200 = vunpack.c.l.b16 %v2091
      %v2201 = vunpack.c.l.b16 %v2105
      %v2202 = vpack.c.b16 %v2195, %v2194
      %v2203 = vpack.c.b16 %v2197, %v2196
      %v2204 = vpack.c.b16 %v2199, %v2198
      %v2205 = vpack.c.b16 %v2201, %v2200
      %2206 = vrot.lane.b32.xlu0 %v2202, 8
      %v2207 = vpop.permute.xlu0 %2206
      %2208 = vrot.lane.b32.xlu0 %v2203, 8
      %v2209 = vpop.permute.xlu0 %2208
      %2210 = vrot.lane.b32.xlu0 %v2204, 8
      %v2211 = vpop.permute.xlu0 %2210
      %2212 = vrot.lane.b32.xlu0 %v2205, 8
      %v2213 = vpop.permute.xlu0 %2212
      %v2214 = vunpack.c.l.b16 %v2133
      %v2215 = vunpack.c.l.b16 %v2137
      %v2216 = vunpack.c.l.b16 %v2141
      %v2217 = vunpack.c.l.b16 %v2145
      %v2218 = vunpack.c.l.b16 %v2149
      %v2219 = vunpack.c.l.b16 %v2153
      %v2220 = vunpack.c.l.b16 %v2157
      %v2221 = vunpack.c.l.b16 %v2161
      %v2222 = vpack.c.b16 %v2215, %v2214
      %v2223 = vpack.c.b16 %v2217, %v2216
      %v2224 = vpack.c.b16 %v2219, %v2218
      %v2225 = vpack.c.b16 %v2221, %v2220
      %2226 = vrot.lane.b32.xlu0 %v2222, 12
      %v2227 = vpop.permute.xlu0 %2226
      %2228 = vrot.lane.b32.xlu0 %v2223, 12
      %v2229 = vpop.permute.xlu0 %2228
      %2230 = vrot.lane.b32.xlu0 %v2224, 12
      %v2231 = vpop.permute.xlu0 %2230
      %2232 = vrot.lane.b32.xlu0 %v2225, 12
      %v2233 = vpop.permute.xlu0 %2232
      %v2236 = vsel %vm574, %v2170, %v2187
      %v2239 = vsel %vm574, %v2171, %v2189
      %v2242 = vsel %vm574, %v2172, %v2191
      %v2245 = vsel %vm574, %v2173, %v2193
      %v2247 = vsel %vm587, %v2236, %v2207
      %v2249 = vsel %vm587, %v2239, %v2209
      %v2251 = vsel %vm587, %v2242, %v2211
      %v2253 = vsel %vm587, %v2245, %v2213
      %v2255 = vsel %vm596, %v2247, %v2227
      %v2257 = vsel %vm596, %v2249, %v2229
      %v2259 = vsel %vm596, %v2251, %v2231
      %v2261 = vsel %vm596, %v2253, %v2233
      %s2262 = scalar_lea.vmem %s1, 24
      %v2263 = vld [vmem:[%s2262] sm:$0xf]
      %v2264 = vld [vmem:[%s2262 + $0x4] sm:$0xf]
      %v2267 = vunpack.c.l.b16 %v2263
      %v2268 = vunpack.c.l.b16 %v2264
      %v2269 = vpack.c.b16 %v2268, %v2267
      %v2271 = vsel %vm613, %v2255, 0
      %v2273 = vsel %vm613, %v2257, 0
      %v2275 = vsel %vm613, %v2259, 0
      %v2277 = vsel %vm613, %v2261, 0
      %2279 = vmatpush.bf16.msra.mxu0 0
      %2280 = vmatpush.bf16.msra.mxu0 0
      %2281 = vmatpush.bf16.msra.mxu0 0
      %2282 = vmatpush.bf16.msra.mxu0 0
      %2283 = vmatpush.bf16.msra.mxu0 0
      %2284 = vmatpush.bf16.msra.mxu0 0
      %2285 = vmatpush.bf16.msra.mxu0 0
      %2286 = vmatpush.bf16.msra.mxu0 %v2269
      %2287 = vmatmul.bf16.gmra.mxu0 %v2271
      %v2288 = vpop.f32.mrf.mxu0
      %v2289 = vadd.f32 0.0, %v2288
      %v2290 = vpop.f32.mrf.mxu0
      %v2291 = vadd.f32 0.0, %v2290
      %2292 = vmatmul.bf16.gmra.mxu0 %v2273
      %v2293 = vpop.f32.mrf.mxu0
      %v2294 = vadd.f32 0.0, %v2293
      %v2295 = vpop.f32.mrf.mxu0
      %v2296 = vadd.f32 0.0, %v2295
      %2297 = vmatmul.bf16.gmra.mxu0 %v2275
      %v2298 = vpop.f32.mrf.mxu0
      %v2299 = vadd.f32 0.0, %v2298
      %v2300 = vpop.f32.mrf.mxu0
      %v2301 = vadd.f32 0.0, %v2300
      %2302 = vmatmul.bf16.gmra.mxu0 %v2277
      %v2303 = vpop.f32.mrf.mxu0
      %v2304 = vadd.f32 0.0, %v2303
      %v2305 = vpop.f32.mrf.mxu0
      %v2306 = vadd.f32 0.0, %v2305
      %2307 = vdwg.mxu0
      %v2308 = vsel %vm587, %v2289, 0.0
      %v2309 = vsel %vm587, %v2291, 0.0
      %v2310 = vadd.f32 %v2308, %v2309
      %v2311 = vsel %vm587, %v2294, 0.0
      %v2312 = vadd.f32 %v2310, %v2311
      %v2313 = vsel %vm587, %v2296, 0.0
      %v2314 = vadd.f32 %v2312, %v2313
      %v2315 = vsel %vm587, %v2299, 0.0
      %v2316 = vadd.f32 %v2314, %v2315
      %v2317 = vsel %vm587, %v2301, 0.0
      %v2318 = vadd.f32 %v2316, %v2317
      %v2319 = vsel %vm587, %v2304, 0.0
      %v2320 = vadd.f32 %v2318, %v2319
      %v2321 = vsel %vm587, %v2306, 0.0
      %v2322 = vadd.f32 %v2320, %v2321
      %v2323 = vrot.slane %v2322, 4
      %v2324 = vadd.f32 %v2322, %v2323
      %v2325 = vrot.slane %v2324, 2
      %v2326 = vadd.f32 %v2324, %v2325
      %v2327 = vrot.slane %v2326, 1
      %v2328 = vadd.f32 %v2326, %v2327
      %v2329 = vadd.f32 %v1746, %v2328
      %v2330 = vmul.f32 %v2289, %v2289
      %v2331 = vmul.f32 %v2291, %v2291
      %v2332 = vmul.f32 %v2294, %v2294
      %v2333 = vmul.f32 %v2296, %v2296
      %v2334 = vmul.f32 %v2299, %v2299
      %v2335 = vmul.f32 %v2301, %v2301
      %v2336 = vmul.f32 %v2304, %v2304
      %v2337 = vmul.f32 %v2306, %v2306
      %v2338 = vsel %vm587, %v2330, 0.0
      %v2339 = vsel %vm587, %v2331, 0.0
      %v2340 = vadd.f32 %v2338, %v2339
      %v2341 = vsel %vm587, %v2332, 0.0
      %v2342 = vadd.f32 %v2340, %v2341
      %v2343 = vsel %vm587, %v2333, 0.0
      %v2344 = vadd.f32 %v2342, %v2343
      %v2345 = vsel %vm587, %v2334, 0.0
      %v2346 = vadd.f32 %v2344, %v2345
      %v2347 = vsel %vm587, %v2335, 0.0
      %v2348 = vadd.f32 %v2346, %v2347
      %v2349 = vsel %vm587, %v2336, 0.0
      %v2350 = vadd.f32 %v2348, %v2349
      %v2351 = vsel %vm587, %v2337, 0.0
      %v2352 = vadd.f32 %v2350, %v2351
      %v2353 = vrot.slane %v2352, 4
      %v2354 = vadd.f32 %v2352, %v2353
      %v2355 = vrot.slane %v2354, 2
      %v2356 = vadd.f32 %v2354, %v2355
      %v2357 = vrot.slane %v2356, 1
      %v2358 = vadd.f32 %v2356, %v2357
      %v2359 = vadd.f32 %v1776, %v2358
      %v2360 = vpack.c.bf16 %v2289, %v2289
      %v2361 = vpack.c.bf16 %v2291, %v2291
      %v2362 = vpack.c.bf16 %v2294, %v2294
      %v2363 = vpack.c.bf16 %v2296, %v2296
      %v2364 = vpack.c.bf16 %v2299, %v2299
      %v2365 = vpack.c.bf16 %v2301, %v2301
      %v2366 = vpack.c.bf16 %v2304, %v2304
      %v2367 = vpack.c.bf16 %v2306, %v2306
      %s2368 = scalar_lea.vmem %s213, 96
      %2369 = vst.msk [vmem:[%s2368] sm:$0xf] %vm711, %v2360
      %2370 = vst.msk [vmem:[%s2368 + $0x4] sm:$0xf] %vm711, %v2361
      %2371 = vst.msk [vmem:[%s2368 + $0x8] sm:$0xf] %vm711, %v2362
      %2372 = vst.msk [vmem:[%s2368 + $0xc] sm:$0xf] %vm711, %v2363
      %2373 = vst.msk [vmem:[%s2368 + $0x10] sm:$0xf] %vm711, %v2364
      %2374 = vst.msk [vmem:[%s2368 + $0x14] sm:$0xf] %vm711, %v2365
      %2375 = vst.msk [vmem:[%s2368 + $0x18] sm:$0xf] %vm711, %v2366
      %2376 = vst.msk [vmem:[%s2368 + $0x1c] sm:$0xf] %vm711, %v2367
      %v2377 = vld [vmem:[%s218] sm:$0x1]
      %v2378 = vadd.f32 %v2377, %v2329
      %vm2379 = vcmask 57344
      %2380 = vst.msk [vmem:[%s218] sm:$0x1] %vm2379, %v2378
      %v2381 = vld [vmem:[%s218 + $0x1] sm:$0x1]
      %v2382 = vadd.f32 %v2381, %v2359
      %2383 = vst.msk [vmem:[%s218 + $0x1] sm:$0x1] %vm2379, %v2382
      %s2384 = smul.u32 8, %s20
      %p2385 = scmp.lt.s32.totalorder %s19, 1
      %s2386 = scalar_select %p2385, %s19, 1
      %p2387 = scmp.lt.s32.totalorder %s2384, 7
      %s2388 = scalar_select %p2387, %s2384, 7
      %s2389 = smul.addr %s2386, 32
      %s2390 = sadd.s32 %s2388, %s2389
      %s2391 = smul.addr %s2390, 4
      %s2392 = scalar_lea.vmem %s2, %s2391
      %p2393 = scmp.lt.s32.totalorder %s19, 1
      %s2394 = scalar_select %p2393, %s19, 1
      %s2395 = smul.addr %s2394, 2
      %s2396 = scalar_lea.vmem %s3, %s2395
      // Predicated region
      $region33: #{unet_up.2} parent=27 // pred_check
        %p2397 = pneg %p96
      $region34: #{unet_up.2} parent=27 // pred_check_branch
        %2399 = sbr.rel (%p2397) target = $region36
      $region35: #{unet_up.2} parent=27 // pred_region
        %s2400 = smul.u32 8, %s20
      $region36: #{unet_up.2} parent=27 // pred_fallthru
        _
      // Predicated region
      $region37: #{unet_up.2} parent=27 // pred_check
        %p2401 = pneg %p122
      $region38: #{unet_up.2} parent=27 // pred_check_branch
        %2403 = sbr.rel (%p2401) target = $region40
      $region39: #{unet_up.2} parent=27 // pred_region
        _
      $region40: #{unet_up.2} parent=27 // pred_fallthru
        _
    $region28: #{unet_up.2} parent=5 // pred_fallthru
      _
    %p2404 = scmp.le.s32.totalorder 2, %s10
    // Predicated region
    $region41: #{unet_up.2} parent=5 // pred_check
      %p2405 = pneg %p2404
    $region42: #{unet_up.2} parent=5 // pred_check_branch
      %2407 = sbr.rel (%p2405) target = $region44
    $region43: #{unet_up.2} parent=5 // pred_region
      %s2408 = ssub.s32 %s10, 2
      // Predicated region
      $region45: #{unet_up.2} parent=43 // pred_check
        %p2409 = pneg %p102
      $region46: #{unet_up.2} parent=43 // pred_check_branch
        %2411 = sbr.rel (%p2409) target = $region48
      $region47: #{unet_up.2} parent=43 // pred_region
        %s2412 = smul.u32 8, %s22
        %p2413 = scmp.lt.s32.totalorder %s21, 1
        %s2414 = scalar_select %p2413, %s21, 1
        %p2415 = scmp.lt.s32.totalorder %s2412, 7
        %s2416 = scalar_select %p2415, %s2412, 7
        %s2417 = smul.addr %s2414, 32
        %s2418 = sadd.s32 %s2416, %s2417
        %s2419 = smul.addr %s2418, 4
        %s2420 = scalar_lea.vmem %s2, %s2419
      $region48: #{unet_up.2} parent=43 // pred_fallthru
        _
      // Predicated region
      $region49: #{unet_up.2} parent=43 // pred_check
        %p2421 = pneg %p128
      $region50: #{unet_up.2} parent=43 // pred_check_branch
        %2423 = sbr.rel (%p2421) target = $region52
      $region51: #{unet_up.2} parent=43 // pred_region
        %p2424 = scmp.lt.s32.totalorder %s21, 1
        %s2425 = scalar_select %p2424, %s21, 1
        %s2426 = smul.addr %s2425, 2
        %s2427 = scalar_lea.vmem %s3, %s2426
      $region52: #{unet_up.2} parent=43 // pred_fallthru
        _
    $region44: #{unet_up.2} parent=5 // pred_fallthru
      _
  $region6: #{unet_up.2} parent=0 // loop_footer
    %s14 = sadd.s32 1, %s10
  $region7: #{unet_up.2} parent=0 // loop_footer_branch
    %9 = sbr.rel target = $region3
  $region8: #{unet_up.2} parent=0 // loop_exit
    _

</llo_original>
